<compile_context>
chip_gen: v6e
topology: v6e:2x2x1
jax: 0.10.0
libtpu: 0.0.40
codegen_flags: <defaults>
</compile_context>

<pallas_src>
import functools

import jax
import jax.numpy as jnp
from jax.experimental import pallas as pl
from jax.experimental.pallas import tpu as pltpu  # noqa: F401  (TPU backend)


# ----------------------------------------------------------------------------
# Fused kernel: feature transform + LSTM recurrence + attention + context_norm
# + MLContext combine (h_c + beta * h_i), all in one invocation.
# ----------------------------------------------------------------------------
def _mlcontext_kernel(z_ref, wf_ref, bf_ref, wz_ref, wh_ref, b_ref,
                      wcn_ref, bcn_ref, out_ref, *,
                      T, BNp, bn_z, bn_m, B, N, hidden, beta):
    H = hidden

    # ---- hoisted, h-independent work: one batched matmul over all T steps --
    z = z_ref[...]                                                # (T*BNp, F)
    z_t = jnp.tanh(
        jnp.dot(z, wf_ref[...], preferred_element_type=jnp.float32)
        + bf_ref[...])                                            # (T*BNp, H)
    z_proj = (jnp.dot(z_t, wz_ref[...], preferred_element_type=jnp.float32)
              + b_ref[...])                                       # (T*BNp, 4H)

    wh = wh_ref[...]

    # ---- LSTM recurrence, fully unrolled (serial dependence on h only) -----
    # Gate packing along 4H: [forget | input_sigmoid | input_tanh | output].
    h = jnp.zeros((BNp, H), jnp.float32)
    c = jnp.zeros((BNp, H), jnp.float32)
    hs = []
    for t in range(T):
        gates = (z_proj[t * BNp:(t + 1) * BNp]        # tile-aligned row slice
                 + jnp.dot(h, wh, preferred_element_type=jnp.float32))
        f_t = jax.nn.sigmoid(gates[:, 0 * H:1 * H])   # ForgetGate
        i1 = jax.nn.sigmoid(gates[:, 1 * H:2 * H])    # InputGate (sigmoid)
        i2 = jnp.tanh(gates[:, 2 * H:3 * H])          # InputGate (tanh)
        o_t = jax.nn.sigmoid(gates[:, 3 * H:4 * H])   # OutputGate
        c = f_t * c + i1 * i2                         # c_t = ft*c + it1*it2
        h = o_t * jnp.tanh(c)
        hs.append(h)

    # ---- attention over time: softmax_t of <h_t, h_T> per (batch, stock) ---
    h_last = hs[-1]
    s = [jnp.sum(ht * h_last, axis=-1, keepdims=True) for ht in hs]  # (BNp,1)
    m = s[0]
    for st in s[1:]:
        m = jnp.maximum(m, st)                 # max-subtraction (same result)
    e = [jnp.exp(st - m) for st in s]
    sum_e = e[0]
    for et in e[1:]:
        sum_e = sum_e + et
    inv_sum = pl.reciprocal(sum_e, approx=True)        # EUP slot
    h_c = hs[0] * (e[0] * inv_sum)
    for ht, et in zip(hs[1:], e[1:]):
        h_c = h_c + ht * (et * inv_sum)                # (BNp, H)

    # ---- context_norm per pass (global mean / unbiased std, like torch) ----
    wcn = wcn_ref[...]
    bcn = bcn_ref[...]

    def ctx_norm(x, w, b):
        n = x.size                                     # static python int
        mean = jnp.mean(x)
        var = jnp.sum((x - mean) ** 2) * (1.0 / (n - 1))  # torch.std: unbiased
        return (x - mean) * jax.lax.rsqrt(var) * w + b    # no eps, as in ref

    hc_z = ctx_norm(h_c[0:bn_z], wcn[0:bn_z], bcn[0:bn_z])            # stocks
    hc_m = ctx_norm(h_c[bn_z:bn_z + bn_m],
                    wcn[bn_z:bn_z + bn_m], bcn[bn_z:bn_z + bn_m])     # market

    # ---- MLContext combine: h_m = h_c + beta * h_i (broadcast over stocks) -
    rows = []
    for bb in range(B):
        rows.append(hc_z[bb * N:(bb + 1) * N] + beta * hc_m[bb:bb + 1])
    out_ref[...] = jnp.concatenate(rows, axis=0)       # (B*N, H), lane-dense


# ----------------------------------------------------------------------------
# Wrapper: plain-JAX glue (transpose / concat / pad) + one pallas_call.
# ----------------------------------------------------------------------------
def ml_context_forward(z, market_index, params, cn_z, cn_m, beta):
    """MLContext.forward.  z: (B,N,T,F), market_index: (B,1,T,F) -> (B,N,H)."""
    B, N, T, F = z.shape
    Bm, Nm, Tm, Fm = market_index.shape
    assert Bm == B and Tm == T and Fm == F
    H = params["wf"].shape[1]
    bn_z = B * N
    bn_m = B * Nm
    bn = bn_z + bn_m
    bn_pad = ((bn + 7) // 8) * 8            # pad BN to a sublane multiple

    # Concatenate stocks + market along BN (shared weights -> one launch),
    # pad to aligned sublanes, and flatten time into rows for the batched
    # feature / gate projections.
    z_seq = jnp.concatenate(
        [jnp.transpose(z, (2, 0, 1, 3)).reshape(T, bn_z, F),
         jnp.transpose(market_index, (2, 0, 1, 3)).reshape(T, bn_m, F)],
        axis=1)                                                  # (T, BN, F)
    if bn_pad != bn:
        z_seq = jnp.pad(z_seq, ((0, 0), (0, bn_pad - bn), (0, 0)))
    z_flat = z_seq.reshape(T * bn_pad, F)

    w_cn = jnp.concatenate([cn_z[0].reshape(bn_z, H),
                            cn_m[0].reshape(bn_m, H)], axis=0)   # (BN, H)
    b_cn = jnp.concatenate([cn_z[1].reshape(bn_z, H),
                            cn_m[1].reshape(bn_m, H)], axis=0)   # (BN, H)

    kernel = functools.partial(
        _mlcontext_kernel, T=T, BNp=bn_pad, bn_z=bn_z, bn_m=bn_m,
        B=B, N=N, hidden=H, beta=float(beta))

    out = pl.pallas_call(
        kernel,
        out_shape=jax.ShapeDtypeStruct((bn_z, H), jnp.float32),
    )(z_flat, params["wf"], params["bf"], params["wz"], params["wh"],
      params["b"], w_cn, b_cn)

    return out.reshape(B, N, H)


# ----------------------------------------------------------------------------
# Deterministic parameter construction + demo run.
# ----------------------------------------------------------------------------
if __name__ == "__main__":
    B, N, T, F, H = 2, 4, 8, 11, 128     # T plays the role of input_size
    beta = 0.1

    key = jax.random.PRNGKey(0)
    keys = jax.random.split(key, 12)

    def uni(k, shape, scale):
        return jax.random.uniform(k, shape, jnp.float32, -scale, scale)

    kf = 1.0 / float(jnp.sqrt(jnp.float32(F)))
    kh = 1.0 / float(jnp.sqrt(jnp.float32(H)))

    # Gate order along 4H: [forget | input_sigmoid | input_tanh | output].
    params = dict(
        wf=uni(keys[0], (F, H), kf),            # FeatureTransformation Linear
        bf=uni(keys[1], (1, H), kf),
        wz=uni(keys[2], (H, 4 * H), kh),        # z-side gate Linears, fused
        wh=uni(keys[3], (H, 4 * H), kh),        # h-side gate Linears, fused
        b=uni(keys[4], (1, 4 * H), 2 * kh),     # sum of the two Linear biases
    )

    # TODO(synk): PyTorch's context_norm draws fresh torch.randn W/b on every
    # forward call (non-deterministic); here they are fixed deterministic tensors.
    cn_z = (jax.random.normal(keys[5], (B, N, H), jnp.float32),
            jax.random.normal(keys[6], (B, N, H), jnp.float32))
    cn_m = (jax.random.normal(keys[7], (B, 1, H), jnp.float32),
            jax.random.normal(keys[8], (B, 1, H), jnp.float32))

    z = jax.random.normal(keys[9], (B, N, T, F), jnp.float32)
    market_index = jax.random.normal(keys[10], (B, 1, T, F), jnp.float32)

    fwd = jax.jit(functools.partial(ml_context_forward, beta=beta))
    out = fwd(z, market_index, params, cn_z, cn_m)
    out = jax.block_until_ready(out)

    assert out.shape == (B, N, H) and out.dtype == jnp.float32
    assert bool(jnp.all(jnp.isfinite(out)))
    print("KERNEL_OK")
</pallas_src>

<mosaic_0001>
module attributes {stable_mosaic.version = 11 : i64} {
  func.func @_mlcontext_kernel(%arg0: memref<128x11xf32, #tpu.memory_space<vmem>>, %arg1: memref<11x128xf32, #tpu.memory_space<vmem>>, %arg2: memref<1x128xf32, #tpu.memory_space<vmem>>, %arg3: memref<128x512xf32, #tpu.memory_space<vmem>>, %arg4: memref<128x512xf32, #tpu.memory_space<vmem>>, %arg5: memref<1x512xf32, #tpu.memory_space<vmem>>, %arg6: memref<10x128xf32, #tpu.memory_space<vmem>>, %arg7: memref<10x128xf32, #tpu.memory_space<vmem>>, %arg8: memref<8x128xf32, #tpu.memory_space<vmem>>) attributes {dimension_semantics = [], scalar_prefetch = 0 : i64, scratch_operands = 0 : i64, tpu.core_type = #tpu.core_type<tc>} {
    %c0 = arith.constant 0 : index
    %c0_0 = arith.constant 0 : index
    %0 = vector.load %arg0[%c0, %c0_0] : memref<128x11xf32, #tpu.memory_space<vmem>>, vector<128x11xf32>
    %c0_1 = arith.constant 0 : index
    %c0_2 = arith.constant 0 : index
    %1 = vector.load %arg1[%c0_1, %c0_2] : memref<11x128xf32, #tpu.memory_space<vmem>>, vector<11x128xf32>
    %cst = arith.constant dense<0.000000e+00> : vector<128x128xf32>
    %2 = tpu.matmul %0, %1, %cst {dimension_numbers = #tpu.dot_dimension_numbers<[1], [0], [0], [1], [0, 0, 1, 1], [], []>} : vector<128x11xf32>, vector<11x128xf32>, vector<128x128xf32> -> vector<128x128xf32>
    %c0_3 = arith.constant 0 : index
    %c0_4 = arith.constant 0 : index
    %3 = vector.load %arg2[%c0_3, %c0_4] : memref<1x128xf32, #tpu.memory_space<vmem>>, vector<1x128xf32>
    %4 = vector.broadcast %3 : vector<1x128xf32> to vector<128x128xf32>
    %5 = arith.addf %2, %4 : vector<128x128xf32>
    %6 = math.tanh %5 : vector<128x128xf32>
    %c0_5 = arith.constant 0 : index
    %c0_6 = arith.constant 0 : index
    %7 = vector.load %arg3[%c0_5, %c0_6] : memref<128x512xf32, #tpu.memory_space<vmem>>, vector<128x512xf32>
    %cst_7 = arith.constant dense<0.000000e+00> : vector<128x512xf32>
    %8 = tpu.matmul %6, %7, %cst_7 {dimension_numbers = #tpu.dot_dimension_numbers<[1], [0], [0], [1], [0, 0, 1, 1], [], []>} : vector<128x128xf32>, vector<128x512xf32>, vector<128x512xf32> -> vector<128x512xf32>
    %c0_8 = arith.constant 0 : index
    %c0_9 = arith.constant 0 : index
    %9 = vector.load %arg5[%c0_8, %c0_9] : memref<1x512xf32, #tpu.memory_space<vmem>>, vector<1x512xf32>
    %10 = vector.broadcast %9 : vector<1x512xf32> to vector<128x512xf32>
    %11 = arith.addf %8, %10 : vector<128x512xf32>
    %c0_10 = arith.constant 0 : index
    %c0_11 = arith.constant 0 : index
    %12 = vector.load %arg4[%c0_10, %c0_11] : memref<128x512xf32, #tpu.memory_space<vmem>>, vector<128x512xf32>
    %cst_12 = arith.constant 0.000000e+00 : f32
    %13 = vector.broadcast %cst_12 : f32 to vector<16x128xf32>
    %cst_13 = arith.constant 0.000000e+00 : f32
    %14 = vector.broadcast %cst_13 : f32 to vector<16x128xf32>
    %15 = vector.extract_strided_slice %11 {offsets = [0, 0], sizes = [16, 512], strides = [1, 1]} : vector<128x512xf32> to vector<16x512xf32>
    %cst_14 = arith.constant dense<0.000000e+00> : vector<16x512xf32>
    %16 = tpu.matmul %13, %12, %cst_14 {dimension_numbers = #tpu.dot_dimension_numbers<[1], [0], [0], [1], [0, 0, 1, 1], [], []>} : vector<16x128xf32>, vector<128x512xf32>, vector<16x512xf32> -> vector<16x512xf32>
    %17 = arith.addf %15, %16 : vector<16x512xf32>
    %18 = vector.extract_strided_slice %17 {offsets = [0, 0], sizes = [16, 128], strides = [1, 1]} : vector<16x512xf32> to vector<16x128xf32>
    %19 = arith.negf %18 : vector<16x128xf32>
    %20 = math.exp %19 : vector<16x128xf32>
    %cst_15 = arith.constant 1.000000e+00 : f32
    %21 = vector.broadcast %cst_15 : f32 to vector<16x128xf32>
    %22 = arith.addf %21, %20 : vector<16x128xf32>
    %23 = arith.divf %21, %22 : vector<16x128xf32>
    %24 = vector.extract_strided_slice %17 {offsets = [0, 128], sizes = [16, 128], strides = [1, 1]} : vector<16x512xf32> to vector<16x128xf32>
    %25 = arith.negf %24 : vector<16x128xf32>
    %26 = math.exp %25 : vector<16x128xf32>
    %cst_16 = arith.constant 1.000000e+00 : f32
    %27 = vector.broadcast %cst_16 : f32 to vector<16x128xf32>
    %28 = arith.addf %27, %26 : vector<16x128xf32>
    %29 = arith.divf %27, %28 : vector<16x128xf32>
    %30 = vector.extract_strided_slice %17 {offsets = [0, 256], sizes = [16, 128], strides = [1, 1]} : vector<16x512xf32> to vector<16x128xf32>
    %31 = math.tanh %30 : vector<16x128xf32>
    %32 = vector.extract_strided_slice %17 {offsets = [0, 384], sizes = [16, 128], strides = [1, 1]} : vector<16x512xf32> to vector<16x128xf32>
    %33 = arith.negf %32 : vector<16x128xf32>
    %34 = math.exp %33 : vector<16x128xf32>
    %cst_17 = arith.constant 1.000000e+00 : f32
    %35 = vector.broadcast %cst_17 : f32 to vector<16x128xf32>
    %36 = arith.addf %35, %34 : vector<16x128xf32>
    %37 = arith.divf %35, %36 : vector<16x128xf32>
    %38 = arith.mulf %23, %14 : vector<16x128xf32>
    %39 = arith.mulf %29, %31 : vector<16x128xf32>
    %40 = arith.addf %38, %39 : vector<16x128xf32>
    %41 = math.tanh %40 : vector<16x128xf32>
    %42 = arith.mulf %37, %41 : vector<16x128xf32>
    %43 = vector.extract_strided_slice %11 {offsets = [16, 0], sizes = [16, 512], strides = [1, 1]} : vector<128x512xf32> to vector<16x512xf32>
    %cst_18 = arith.constant dense<0.000000e+00> : vector<16x512xf32>
    %44 = tpu.matmul %42, %12, %cst_18 {dimension_numbers = #tpu.dot_dimension_numbers<[1], [0], [0], [1], [0, 0, 1, 1], [], []>} : vector<16x128xf32>, vector<128x512xf32>, vector<16x512xf32> -> vector<16x512xf32>
    %45 = arith.addf %43, %44 : vector<16x512xf32>
    %46 = vector.extract_strided_slice %45 {offsets = [0, 0], sizes = [16, 128], strides = [1, 1]} : vector<16x512xf32> to vector<16x128xf32>
    %47 = arith.negf %46 : vector<16x128xf32>
    %48 = math.exp %47 : vector<16x128xf32>
    %cst_19 = arith.constant 1.000000e+00 : f32
    %49 = vector.broadcast %cst_19 : f32 to vector<16x128xf32>
    %50 = arith.addf %49, %48 : vector<16x128xf32>
    %51 = arith.divf %49, %50 : vector<16x128xf32>
    %52 = vector.extract_strided_slice %45 {offsets = [0, 128], sizes = [16, 128], strides = [1, 1]} : vector<16x512xf32> to vector<16x128xf32>
    %53 = arith.negf %52 : vector<16x128xf32>
    %54 = math.exp %53 : vector<16x128xf32>
    %cst_20 = arith.constant 1.000000e+00 : f32
    %55 = vector.broadcast %cst_20 : f32 to vector<16x128xf32>
    %56 = arith.addf %55, %54 : vector<16x128xf32>
    %57 = arith.divf %55, %56 : vector<16x128xf32>
    %58 = vector.extract_strided_slice %45 {offsets = [0, 256], sizes = [16, 128], strides = [1, 1]} : vector<16x512xf32> to vector<16x128xf32>
    %59 = math.tanh %58 : vector<16x128xf32>
    %60 = vector.extract_strided_slice %45 {offsets = [0, 384], sizes = [16, 128], strides = [1, 1]} : vector<16x512xf32> to vector<16x128xf32>
    %61 = arith.negf %60 : vector<16x128xf32>
    %62 = math.exp %61 : vector<16x128xf32>
    %cst_21 = arith.constant 1.000000e+00 : f32
    %63 = vector.broadcast %cst_21 : f32 to vector<16x128xf32>
    %64 = arith.addf %63, %62 : vector<16x128xf32>
    %65 = arith.divf %63, %64 : vector<16x128xf32>
    %66 = arith.mulf %51, %40 : vector<16x128xf32>
    %67 = arith.mulf %57, %59 : vector<16x128xf32>
    %68 = arith.addf %66, %67 : vector<16x128xf32>
    %69 = math.tanh %68 : vector<16x128xf32>
    %70 = arith.mulf %65, %69 : vector<16x128xf32>
    %71 = vector.extract_strided_slice %11 {offsets = [32, 0], sizes = [16, 512], strides = [1, 1]} : vector<128x512xf32> to vector<16x512xf32>
    %cst_22 = arith.constant dense<0.000000e+00> : vector<16x512xf32>
    %72 = tpu.matmul %70, %12, %cst_22 {dimension_numbers = #tpu.dot_dimension_numbers<[1], [0], [0], [1], [0, 0, 1, 1], [], []>} : vector<16x128xf32>, vector<128x512xf32>, vector<16x512xf32> -> vector<16x512xf32>
    %73 = arith.addf %71, %72 : vector<16x512xf32>
    %74 = vector.extract_strided_slice %73 {offsets = [0, 0], sizes = [16, 128], strides = [1, 1]} : vector<16x512xf32> to vector<16x128xf32>
    %75 = arith.negf %74 : vector<16x128xf32>
    %76 = math.exp %75 : vector<16x128xf32>
    %cst_23 = arith.constant 1.000000e+00 : f32
    %77 = vector.broadcast %cst_23 : f32 to vector<16x128xf32>
    %78 = arith.addf %77, %76 : vector<16x128xf32>
    %79 = arith.divf %77, %78 : vector<16x128xf32>
    %80 = vector.extract_strided_slice %73 {offsets = [0, 128], sizes = [16, 128], strides = [1, 1]} : vector<16x512xf32> to vector<16x128xf32>
    %81 = arith.negf %80 : vector<16x128xf32>
    %82 = math.exp %81 : vector<16x128xf32>
    %cst_24 = arith.constant 1.000000e+00 : f32
    %83 = vector.broadcast %cst_24 : f32 to vector<16x128xf32>
    %84 = arith.addf %83, %82 : vector<16x128xf32>
    %85 = arith.divf %83, %84 : vector<16x128xf32>
    %86 = vector.extract_strided_slice %73 {offsets = [0, 256], sizes = [16, 128], strides = [1, 1]} : vector<16x512xf32> to vector<16x128xf32>
    %87 = math.tanh %86 : vector<16x128xf32>
    %88 = vector.extract_strided_slice %73 {offsets = [0, 384], sizes = [16, 128], strides = [1, 1]} : vector<16x512xf32> to vector<16x128xf32>
    %89 = arith.negf %88 : vector<16x128xf32>
    %90 = math.exp %89 : vector<16x128xf32>
    %cst_25 = arith.constant 1.000000e+00 : f32
    %91 = vector.broadcast %cst_25 : f32 to vector<16x128xf32>
    %92 = arith.addf %91, %90 : vector<16x128xf32>
    %93 = arith.divf %91, %92 : vector<16x128xf32>
    %94 = arith.mulf %79, %68 : vector<16x128xf32>
    %95 = arith.mulf %85, %87 : vector<16x128xf32>
    %96 = arith.addf %94, %95 : vector<16x128xf32>
    %97 = math.tanh %96 : vector<16x128xf32>
    %98 = arith.mulf %93, %97 : vector<16x128xf32>
    %99 = vector.extract_strided_slice %11 {offsets = [48, 0], sizes = [16, 512], strides = [1, 1]} : vector<128x512xf32> to vector<16x512xf32>
    %cst_26 = arith.constant dense<0.000000e+00> : vector<16x512xf32>
    %100 = tpu.matmul %98, %12, %cst_26 {dimension_numbers = #tpu.dot_dimension_numbers<[1], [0], [0], [1], [0, 0, 1, 1], [], []>} : vector<16x128xf32>, vector<128x512xf32>, vector<16x512xf32> -> vector<16x512xf32>
    %101 = arith.addf %99, %100 : vector<16x512xf32>
    %102 = vector.extract_strided_slice %101 {offsets = [0, 0], sizes = [16, 128], strides = [1, 1]} : vector<16x512xf32> to vector<16x128xf32>
    %103 = arith.negf %102 : vector<16x128xf32>
    %104 = math.exp %103 : vector<16x128xf32>
    %cst_27 = arith.constant 1.000000e+00 : f32
    %105 = vector.broadcast %cst_27 : f32 to vector<16x128xf32>
    %106 = arith.addf %105, %104 : vector<16x128xf32>
    %107 = arith.divf %105, %106 : vector<16x128xf32>
    %108 = vector.extract_strided_slice %101 {offsets = [0, 128], sizes = [16, 128], strides = [1, 1]} : vector<16x512xf32> to vector<16x128xf32>
    %109 = arith.negf %108 : vector<16x128xf32>
    %110 = math.exp %109 : vector<16x128xf32>
    %cst_28 = arith.constant 1.000000e+00 : f32
    %111 = vector.broadcast %cst_28 : f32 to vector<16x128xf32>
    %112 = arith.addf %111, %110 : vector<16x128xf32>
    %113 = arith.divf %111, %112 : vector<16x128xf32>
    %114 = vector.extract_strided_slice %101 {offsets = [0, 256], sizes = [16, 128], strides = [1, 1]} : vector<16x512xf32> to vector<16x128xf32>
    %115 = math.tanh %114 : vector<16x128xf32>
    %116 = vector.extract_strided_slice %101 {offsets = [0, 384], sizes = [16, 128], strides = [1, 1]} : vector<16x512xf32> to vector<16x128xf32>
    %117 = arith.negf %116 : vector<16x128xf32>
    %118 = math.exp %117 : vector<16x128xf32>
    %cst_29 = arith.constant 1.000000e+00 : f32
    %119 = vector.broadcast %cst_29 : f32 to vector<16x128xf32>
    %120 = arith.addf %119, %118 : vector<16x128xf32>
    %121 = arith.divf %119, %120 : vector<16x128xf32>
    %122 = arith.mulf %107, %96 : vector<16x128xf32>
    %123 = arith.mulf %113, %115 : vector<16x128xf32>
    %124 = arith.addf %122, %123 : vector<16x128xf32>
    %125 = math.tanh %124 : vector<16x128xf32>
    %126 = arith.mulf %121, %125 : vector<16x128xf32>
    %127 = vector.extract_strided_slice %11 {offsets = [64, 0], sizes = [16, 512], strides = [1, 1]} : vector<128x512xf32> to vector<16x512xf32>
    %cst_30 = arith.constant dense<0.000000e+00> : vector<16x512xf32>
    %128 = tpu.matmul %126, %12, %cst_30 {dimension_numbers = #tpu.dot_dimension_numbers<[1], [0], [0], [1], [0, 0, 1, 1], [], []>} : vector<16x128xf32>, vector<128x512xf32>, vector<16x512xf32> -> vector<16x512xf32>
    %129 = arith.addf %127, %128 : vector<16x512xf32>
    %130 = vector.extract_strided_slice %129 {offsets = [0, 0], sizes = [16, 128], strides = [1, 1]} : vector<16x512xf32> to vector<16x128xf32>
    %131 = arith.negf %130 : vector<16x128xf32>
    %132 = math.exp %131 : vector<16x128xf32>
    %cst_31 = arith.constant 1.000000e+00 : f32
    %133 = vector.broadcast %cst_31 : f32 to vector<16x128xf32>
    %134 = arith.addf %133, %132 : vector<16x128xf32>
    %135 = arith.divf %133, %134 : vector<16x128xf32>
    %136 = vector.extract_strided_slice %129 {offsets = [0, 128], sizes = [16, 128], strides = [1, 1]} : vector<16x512xf32> to vector<16x128xf32>
    %137 = arith.negf %136 : vector<16x128xf32>
    %138 = math.exp %137 : vector<16x128xf32>
    %cst_32 = arith.constant 1.000000e+00 : f32
    %139 = vector.broadcast %cst_32 : f32 to vector<16x128xf32>
    %140 = arith.addf %139, %138 : vector<16x128xf32>
    %141 = arith.divf %139, %140 : vector<16x128xf32>
    %142 = vector.extract_strided_slice %129 {offsets = [0, 256], sizes = [16, 128], strides = [1, 1]} : vector<16x512xf32> to vector<16x128xf32>
    %143 = math.tanh %142 : vector<16x128xf32>
    %144 = vector.extract_strided_slice %129 {offsets = [0, 384], sizes = [16, 128], strides = [1, 1]} : vector<16x512xf32> to vector<16x128xf32>
    %145 = arith.negf %144 : vector<16x128xf32>
    %146 = math.exp %145 : vector<16x128xf32>
    %cst_33 = arith.constant 1.000000e+00 : f32
    %147 = vector.broadcast %cst_33 : f32 to vector<16x128xf32>
    %148 = arith.addf %147, %146 : vector<16x128xf32>
    %149 = arith.divf %147, %148 : vector<16x128xf32>
    %150 = arith.mulf %135, %124 : vector<16x128xf32>
    %151 = arith.mulf %141, %143 : vector<16x128xf32>
    %152 = arith.addf %150, %151 : vector<16x128xf32>
    %153 = math.tanh %152 : vector<16x128xf32>
    %154 = arith.mulf %149, %153 : vector<16x128xf32>
    %155 = vector.extract_strided_slice %11 {offsets = [80, 0], sizes = [16, 512], strides = [1, 1]} : vector<128x512xf32> to vector<16x512xf32>
    %cst_34 = arith.constant dense<0.000000e+00> : vector<16x512xf32>
    %156 = tpu.matmul %154, %12, %cst_34 {dimension_numbers = #tpu.dot_dimension_numbers<[1], [0], [0], [1], [0, 0, 1, 1], [], []>} : vector<16x128xf32>, vector<128x512xf32>, vector<16x512xf32> -> vector<16x512xf32>
    %157 = arith.addf %155, %156 : vector<16x512xf32>
    %158 = vector.extract_strided_slice %157 {offsets = [0, 0], sizes = [16, 128], strides = [1, 1]} : vector<16x512xf32> to vector<16x128xf32>
    %159 = arith.negf %158 : vector<16x128xf32>
    %160 = math.exp %159 : vector<16x128xf32>
    %cst_35 = arith.constant 1.000000e+00 : f32
    %161 = vector.broadcast %cst_35 : f32 to vector<16x128xf32>
    %162 = arith.addf %161, %160 : vector<16x128xf32>
    %163 = arith.divf %161, %162 : vector<16x128xf32>
    %164 = vector.extract_strided_slice %157 {offsets = [0, 128], sizes = [16, 128], strides = [1, 1]} : vector<16x512xf32> to vector<16x128xf32>
    %165 = arith.negf %164 : vector<16x128xf32>
    %166 = math.exp %165 : vector<16x128xf32>
    %cst_36 = arith.constant 1.000000e+00 : f32
    %167 = vector.broadcast %cst_36 : f32 to vector<16x128xf32>
    %168 = arith.addf %167, %166 : vector<16x128xf32>
    %169 = arith.divf %167, %168 : vector<16x128xf32>
    %170 = vector.extract_strided_slice %157 {offsets = [0, 256], sizes = [16, 128], strides = [1, 1]} : vector<16x512xf32> to vector<16x128xf32>
    %171 = math.tanh %170 : vector<16x128xf32>
    %172 = vector.extract_strided_slice %157 {offsets = [0, 384], sizes = [16, 128], strides = [1, 1]} : vector<16x512xf32> to vector<16x128xf32>
    %173 = arith.negf %172 : vector<16x128xf32>
    %174 = math.exp %173 : vector<16x128xf32>
    %cst_37 = arith.constant 1.000000e+00 : f32
    %175 = vector.broadcast %cst_37 : f32 to vector<16x128xf32>
    %176 = arith.addf %175, %174 : vector<16x128xf32>
    %177 = arith.divf %175, %176 : vector<16x128xf32>
    %178 = arith.mulf %163, %152 : vector<16x128xf32>
    %179 = arith.mulf %169, %171 : vector<16x128xf32>
    %180 = arith.addf %178, %179 : vector<16x128xf32>
    %181 = math.tanh %180 : vector<16x128xf32>
    %182 = arith.mulf %177, %181 : vector<16x128xf32>
    %183 = vector.extract_strided_slice %11 {offsets = [96, 0], sizes = [16, 512], strides = [1, 1]} : vector<128x512xf32> to vector<16x512xf32>
    %cst_38 = arith.constant dense<0.000000e+00> : vector<16x512xf32>
    %184 = tpu.matmul %182, %12, %cst_38 {dimension_numbers = #tpu.dot_dimension_numbers<[1], [0], [0], [1], [0, 0, 1, 1], [], []>} : vector<16x128xf32>, vector<128x512xf32>, vector<16x512xf32> -> vector<16x512xf32>
    %185 = arith.addf %183, %184 : vector<16x512xf32>
    %186 = vector.extract_strided_slice %185 {offsets = [0, 0], sizes = [16, 128], strides = [1, 1]} : vector<16x512xf32> to vector<16x128xf32>
    %187 = arith.negf %186 : vector<16x128xf32>
    %188 = math.exp %187 : vector<16x128xf32>
    %cst_39 = arith.constant 1.000000e+00 : f32
    %189 = vector.broadcast %cst_39 : f32 to vector<16x128xf32>
    %190 = arith.addf %189, %188 : vector<16x128xf32>
    %191 = arith.divf %189, %190 : vector<16x128xf32>
    %192 = vector.extract_strided_slice %185 {offsets = [0, 128], sizes = [16, 128], strides = [1, 1]} : vector<16x512xf32> to vector<16x128xf32>
    %193 = arith.negf %192 : vector<16x128xf32>
    %194 = math.exp %193 : vector<16x128xf32>
    %cst_40 = arith.constant 1.000000e+00 : f32
    %195 = vector.broadcast %cst_40 : f32 to vector<16x128xf32>
    %196 = arith.addf %195, %194 : vector<16x128xf32>
    %197 = arith.divf %195, %196 : vector<16x128xf32>
    %198 = vector.extract_strided_slice %185 {offsets = [0, 256], sizes = [16, 128], strides = [1, 1]} : vector<16x512xf32> to vector<16x128xf32>
    %199 = math.tanh %198 : vector<16x128xf32>
    %200 = vector.extract_strided_slice %185 {offsets = [0, 384], sizes = [16, 128], strides = [1, 1]} : vector<16x512xf32> to vector<16x128xf32>
    %201 = arith.negf %200 : vector<16x128xf32>
    %202 = math.exp %201 : vector<16x128xf32>
    %cst_41 = arith.constant 1.000000e+00 : f32
    %203 = vector.broadcast %cst_41 : f32 to vector<16x128xf32>
    %204 = arith.addf %203, %202 : vector<16x128xf32>
    %205 = arith.divf %203, %204 : vector<16x128xf32>
    %206 = arith.mulf %191, %180 : vector<16x128xf32>
    %207 = arith.mulf %197, %199 : vector<16x128xf32>
    %208 = arith.addf %206, %207 : vector<16x128xf32>
    %209 = math.tanh %208 : vector<16x128xf32>
    %210 = arith.mulf %205, %209 : vector<16x128xf32>
    %211 = vector.extract_strided_slice %11 {offsets = [112, 0], sizes = [16, 512], strides = [1, 1]} : vector<128x512xf32> to vector<16x512xf32>
    %cst_42 = arith.constant dense<0.000000e+00> : vector<16x512xf32>
    %212 = tpu.matmul %210, %12, %cst_42 {dimension_numbers = #tpu.dot_dimension_numbers<[1], [0], [0], [1], [0, 0, 1, 1], [], []>} : vector<16x128xf32>, vector<128x512xf32>, vector<16x512xf32> -> vector<16x512xf32>
    %213 = arith.addf %211, %212 : vector<16x512xf32>
    %214 = vector.extract_strided_slice %213 {offsets = [0, 0], sizes = [16, 128], strides = [1, 1]} : vector<16x512xf32> to vector<16x128xf32>
    %215 = arith.negf %214 : vector<16x128xf32>
    %216 = math.exp %215 : vector<16x128xf32>
    %cst_43 = arith.constant 1.000000e+00 : f32
    %217 = vector.broadcast %cst_43 : f32 to vector<16x128xf32>
    %218 = arith.addf %217, %216 : vector<16x128xf32>
    %219 = arith.divf %217, %218 : vector<16x128xf32>
    %220 = vector.extract_strided_slice %213 {offsets = [0, 128], sizes = [16, 128], strides = [1, 1]} : vector<16x512xf32> to vector<16x128xf32>
    %221 = arith.negf %220 : vector<16x128xf32>
    %222 = math.exp %221 : vector<16x128xf32>
    %cst_44 = arith.constant 1.000000e+00 : f32
    %223 = vector.broadcast %cst_44 : f32 to vector<16x128xf32>
    %224 = arith.addf %223, %222 : vector<16x128xf32>
    %225 = arith.divf %223, %224 : vector<16x128xf32>
    %226 = vector.extract_strided_slice %213 {offsets = [0, 256], sizes = [16, 128], strides = [1, 1]} : vector<16x512xf32> to vector<16x128xf32>
    %227 = math.tanh %226 : vector<16x128xf32>
    %228 = vector.extract_strided_slice %213 {offsets = [0, 384], sizes = [16, 128], strides = [1, 1]} : vector<16x512xf32> to vector<16x128xf32>
    %229 = arith.negf %228 : vector<16x128xf32>
    %230 = math.exp %229 : vector<16x128xf32>
    %cst_45 = arith.constant 1.000000e+00 : f32
    %231 = vector.broadcast %cst_45 : f32 to vector<16x128xf32>
    %232 = arith.addf %231, %230 : vector<16x128xf32>
    %233 = arith.divf %231, %232 : vector<16x128xf32>
    %234 = arith.mulf %219, %208 : vector<16x128xf32>
    %235 = arith.mulf %225, %227 : vector<16x128xf32>
    %236 = arith.addf %234, %235 : vector<16x128xf32>
    %237 = math.tanh %236 : vector<16x128xf32>
    %238 = arith.mulf %233, %237 : vector<16x128xf32>
    %239 = arith.mulf %42, %238 : vector<16x128xf32>
    %cst_46 = arith.constant dense<0.000000e+00> : vector<16xf32>
    %240 = vector.multi_reduction <add>, %239, %cst_46 [1] : vector<16x128xf32> to vector<16xf32>
    %241 = vector.shape_cast %240 : vector<16xf32> to vector<16x1xf32>
    %242 = arith.mulf %70, %238 : vector<16x128xf32>
    %cst_47 = arith.constant dense<0.000000e+00> : vector<16xf32>
    %243 = vector.multi_reduction <add>, %242, %cst_47 [1] : vector<16x128xf32> to vector<16xf32>
    %244 = vector.shape_cast %243 : vector<16xf32> to vector<16x1xf32>
    %245 = arith.mulf %98, %238 : vector<16x128xf32>
    %cst_48 = arith.constant dense<0.000000e+00> : vector<16xf32>
    %246 = vector.multi_reduction <add>, %245, %cst_48 [1] : vector<16x128xf32> to vector<16xf32>
    %247 = vector.shape_cast %246 : vector<16xf32> to vector<16x1xf32>
    %248 = arith.mulf %126, %238 : vector<16x128xf32>
    %cst_49 = arith.constant dense<0.000000e+00> : vector<16xf32>
    %249 = vector.multi_reduction <add>, %248, %cst_49 [1] : vector<16x128xf32> to vector<16xf32>
    %250 = vector.shape_cast %249 : vector<16xf32> to vector<16x1xf32>
    %251 = arith.mulf %154, %238 : vector<16x128xf32>
    %cst_50 = arith.constant dense<0.000000e+00> : vector<16xf32>
    %252 = vector.multi_reduction <add>, %251, %cst_50 [1] : vector<16x128xf32> to vector<16xf32>
    %253 = vector.shape_cast %252 : vector<16xf32> to vector<16x1xf32>
    %254 = arith.mulf %182, %238 : vector<16x128xf32>
    %cst_51 = arith.constant dense<0.000000e+00> : vector<16xf32>
    %255 = vector.multi_reduction <add>, %254, %cst_51 [1] : vector<16x128xf32> to vector<16xf32>
    %256 = vector.shape_cast %255 : vector<16xf32> to vector<16x1xf32>
    %257 = arith.mulf %210, %238 : vector<16x128xf32>
    %cst_52 = arith.constant dense<0.000000e+00> : vector<16xf32>
    %258 = vector.multi_reduction <add>, %257, %cst_52 [1] : vector<16x128xf32> to vector<16xf32>
    %259 = vector.shape_cast %258 : vector<16xf32> to vector<16x1xf32>
    %260 = arith.mulf %238, %238 : vector<16x128xf32>
    %cst_53 = arith.constant dense<0.000000e+00> : vector<16xf32>
    %261 = vector.multi_reduction <add>, %260, %cst_53 [1] : vector<16x128xf32> to vector<16xf32>
    %262 = vector.shape_cast %261 : vector<16xf32> to vector<16x1xf32>
    %263 = arith.maximumf %241, %244 : vector<16x1xf32>
    %264 = arith.maximumf %263, %247 : vector<16x1xf32>
    %265 = arith.maximumf %264, %250 : vector<16x1xf32>
    %266 = arith.maximumf %265, %253 : vector<16x1xf32>
    %267 = arith.maximumf %266, %256 : vector<16x1xf32>
    %268 = arith.maximumf %267, %259 : vector<16x1xf32>
    %269 = arith.maximumf %268, %262 : vector<16x1xf32>
    %270 = arith.subf %241, %269 : vector<16x1xf32>
    %271 = math.exp %270 : vector<16x1xf32>
    %272 = arith.subf %244, %269 : vector<16x1xf32>
    %273 = math.exp %272 : vector<16x1xf32>
    %274 = arith.subf %247, %269 : vector<16x1xf32>
    %275 = math.exp %274 : vector<16x1xf32>
    %276 = arith.subf %250, %269 : vector<16x1xf32>
    %277 = math.exp %276 : vector<16x1xf32>
    %278 = arith.subf %253, %269 : vector<16x1xf32>
    %279 = math.exp %278 : vector<16x1xf32>
    %280 = arith.subf %256, %269 : vector<16x1xf32>
    %281 = math.exp %280 : vector<16x1xf32>
    %282 = arith.subf %259, %269 : vector<16x1xf32>
    %283 = math.exp %282 : vector<16x1xf32>
    %284 = arith.subf %262, %269 : vector<16x1xf32>
    %285 = math.exp %284 : vector<16x1xf32>
    %286 = arith.addf %271, %273 : vector<16x1xf32>
    %287 = arith.addf %286, %275 : vector<16x1xf32>
    %288 = arith.addf %287, %277 : vector<16x1xf32>
    %289 = arith.addf %288, %279 : vector<16x1xf32>
    %290 = arith.addf %289, %281 : vector<16x1xf32>
    %291 = arith.addf %290, %283 : vector<16x1xf32>
    %292 = arith.addf %291, %285 : vector<16x1xf32>
    %293 = tpu.reciprocal %292 {approx = true} : vector<16x1xf32> -> vector<16x1xf32>
    %294 = arith.mulf %271, %293 : vector<16x1xf32>
    %295 = vector.broadcast %294 : vector<16x1xf32> to vector<16x128xf32>
    %296 = arith.mulf %42, %295 : vector<16x128xf32>
    %297 = arith.mulf %273, %293 : vector<16x1xf32>
    %298 = vector.broadcast %297 : vector<16x1xf32> to vector<16x128xf32>
    %299 = arith.mulf %70, %298 : vector<16x128xf32>
    %300 = arith.addf %296, %299 : vector<16x128xf32>
    %301 = arith.mulf %275, %293 : vector<16x1xf32>
    %302 = vector.broadcast %301 : vector<16x1xf32> to vector<16x128xf32>
    %303 = arith.mulf %98, %302 : vector<16x128xf32>
    %304 = arith.addf %300, %303 : vector<16x128xf32>
    %305 = arith.mulf %277, %293 : vector<16x1xf32>
    %306 = vector.broadcast %305 : vector<16x1xf32> to vector<16x128xf32>
    %307 = arith.mulf %126, %306 : vector<16x128xf32>
    %308 = arith.addf %304, %307 : vector<16x128xf32>
    %309 = arith.mulf %279, %293 : vector<16x1xf32>
    %310 = vector.broadcast %309 : vector<16x1xf32> to vector<16x128xf32>
    %311 = arith.mulf %154, %310 : vector<16x128xf32>
    %312 = arith.addf %308, %311 : vector<16x128xf32>
    %313 = arith.mulf %281, %293 : vector<16x1xf32>
    %314 = vector.broadcast %313 : vector<16x1xf32> to vector<16x128xf32>
    %315 = arith.mulf %182, %314 : vector<16x128xf32>
    %316 = arith.addf %312, %315 : vector<16x128xf32>
    %317 = arith.mulf %283, %293 : vector<16x1xf32>
    %318 = vector.broadcast %317 : vector<16x1xf32> to vector<16x128xf32>
    %319 = arith.mulf %210, %318 : vector<16x128xf32>
    %320 = arith.addf %316, %319 : vector<16x128xf32>
    %321 = arith.mulf %285, %293 : vector<16x1xf32>
    %322 = vector.broadcast %321 : vector<16x1xf32> to vector<16x128xf32>
    %323 = arith.mulf %238, %322 : vector<16x128xf32>
    %324 = arith.addf %320, %323 : vector<16x128xf32>
    %c0_54 = arith.constant 0 : index
    %c0_55 = arith.constant 0 : index
    %325 = vector.load %arg6[%c0_54, %c0_55] : memref<10x128xf32, #tpu.memory_space<vmem>>, vector<10x128xf32>
    %c0_56 = arith.constant 0 : index
    %c0_57 = arith.constant 0 : index
    %326 = vector.load %arg7[%c0_56, %c0_57] : memref<10x128xf32, #tpu.memory_space<vmem>>, vector<10x128xf32>
    %327 = vector.extract_strided_slice %324 {offsets = [0, 0], sizes = [8, 128], strides = [1, 1]} : vector<16x128xf32> to vector<8x128xf32>
    %328 = vector.extract_strided_slice %325 {offsets = [0, 0], sizes = [8, 128], strides = [1, 1]} : vector<10x128xf32> to vector<8x128xf32>
    %329 = vector.extract_strided_slice %326 {offsets = [0, 0], sizes = [8, 128], strides = [1, 1]} : vector<10x128xf32> to vector<8x128xf32>
    %330 = vector.shape_cast %327 : vector<8x128xf32> to vector<1x8x128xf32>
    %cst_58 = arith.constant dense<0.000000e+00> : vector<1xf32>
    %331 = vector.multi_reduction <add>, %330, %cst_58 [1, 2] : vector<1x8x128xf32> to vector<1xf32>
    %332 = vector.shape_cast %331 : vector<1xf32> to vector<1x1x1xf32>
    %333 = vector.extract %332[0, 0, 0] : f32 from vector<1x1x1xf32>
    %cst_59 = arith.constant 1.024000e+03 : f32
    %334 = arith.divf %333, %cst_59 : f32
    %335 = vector.broadcast %334 : f32 to vector<8x128xf32>
    %336 = arith.subf %327, %335 : vector<8x128xf32>
    %337 = arith.mulf %336, %336 : vector<8x128xf32>
    %338 = vector.shape_cast %337 : vector<8x128xf32> to vector<1x8x128xf32>
    %cst_60 = arith.constant dense<0.000000e+00> : vector<1xf32>
    %339 = vector.multi_reduction <add>, %338, %cst_60 [1, 2] : vector<1x8x128xf32> to vector<1xf32>
    %340 = vector.shape_cast %339 : vector<1xf32> to vector<1x1x1xf32>
    %341 = vector.extract %340[0, 0, 0] : f32 from vector<1x1x1xf32>
    %cst_61 = arith.constant 9.77517105E-4 : f32
    %342 = arith.mulf %341, %cst_61 : f32
    %343 = vector.broadcast %334 : f32 to vector<8x128xf32>
    %344 = arith.subf %327, %343 : vector<8x128xf32>
    %345 = math.rsqrt %342 : f32
    %346 = vector.broadcast %345 : f32 to vector<8x128xf32>
    %347 = arith.mulf %344, %346 : vector<8x128xf32>
    %348 = arith.mulf %347, %328 : vector<8x128xf32>
    %349 = arith.addf %348, %329 : vector<8x128xf32>
    %350 = vector.extract_strided_slice %324 {offsets = [8, 0], sizes = [2, 128], strides = [1, 1]} : vector<16x128xf32> to vector<2x128xf32>
    %351 = vector.extract_strided_slice %325 {offsets = [8, 0], sizes = [2, 128], strides = [1, 1]} : vector<10x128xf32> to vector<2x128xf32>
    %352 = vector.extract_strided_slice %326 {offsets = [8, 0], sizes = [2, 128], strides = [1, 1]} : vector<10x128xf32> to vector<2x128xf32>
    %353 = vector.shape_cast %350 : vector<2x128xf32> to vector<1x2x128xf32>
    %cst_62 = arith.constant dense<0.000000e+00> : vector<1xf32>
    %354 = vector.multi_reduction <add>, %353, %cst_62 [1, 2] : vector<1x2x128xf32> to vector<1xf32>
    %355 = vector.shape_cast %354 : vector<1xf32> to vector<1x1x1xf32>
    %356 = vector.extract %355[0, 0, 0] : f32 from vector<1x1x1xf32>
    %cst_63 = arith.constant 2.560000e+02 : f32
    %357 = arith.divf %356, %cst_63 : f32
    %358 = vector.broadcast %357 : f32 to vector<2x128xf32>
    %359 = arith.subf %350, %358 : vector<2x128xf32>
    %360 = arith.mulf %359, %359 : vector<2x128xf32>
    %361 = vector.shape_cast %360 : vector<2x128xf32> to vector<1x2x128xf32>
    %cst_64 = arith.constant dense<0.000000e+00> : vector<1xf32>
    %362 = vector.multi_reduction <add>, %361, %cst_64 [1, 2] : vector<1x2x128xf32> to vector<1xf32>
    %363 = vector.shape_cast %362 : vector<1xf32> to vector<1x1x1xf32>
    %364 = vector.extract %363[0, 0, 0] : f32 from vector<1x1x1xf32>
    %cst_65 = arith.constant 0.00392156886 : f32
    %365 = arith.mulf %364, %cst_65 : f32
    %366 = vector.broadcast %357 : f32 to vector<2x128xf32>
    %367 = arith.subf %350, %366 : vector<2x128xf32>
    %368 = math.rsqrt %365 : f32
    %369 = vector.broadcast %368 : f32 to vector<2x128xf32>
    %370 = arith.mulf %367, %369 : vector<2x128xf32>
    %371 = arith.mulf %370, %351 : vector<2x128xf32>
    %372 = arith.addf %371, %352 : vector<2x128xf32>
    %373 = vector.extract_strided_slice %349 {offsets = [0, 0], sizes = [4, 128], strides = [1, 1]} : vector<8x128xf32> to vector<4x128xf32>
    %374 = vector.extract_strided_slice %372 {offsets = [0, 0], sizes = [1, 128], strides = [1, 1]} : vector<2x128xf32> to vector<1x128xf32>
    %cst_66 = arith.constant 1.000000e-01 : f32
    %375 = vector.broadcast %cst_66 : f32 to vector<1x128xf32>
    %376 = arith.mulf %375, %374 : vector<1x128xf32>
    %377 = vector.broadcast %376 : vector<1x128xf32> to vector<4x128xf32>
    %378 = arith.addf %373, %377 : vector<4x128xf32>
    %379 = vector.extract_strided_slice %349 {offsets = [4, 0], sizes = [4, 128], strides = [1, 1]} : vector<8x128xf32> to vector<4x128xf32>
    %380 = vector.extract_strided_slice %372 {offsets = [1, 0], sizes = [1, 128], strides = [1, 1]} : vector<2x128xf32> to vector<1x128xf32>
    %cst_67 = arith.constant 1.000000e-01 : f32
    %381 = vector.broadcast %cst_67 : f32 to vector<1x128xf32>
    %382 = arith.mulf %381, %380 : vector<1x128xf32>
    %383 = vector.broadcast %382 : vector<1x128xf32> to vector<4x128xf32>
    %384 = arith.addf %379, %383 : vector<4x128xf32>
    %385 = tpu.concatenate %378, %384 in 0 : vector<4x128xf32>, vector<4x128xf32> -> vector<8x128xf32>
    %c0_68 = arith.constant 0 : index
    %c0_69 = arith.constant 0 : index
    %386 = vector.load %arg8[%c0_68, %c0_69] : memref<8x128xf32, #tpu.memory_space<vmem>>, vector<8x128xf32>
    tpu.vector_store %arg8[%c0_68, %c0_69], %385 {strides = array<i32>} : memref<8x128xf32, #tpu.memory_space<vmem>>, vector<8x128xf32>,
    return
  }
}

</mosaic_0001>

<llo_original>
// kernel: ml_context_forward.1
$region0: #{ml_context_forward.1}
  #allocation0 [shape = 'u32[]', space=smem, size = 0x4, offset = 0x4, fixed_abs, tag = 'smem constant byte address 0x4 - core index']
  #allocation1 [shape = 'u32[144,128]{1,0:T(1,128)}', space=vmem, size = 0x12000, scoped, tag = 'internal scratch']
  %s0 = inlined_call_operand.vmem [shape: f32[128,11], index: 0, kind: input, shape index: {}]
  %s1 = inlined_call_operand.vmem [shape: f32[11,128], index: 1, kind: input, shape index: {}]
  %s2 = inlined_call_operand.vmem [shape: f32[1,128], index: 2, kind: input, shape index: {}]
  %s3 = inlined_call_operand.hbm [shape: f32[128,512], index: 3, kind: input, shape index: {}]
  %s4 = inlined_call_operand.hbm [shape: f32[128,512], index: 4, kind: input, shape index: {}]
  %s5 = inlined_call_operand.vmem [shape: f32[1,512], index: 5, kind: input, shape index: {}]
  %s6 = inlined_call_operand.vmem [shape: f32[10,128], index: 6, kind: input, shape index: {}]
  %s7 = inlined_call_operand.vmem [shape: f32[10,128], index: 7, kind: input, shape index: {}]
  %s8 = inlined_call_operand.hbm [shape: f32[8,128], index: 8, kind: output, shape index: {}]
  %s9 = sld [smem:[#allocation0]]
  $region50: #{ml_context_forward.1} parent=0
    _
  %s11 = ssub.s32 1, %s9
  %s12 = scalar_select 0, %s11, %s9
  $region1: #{ml_context_forward.1} parent=0
    #allocation2 [shape = 'u8[262144]{0}', space=vmem, size = 0x40000, scoped, tag = 'input window, operand 3, single buffered']
    #allocation3 [shape = 's32[1]{0}', space=sflag, size = 0x4, scoped, tag = 'scoped memory for ml_context_forward.1']
    #allocation4 [shape = 's32[1]{0}', space=sflag, size = 0x4, scoped, tag = 'scoped memory for ml_context_forward.1']
    #allocation5 [shape = 'u8[262144]{0}', space=vmem, size = 0x40000, scoped, tag = 'input window, operand 4, single buffered']
    #allocation6 [shape = 's32[1]{0}', space=sflag, size = 0x4, scoped, tag = 'scoped memory for ml_context_forward.1']
    #allocation7 [shape = 'u8[4096]{0}', space=vmem, size = 0x1000, scoped, tag = 'output window, operand 0, single buffered']
    %13 = vsyncpa [#allocation3], 0
    %14 = vsyncpa [#allocation6], 0
    %15 = vsyncpa [#allocation4], 0
    // Predicated region
    $region2: #{ml_context_forward.1} parent=1 // pred_check
      _
    $region3: #{ml_context_forward.1} parent=1 // pred_check_branch
      %17 = sbr.rel (0) target = $region5
    $region4: #{ml_context_forward.1} parent=1 // pred_region
      _
    $region5: #{ml_context_forward.1} parent=1 // pred_fallthru
      _
    // Predicated region
    $region6: #{ml_context_forward.1} parent=1 // pred_check
      _
    $region7: #{ml_context_forward.1} parent=1 // pred_check_branch
      %19 = sbr.rel (0) target = $region9
    $region8: #{ml_context_forward.1} parent=1 // pred_region
      _
    $region9: #{ml_context_forward.1} parent=1 // pred_fallthru
      _
    // Predicated region
    $region10: #{ml_context_forward.1} parent=1 // pred_check
      _
    $region11: #{ml_context_forward.1} parent=1 // pred_check_branch
      %21 = sbr.rel (0) target = $region13
    $region12: #{ml_context_forward.1} parent=1 // pred_region
      _
    $region13: #{ml_context_forward.1} parent=1 // pred_fallthru
      _
    // Predicated region
    $region14: #{ml_context_forward.1} parent=1 // pred_check
      _
    $region15: #{ml_context_forward.1} parent=1 // pred_check_branch
      %23 = sbr.rel (0) target = $region17
    $region16: #{ml_context_forward.1} parent=1 // pred_region
      %s25 = ssub.s32 8192, 8192
      %26 = vsyncadd [#allocation3], %s25
      %s27 = sshll.u32 [#allocation2], 4
      %s28 = int_to_ptr.vmem [resolvable:$true] %s27
      %33 = dma.hbm_to_vmem [thread:$0]  %s3, 8192, %s28, [#allocation3], 512, 512, 32
    $region17: #{ml_context_forward.1} parent=1 // pred_fallthru
      _
    // Predicated region
    $region18: #{ml_context_forward.1} parent=1 // pred_check
      _
    $region19: #{ml_context_forward.1} parent=1 // pred_check_branch
      %35 = sbr.rel (0) target = $region21
    $region20: #{ml_context_forward.1} parent=1 // pred_region
      %s37 = ssub.s32 8192, 8192
      %38 = vsyncadd [#allocation6], %s37
      %s39 = sshll.u32 [#allocation5], 4
      %s40 = int_to_ptr.vmem [resolvable:$true] %s39
      %45 = dma.hbm_to_vmem [thread:$0]  %s4, 8192, %s40, [#allocation6], 512, 512, 32
    $region21: #{ml_context_forward.1} parent=1 // pred_fallthru
      _
    // Predicated region
    $region22: #{ml_context_forward.1} parent=1 // pred_check
      _
    $region23: #{ml_context_forward.1} parent=1 // pred_check_branch
      %47 = sbr.rel (0) target = $region25
    $region24: #{ml_context_forward.1} parent=1 // pred_region
      _
    $region25: #{ml_context_forward.1} parent=1 // pred_fallthru
      _
    // Predicated region
    $region26: #{ml_context_forward.1} parent=1 // pred_check
      _
    $region27: #{ml_context_forward.1} parent=1 // pred_check_branch
      %49 = sbr.rel (0) target = $region29
    $region28: #{ml_context_forward.1} parent=1 // pred_region
      _
    $region29: #{ml_context_forward.1} parent=1 // pred_fallthru
      _
    // Predicated region
    $region30: #{ml_context_forward.1} parent=1 // pred_check
      _
    $region31: #{ml_context_forward.1} parent=1 // pred_check_branch
      %51 = sbr.rel (0) target = $region33
    $region32: #{ml_context_forward.1} parent=1 // pred_region
      _
    $region33: #{ml_context_forward.1} parent=1 // pred_fallthru
      _
    // Predicated region
    $region34: #{ml_context_forward.1} parent=1 // pred_check
      _
    $region35: #{ml_context_forward.1} parent=1 // pred_check_branch
      %53 = sbr.rel (0) target = $region37
    $region36: #{ml_context_forward.1} parent=1 // pred_region
      %54 = dma.done [#allocation3], 8192
    $region37: #{ml_context_forward.1} parent=1 // pred_fallthru
      _
    // Predicated region
    $region38: #{ml_context_forward.1} parent=1 // pred_check
      _
    $region39: #{ml_context_forward.1} parent=1 // pred_check_branch
      %56 = sbr.rel (0) target = $region41
    $region40: #{ml_context_forward.1} parent=1 // pred_region
      %57 = dma.done [#allocation6], 8192
    $region41: #{ml_context_forward.1} parent=1 // pred_fallthru
      _
    %v58 = vld [vmem:[%s0] sm:$0xff]
    %v59 = vld [vmem:[%s0 + $0x8] sm:$0xff]
    %v60 = vld [vmem:[%s0 + $0x10] sm:$0xff]
    %v61 = vld [vmem:[%s0 + $0x18] sm:$0xff]
    %v62 = vld [vmem:[%s0 + $0x20] sm:$0xff]
    %v63 = vld [vmem:[%s0 + $0x28] sm:$0xff]
    %v64 = vld [vmem:[%s0 + $0x30] sm:$0xff]
    %v65 = vld [vmem:[%s0 + $0x38] sm:$0xff]
    %v66 = vld [vmem:[%s0 + $0x40] sm:$0xff]
    %v67 = vld [vmem:[%s0 + $0x48] sm:$0xff]
    %v68 = vld [vmem:[%s0 + $0x50] sm:$0xff]
    %v69 = vld [vmem:[%s0 + $0x58] sm:$0xff]
    %v70 = vld [vmem:[%s0 + $0x60] sm:$0xff]
    %v71 = vld [vmem:[%s0 + $0x68] sm:$0xff]
    %v72 = vld [vmem:[%s0 + $0x70] sm:$0xff]
    %v73 = vld [vmem:[%s0 + $0x78] sm:$0xff]
    %v74 = vld [vmem:[%s1] sm:$0xff]
    %v75 = vld [vmem:[%s1 + $0x8] sm:$0x7]
    %v76 = vld [vmem:[%s2] sm:$0x1]
    %v78 = vlaneseq
    %v79 = vshrl.u32 %v78, 7
    %v80 = vsub.s32 0, %v79
    %v81 = vrot.slane %v76, %v80
    %vm83 = vcmask 89088
    %v85 = vsel %vm83, %v58, 0
    %v88 = vsel %vm83, %v59, 0
    %v91 = vsel %vm83, %v60, 0
    %v94 = vsel %vm83, %v61, 0
    %v97 = vsel %vm83, %v62, 0
    %v100 = vsel %vm83, %v63, 0
    %v103 = vsel %vm83, %v64, 0
    %v106 = vsel %vm83, %v65, 0
    %v109 = vsel %vm83, %v66, 0
    %v112 = vsel %vm83, %v67, 0
    %v115 = vsel %vm83, %v68, 0
    %v118 = vsel %vm83, %v69, 0
    %v121 = vsel %vm83, %v70, 0
    %v124 = vsel %vm83, %v71, 0
    %v127 = vsel %vm83, %v72, 0
    %v130 = vsel %vm83, %v73, 0
    %vm132 = vcmask 1042432
    %v134 = vsel %vm132, %v75, 0
    %136 = vmatprep.subr.mxu0 0.0
    %137 = vmatpush1.msra.mxu0 0.0
    %138 = vmatprep.subr.mxu0 0.0
    %139 = vmatpush1.msra.mxu0 0.0
    %140 = vmatprep.subr.mxu0 0.0
    %141 = vmatpush1.msra.mxu0 0.0
    %142 = vmatprep.subr.mxu0 0.0
    %143 = vmatpush1.msra.mxu0 0.0
    %144 = vmatprep.subr.mxu0 0.0
    %145 = vmatpush1.msra.mxu0 0.0
    %146 = vmatprep.subr.mxu0 0.0
    %147 = vmatpush1.msra.mxu0 0.0
    %148 = vmatprep.subr.mxu0 0.0
    %149 = vmatpush1.msra.mxu0 0.0
    %150 = vmatprep.subr.mxu0 0.0
    %151 = vmatpush1.msra.mxu0 0.0
    %152 = vmatprep.subr.mxu0 0.0
    %153 = vmatpush1.msra.mxu0 0.0
    %154 = vmatprep.subr.mxu0 0.0
    %155 = vmatpush1.msra.mxu0 0.0
    %156 = vmatprep.subr.mxu0 0.0
    %157 = vmatpush1.msra.mxu0 0.0
    %158 = vmatprep.subr.mxu0 0.0
    %159 = vmatpush1.msra.mxu0 0.0
    %160 = vmatprep.subr.mxu0 0.0
    %161 = vmatpush1.msra.mxu0 0.0
    %162 = vmatprep.subr.mxu0 0.0
    %163 = vmatpush1.msra.mxu0 0.0
    %164 = vmatprep.subr.mxu0 0.0
    %165 = vmatpush1.msra.mxu0 %v134
    %166 = vmatprep.subr.mxu0 0.0
    %167 = vmatpush1.msra.mxu0 %v74
    %168 = vmatprep.subr.mxu0 0.0
    %169 = vmatpush2.msra.mxu0 0.0
    %170 = vmatprep.subr.mxu0 0.0
    %171 = vmatpush2.msra.mxu0 0.0
    %172 = vmatprep.subr.mxu0 0.0
    %173 = vmatpush2.msra.mxu0 0.0
    %174 = vmatprep.subr.mxu0 0.0
    %175 = vmatpush2.msra.mxu0 0.0
    %176 = vmatprep.subr.mxu0 0.0
    %177 = vmatpush2.msra.mxu0 0.0
    %178 = vmatprep.subr.mxu0 0.0
    %179 = vmatpush2.msra.mxu0 0.0
    %180 = vmatprep.subr.mxu0 0.0
    %181 = vmatpush2.msra.mxu0 0.0
    %182 = vmatprep.subr.mxu0 0.0
    %183 = vmatpush2.msra.mxu0 0.0
    %184 = vmatprep.subr.mxu0 0.0
    %185 = vmatpush2.msra.mxu0 0.0
    %186 = vmatprep.subr.mxu0 0.0
    %187 = vmatpush2.msra.mxu0 0.0
    %188 = vmatprep.subr.mxu0 0.0
    %189 = vmatpush2.msra.mxu0 0.0
    %190 = vmatprep.subr.mxu0 0.0
    %191 = vmatpush2.msra.mxu0 0.0
    %192 = vmatprep.subr.mxu0 0.0
    %193 = vmatpush2.msra.mxu0 0.0
    %194 = vmatprep.subr.mxu0 0.0
    %195 = vmatpush2.msra.mxu0 0.0
    %196 = vmatprep.subr.mxu0 0.0
    %197 = vmatpush2.msra.mxu0 0.0
    %198 = vmatprep.subr.mxu0 0.0
    %199 = vmatpush2.msra.mxu0 0.0
    %200 = vmatprep.mubr.f32.mxu0 0.0
    %201 = vmatmul.mubr.f32.gmra.mxu0 %v85
    %v202 = vpop.f32.mrf.mxu0
    %v203 = vadd.f32 %v81, %v202
    %v204 = vpop.f32.mrf.mxu0
    %205 = vmatprep.mubr.f32.mxu0 0.0
    %206 = vmatmul.mubr.f32.gmra.mxu0 %v88
    %v207 = vpop.f32.mrf.mxu0
    %v208 = vadd.f32 %v81, %v207
    %v209 = vpop.f32.mrf.mxu0
    %210 = vmatprep.mubr.f32.mxu0 0.0
    %211 = vmatmul.mubr.f32.gmra.mxu0 %v91
    %v212 = vpop.f32.mrf.mxu0
    %v213 = vadd.f32 %v81, %v212
    %v214 = vpop.f32.mrf.mxu0
    %215 = vmatprep.mubr.f32.mxu0 0.0
    %216 = vmatmul.mubr.f32.gmra.mxu0 %v94
    %v217 = vpop.f32.mrf.mxu0
    %v218 = vadd.f32 %v81, %v217
    %v219 = vpop.f32.mrf.mxu0
    %220 = vmatprep.mubr.f32.mxu0 0.0
    %221 = vmatmul.mubr.f32.gmra.mxu0 %v97
    %v222 = vpop.f32.mrf.mxu0
    %v223 = vadd.f32 %v81, %v222
    %v224 = vpop.f32.mrf.mxu0
    %225 = vmatprep.mubr.f32.mxu0 0.0
    %226 = vmatmul.mubr.f32.gmra.mxu0 %v100
    %v227 = vpop.f32.mrf.mxu0
    %v228 = vadd.f32 %v81, %v227
    %v229 = vpop.f32.mrf.mxu0
    %230 = vmatprep.mubr.f32.mxu0 0.0
    %231 = vmatmul.mubr.f32.gmra.mxu0 %v103
    %v232 = vpop.f32.mrf.mxu0
    %v233 = vadd.f32 %v81, %v232
    %v234 = vpop.f32.mrf.mxu0
    %235 = vmatprep.mubr.f32.mxu0 0.0
    %236 = vmatmul.mubr.f32.gmra.mxu0 %v106
    %v237 = vpop.f32.mrf.mxu0
    %v238 = vadd.f32 %v81, %v237
    %v239 = vpop.f32.mrf.mxu0
    %240 = vmatprep.mubr.f32.mxu0 0.0
    %241 = vmatmul.mubr.f32.gmra.mxu0 %v109
    %v242 = vpop.f32.mrf.mxu0
    %v243 = vadd.f32 %v81, %v242
    %v244 = vpop.f32.mrf.mxu0
    %245 = vmatprep.mubr.f32.mxu0 0.0
    %246 = vmatmul.mubr.f32.gmra.mxu0 %v112
    %v247 = vpop.f32.mrf.mxu0
    %v248 = vadd.f32 %v81, %v247
    %v249 = vpop.f32.mrf.mxu0
    %250 = vmatprep.mubr.f32.mxu0 0.0
    %251 = vmatmul.mubr.f32.gmra.mxu0 %v115
    %v252 = vpop.f32.mrf.mxu0
    %v253 = vadd.f32 %v81, %v252
    %v254 = vpop.f32.mrf.mxu0
    %255 = vmatprep.mubr.f32.mxu0 0.0
    %256 = vmatmul.mubr.f32.gmra.mxu0 %v118
    %v257 = vpop.f32.mrf.mxu0
    %v258 = vadd.f32 %v81, %v257
    %v259 = vpop.f32.mrf.mxu0
    %260 = vmatprep.mubr.f32.mxu0 0.0
    %261 = vmatmul.mubr.f32.gmra.mxu0 %v121
    %v262 = vpop.f32.mrf.mxu0
    %v263 = vadd.f32 %v81, %v262
    %v264 = vpop.f32.mrf.mxu0
    %265 = vmatprep.mubr.f32.mxu0 0.0
    %266 = vmatmul.mubr.f32.gmra.mxu0 %v124
    %v267 = vpop.f32.mrf.mxu0
    %v268 = vadd.f32 %v81, %v267
    %v269 = vpop.f32.mrf.mxu0
    %270 = vmatprep.mubr.f32.mxu0 0.0
    %271 = vmatmul.mubr.f32.gmra.mxu0 %v127
    %v272 = vpop.f32.mrf.mxu0
    %v273 = vadd.f32 %v81, %v272
    %v274 = vpop.f32.mrf.mxu0
    %275 = vmatprep.mubr.f32.mxu0 0.0
    %276 = vmatmul.mubr.f32.gmra.mxu0 %v130
    %v277 = vpop.f32.mrf.mxu0
    %v278 = vadd.f32 %v81, %v277
    %v279 = vpop.f32.mrf.mxu0
    %280 = vdwg.mxu0
    %v281 = vtanh.pop %v203
    %v282 = vtanh.pop %v208
    %v283 = vtanh.pop %v213
    %v284 = vtanh.pop %v218
    %v285 = vtanh.pop %v223
    %v286 = vtanh.pop %v228
    %v287 = vtanh.pop %v233
    %v288 = vtanh.pop %v238
    %v289 = vtanh.pop %v243
    %v290 = vtanh.pop %v248
    %v291 = vtanh.pop %v253
    %v292 = vtanh.pop %v258
    %v293 = vtanh.pop %v263
    %v294 = vtanh.pop %v268
    %v295 = vtanh.pop %v273
    %v296 = vtanh.pop %v278
    %v297 = vld [vmem:[#allocation2] sm:$0xff]
    %v298 = vld [vmem:[#allocation2 + $0x8] sm:$0xff]
    %v299 = vld [vmem:[#allocation2 + $0x10] sm:$0xff]
    %v300 = vld [vmem:[#allocation2 + $0x18] sm:$0xff]
    %v301 = vld [vmem:[#allocation2 + $0x20] sm:$0xff]
    %v302 = vld [vmem:[#allocation2 + $0x28] sm:$0xff]
    %v303 = vld [vmem:[#allocation2 + $0x30] sm:$0xff]
    %v304 = vld [vmem:[#allocation2 + $0x38] sm:$0xff]
    %v305 = vld [vmem:[#allocation2 + $0x40] sm:$0xff]
    %v306 = vld [vmem:[#allocation2 + $0x48] sm:$0xff]
    %v307 = vld [vmem:[#allocation2 + $0x50] sm:$0xff]
    %v308 = vld [vmem:[#allocation2 + $0x58] sm:$0xff]
    %v309 = vld [vmem:[#allocation2 + $0x60] sm:$0xff]
    %v310 = vld [vmem:[#allocation2 + $0x68] sm:$0xff]
    %v311 = vld [vmem:[#allocation2 + $0x70] sm:$0xff]
    %v312 = vld [vmem:[#allocation2 + $0x78] sm:$0xff]
    %v313 = vld [vmem:[#allocation2 + $0x80] sm:$0xff]
    %v314 = vld [vmem:[#allocation2 + $0x88] sm:$0xff]
    %v315 = vld [vmem:[#allocation2 + $0x90] sm:$0xff]
    %v316 = vld [vmem:[#allocation2 + $0x98] sm:$0xff]
    %v317 = vld [vmem:[#allocation2 + $0xa0] sm:$0xff]
    %v318 = vld [vmem:[#allocation2 + $0xa8] sm:$0xff]
    %v319 = vld [vmem:[#allocation2 + $0xb0] sm:$0xff]
    %v320 = vld [vmem:[#allocation2 + $0xb8] sm:$0xff]
    %v321 = vld [vmem:[#allocation2 + $0xc0] sm:$0xff]
    %v322 = vld [vmem:[#allocation2 + $0xc8] sm:$0xff]
    %v323 = vld [vmem:[#allocation2 + $0xd0] sm:$0xff]
    %v324 = vld [vmem:[#allocation2 + $0xd8] sm:$0xff]
    %v325 = vld [vmem:[#allocation2 + $0xe0] sm:$0xff]
    %v326 = vld [vmem:[#allocation2 + $0xe8] sm:$0xff]
    %v327 = vld [vmem:[#allocation2 + $0xf0] sm:$0xff]
    %v328 = vld [vmem:[#allocation2 + $0xf8] sm:$0xff]
    %v329 = vld [vmem:[#allocation2 + $0x100] sm:$0xff]
    %v330 = vld [vmem:[#allocation2 + $0x108] sm:$0xff]
    %v331 = vld [vmem:[#allocation2 + $0x110] sm:$0xff]
    %v332 = vld [vmem:[#allocation2 + $0x118] sm:$0xff]
    %v333 = vld [vmem:[#allocation2 + $0x120] sm:$0xff]
    %v334 = vld [vmem:[#allocation2 + $0x128] sm:$0xff]
    %v335 = vld [vmem:[#allocation2 + $0x130] sm:$0xff]
    %v336 = vld [vmem:[#allocation2 + $0x138] sm:$0xff]
    %v337 = vld [vmem:[#allocation2 + $0x140] sm:$0xff]
    %v338 = vld [vmem:[#allocation2 + $0x148] sm:$0xff]
    %v339 = vld [vmem:[#allocation2 + $0x150] sm:$0xff]
    %v340 = vld [vmem:[#allocation2 + $0x158] sm:$0xff]
    %v341 = vld [vmem:[#allocation2 + $0x160] sm:$0xff]
    %v342 = vld [vmem:[#allocation2 + $0x168] sm:$0xff]
    %v343 = vld [vmem:[#allocation2 + $0x170] sm:$0xff]
    %v344 = vld [vmem:[#allocation2 + $0x178] sm:$0xff]
    %v345 = vld [vmem:[#allocation2 + $0x180] sm:$0xff]
    %v346 = vld [vmem:[#allocation2 + $0x188] sm:$0xff]
    %v347 = vld [vmem:[#allocation2 + $0x190] sm:$0xff]
    %v348 = vld [vmem:[#allocation2 + $0x198] sm:$0xff]
    %v349 = vld [vmem:[#allocation2 + $0x1a0] sm:$0xff]
    %v350 = vld [vmem:[#allocation2 + $0x1a8] sm:$0xff]
    %v351 = vld [vmem:[#allocation2 + $0x1b0] sm:$0xff]
    %v352 = vld [vmem:[#allocation2 + $0x1b8] sm:$0xff]
    %v353 = vld [vmem:[#allocation2 + $0x1c0] sm:$0xff]
    %v354 = vld [vmem:[#allocation2 + $0x1c8] sm:$0xff]
    %v355 = vld [vmem:[#allocation2 + $0x1d0] sm:$0xff]
    %v356 = vld [vmem:[#allocation2 + $0x1d8] sm:$0xff]
    %v357 = vld [vmem:[#allocation2 + $0x1e0] sm:$0xff]
    %v358 = vld [vmem:[#allocation2 + $0x1e8] sm:$0xff]
    %v359 = vld [vmem:[#allocation2 + $0x1f0] sm:$0xff]
    %v360 = vld [vmem:[#allocation2 + $0x1f8] sm:$0xff]
    %v361 = vld [vmem:[%s5] sm:$0xf]
    %v363 = vlaneseq
    %v364 = vshrl.u32 %v363, 7
    %v365 = vsub.s32 0, %v364
    %v366 = vrot.slane %v361, %v365
    %v367 = vlaneseq
    %v368 = vshrl.u32 %v367, 7
    %v369 = vsub.s32 1, %v368
    %v370 = vrot.slane %v361, %v369
    %v371 = vlaneseq
    %v372 = vshrl.u32 %v371, 7
    %v373 = vsub.s32 2, %v372
    %v374 = vrot.slane %v361, %v373
    %v375 = vlaneseq
    %v376 = vshrl.u32 %v375, 7
    %v377 = vsub.s32 3, %v376
    %v378 = vrot.slane %v361, %v377
    %383 = vmatprep.subr.mxu0 %v358
    %384 = vmatpush1.msra.mxu0 %v357
    %385 = vmatprep.subr.mxu0 %v354
    %386 = vmatpush1.msra.mxu0 %v353
    %387 = vmatprep.subr.mxu0 %v350
    %388 = vmatpush1.msra.mxu0 %v349
    %389 = vmatprep.subr.mxu0 %v346
    %390 = vmatpush1.msra.mxu0 %v345
    %391 = vmatprep.subr.mxu0 %v342
    %392 = vmatpush1.msra.mxu0 %v341
    %393 = vmatprep.subr.mxu0 %v338
    %394 = vmatpush1.msra.mxu0 %v337
    %395 = vmatprep.subr.mxu0 %v334
    %396 = vmatpush1.msra.mxu0 %v333
    %397 = vmatprep.subr.mxu0 %v330
    %398 = vmatpush1.msra.mxu0 %v329
    %399 = vmatprep.subr.mxu0 %v326
    %400 = vmatpush1.msra.mxu0 %v325
    %401 = vmatprep.subr.mxu0 %v322
    %402 = vmatpush1.msra.mxu0 %v321
    %403 = vmatprep.subr.mxu0 %v318
    %404 = vmatpush1.msra.mxu0 %v317
    %405 = vmatprep.subr.mxu0 %v314
    %406 = vmatpush1.msra.mxu0 %v313
    %407 = vmatprep.subr.mxu0 %v310
    %408 = vmatpush1.msra.mxu0 %v309
    %409 = vmatprep.subr.mxu0 %v306
    %410 = vmatpush1.msra.mxu0 %v305
    %411 = vmatprep.subr.mxu0 %v302
    %412 = vmatpush1.msra.mxu0 %v301
    %413 = vmatprep.subr.mxu0 %v298
    %414 = vmatpush1.msra.mxu0 %v297
    %415 = vmatprep.subr.mxu0 0.0
    %416 = vmatpush2.msra.mxu0 0.0
    %417 = vmatprep.subr.mxu0 0.0
    %418 = vmatpush2.msra.mxu0 0.0
    %419 = vmatprep.subr.mxu0 0.0
    %420 = vmatpush2.msra.mxu0 0.0
    %421 = vmatprep.subr.mxu0 0.0
    %422 = vmatpush2.msra.mxu0 0.0
    %423 = vmatprep.subr.mxu0 0.0
    %424 = vmatpush2.msra.mxu0 0.0
    %425 = vmatprep.subr.mxu0 0.0
    %426 = vmatpush2.msra.mxu0 0.0
    %427 = vmatprep.subr.mxu0 0.0
    %428 = vmatpush2.msra.mxu0 0.0
    %429 = vmatprep.subr.mxu0 0.0
    %430 = vmatpush2.msra.mxu0 0.0
    %431 = vmatprep.subr.mxu0 0.0
    %432 = vmatpush2.msra.mxu0 0.0
    %433 = vmatprep.subr.mxu0 0.0
    %434 = vmatpush2.msra.mxu0 0.0
    %435 = vmatprep.subr.mxu0 0.0
    %436 = vmatpush2.msra.mxu0 0.0
    %437 = vmatprep.subr.mxu0 0.0
    %438 = vmatpush2.msra.mxu0 0.0
    %439 = vmatprep.subr.mxu0 0.0
    %440 = vmatpush2.msra.mxu0 0.0
    %441 = vmatprep.subr.mxu0 0.0
    %442 = vmatpush2.msra.mxu0 0.0
    %443 = vmatprep.subr.mxu0 0.0
    %444 = vmatpush2.msra.mxu0 0.0
    %445 = vmatprep.subr.mxu0 0.0
    %446 = vmatpush2.msra.mxu0 0.0
    %447 = vmatprep.mubr.f32.mxu0 0.0
    %448 = vmatmul.mubr.f32.gmra.mxu0 %v281
    %v449 = vpop.f32.mrf.mxu0
    %v450 = vadd.f32 %v366, %v449
    %v451 = vpop.f32.mrf.mxu0
    %v452 = vadd.f32 %v370, %v451
    %453 = vmatprep.mubr.f32.mxu0 0.0
    %454 = vmatmul.mubr.f32.gmra.mxu0 %v282
    %v455 = vpop.f32.mrf.mxu0
    %v456 = vadd.f32 %v366, %v455
    %v457 = vpop.f32.mrf.mxu0
    %v458 = vadd.f32 %v370, %v457
    %459 = vmatprep.mubr.f32.mxu0 0.0
    %460 = vmatmul.mubr.f32.gmra.mxu0 %v283
    %v461 = vpop.f32.mrf.mxu0
    %v462 = vadd.f32 %v366, %v461
    %v463 = vpop.f32.mrf.mxu0
    %v464 = vadd.f32 %v370, %v463
    %465 = vmatprep.mubr.f32.mxu0 0.0
    %466 = vmatmul.mubr.f32.gmra.mxu0 %v284
    %v467 = vpop.f32.mrf.mxu0
    %v468 = vadd.f32 %v366, %v467
    %v469 = vpop.f32.mrf.mxu0
    %v470 = vadd.f32 %v370, %v469
    %471 = vmatprep.mubr.f32.mxu0 0.0
    %472 = vmatmul.mubr.f32.gmra.mxu0 %v285
    %v473 = vpop.f32.mrf.mxu0
    %v474 = vadd.f32 %v366, %v473
    %v475 = vpop.f32.mrf.mxu0
    %v476 = vadd.f32 %v370, %v475
    %477 = vmatprep.mubr.f32.mxu0 0.0
    %478 = vmatmul.mubr.f32.gmra.mxu0 %v286
    %v479 = vpop.f32.mrf.mxu0
    %v480 = vadd.f32 %v366, %v479
    %v481 = vpop.f32.mrf.mxu0
    %v482 = vadd.f32 %v370, %v481
    %483 = vmatprep.mubr.f32.mxu0 0.0
    %484 = vmatmul.mubr.f32.gmra.mxu0 %v287
    %v485 = vpop.f32.mrf.mxu0
    %v486 = vadd.f32 %v366, %v485
    %v487 = vpop.f32.mrf.mxu0
    %v488 = vadd.f32 %v370, %v487
    %489 = vmatprep.mubr.f32.mxu0 0.0
    %490 = vmatmul.mubr.f32.gmra.mxu0 %v288
    %v491 = vpop.f32.mrf.mxu0
    %v492 = vadd.f32 %v366, %v491
    %v493 = vpop.f32.mrf.mxu0
    %v494 = vadd.f32 %v370, %v493
    %495 = vmatprep.mubr.f32.mxu0 0.0
    %496 = vmatmul.mubr.f32.gmra.mxu0 %v289
    %v497 = vpop.f32.mrf.mxu0
    %v498 = vadd.f32 %v366, %v497
    %v499 = vpop.f32.mrf.mxu0
    %v500 = vadd.f32 %v370, %v499
    %501 = vmatprep.mubr.f32.mxu0 0.0
    %502 = vmatmul.mubr.f32.gmra.mxu0 %v290
    %v503 = vpop.f32.mrf.mxu0
    %v504 = vadd.f32 %v366, %v503
    %v505 = vpop.f32.mrf.mxu0
    %v506 = vadd.f32 %v370, %v505
    %507 = vmatprep.mubr.f32.mxu0 0.0
    %508 = vmatmul.mubr.f32.gmra.mxu0 %v291
    %v509 = vpop.f32.mrf.mxu0
    %v510 = vadd.f32 %v366, %v509
    %v511 = vpop.f32.mrf.mxu0
    %v512 = vadd.f32 %v370, %v511
    %513 = vmatprep.mubr.f32.mxu0 0.0
    %514 = vmatmul.mubr.f32.gmra.mxu0 %v292
    %v515 = vpop.f32.mrf.mxu0
    %v516 = vadd.f32 %v366, %v515
    %v517 = vpop.f32.mrf.mxu0
    %v518 = vadd.f32 %v370, %v517
    %519 = vmatprep.mubr.f32.mxu0 0.0
    %520 = vmatmul.mubr.f32.gmra.mxu0 %v293
    %v521 = vpop.f32.mrf.mxu0
    %v522 = vadd.f32 %v366, %v521
    %v523 = vpop.f32.mrf.mxu0
    %v524 = vadd.f32 %v370, %v523
    %525 = vmatprep.mubr.f32.mxu0 0.0
    %526 = vmatmul.mubr.f32.gmra.mxu0 %v294
    %v527 = vpop.f32.mrf.mxu0
    %v528 = vadd.f32 %v366, %v527
    %v529 = vpop.f32.mrf.mxu0
    %v530 = vadd.f32 %v370, %v529
    %531 = vmatprep.mubr.f32.mxu0 0.0
    %532 = vmatmul.mubr.f32.gmra.mxu0 %v295
    %v533 = vpop.f32.mrf.mxu0
    %v534 = vadd.f32 %v366, %v533
    %v535 = vpop.f32.mrf.mxu0
    %v536 = vadd.f32 %v370, %v535
    %537 = vmatprep.mubr.f32.mxu0 0.0
    %538 = vmatmul.mubr.f32.gmra.mxu0 %v296
    %v539 = vpop.f32.mrf.mxu0
    %v540 = vadd.f32 %v366, %v539
    %v541 = vpop.f32.mrf.mxu0
    %v542 = vadd.f32 %v370, %v541
    %543 = vdwg.mxu0
    %544 = vmatprep.subr.mxu0 %v360
    %545 = vmatpush1.msra.mxu0 %v359
    %546 = vmatprep.subr.mxu0 %v356
    %547 = vmatpush1.msra.mxu0 %v355
    %548 = vmatprep.subr.mxu0 %v352
    %549 = vmatpush1.msra.mxu0 %v351
    %550 = vmatprep.subr.mxu0 %v348
    %551 = vmatpush1.msra.mxu0 %v347
    %552 = vmatprep.subr.mxu0 %v344
    %553 = vmatpush1.msra.mxu0 %v343
    %554 = vmatprep.subr.mxu0 %v340
    %555 = vmatpush1.msra.mxu0 %v339
    %556 = vmatprep.subr.mxu0 %v336
    %557 = vmatpush1.msra.mxu0 %v335
    %558 = vmatprep.subr.mxu0 %v332
    %559 = vmatpush1.msra.mxu0 %v331
    %560 = vmatprep.subr.mxu0 %v328
    %561 = vmatpush1.msra.mxu0 %v327
    %562 = vmatprep.subr.mxu0 %v324
    %563 = vmatpush1.msra.mxu0 %v323
    %564 = vmatprep.subr.mxu0 %v320
    %565 = vmatpush1.msra.mxu0 %v319
    %566 = vmatprep.subr.mxu0 %v316
    %567 = vmatpush1.msra.mxu0 %v315
    %568 = vmatprep.subr.mxu0 %v312
    %569 = vmatpush1.msra.mxu0 %v311
    %570 = vmatprep.subr.mxu0 %v308
    %571 = vmatpush1.msra.mxu0 %v307
    %572 = vmatprep.subr.mxu0 %v304
    %573 = vmatpush1.msra.mxu0 %v303
    %574 = vmatprep.subr.mxu0 %v300
    %575 = vmatpush1.msra.mxu0 %v299
    %576 = vmatprep.subr.mxu0 0.0
    %577 = vmatpush2.msra.mxu0 0.0
    %578 = vmatprep.subr.mxu0 0.0
    %579 = vmatpush2.msra.mxu0 0.0
    %580 = vmatprep.subr.mxu0 0.0
    %581 = vmatpush2.msra.mxu0 0.0
    %582 = vmatprep.subr.mxu0 0.0
    %583 = vmatpush2.msra.mxu0 0.0
    %584 = vmatprep.subr.mxu0 0.0
    %585 = vmatpush2.msra.mxu0 0.0
    %586 = vmatprep.subr.mxu0 0.0
    %587 = vmatpush2.msra.mxu0 0.0
    %588 = vmatprep.subr.mxu0 0.0
    %589 = vmatpush2.msra.mxu0 0.0
    %590 = vmatprep.subr.mxu0 0.0
    %591 = vmatpush2.msra.mxu0 0.0
    %592 = vmatprep.subr.mxu0 0.0
    %593 = vmatpush2.msra.mxu0 0.0
    %594 = vmatprep.subr.mxu0 0.0
    %595 = vmatpush2.msra.mxu0 0.0
    %596 = vmatprep.subr.mxu0 0.0
    %597 = vmatpush2.msra.mxu0 0.0
    %598 = vmatprep.subr.mxu0 0.0
    %599 = vmatpush2.msra.mxu0 0.0
    %600 = vmatprep.subr.mxu0 0.0
    %601 = vmatpush2.msra.mxu0 0.0
    %602 = vmatprep.subr.mxu0 0.0
    %603 = vmatpush2.msra.mxu0 0.0
    %604 = vmatprep.subr.mxu0 0.0
    %605 = vmatpush2.msra.mxu0 0.0
    %606 = vmatprep.subr.mxu0 0.0
    %607 = vmatpush2.msra.mxu0 0.0
    %608 = vmatprep.mubr.f32.mxu0 0.0
    %609 = vmatmul.mubr.f32.gmra.mxu0 %v281
    %v610 = vpop.f32.mrf.mxu0
    %v611 = vadd.f32 %v374, %v610
    %v612 = vpop.f32.mrf.mxu0
    %v613 = vadd.f32 %v378, %v612
    %614 = vmatprep.mubr.f32.mxu0 0.0
    %615 = vmatmul.mubr.f32.gmra.mxu0 %v282
    %v616 = vpop.f32.mrf.mxu0
    %v617 = vadd.f32 %v374, %v616
    %v618 = vpop.f32.mrf.mxu0
    %v619 = vadd.f32 %v378, %v618
    %620 = vmatprep.mubr.f32.mxu0 0.0
    %621 = vmatmul.mubr.f32.gmra.mxu0 %v283
    %v622 = vpop.f32.mrf.mxu0
    %v623 = vadd.f32 %v374, %v622
    %v624 = vpop.f32.mrf.mxu0
    %v625 = vadd.f32 %v378, %v624
    %626 = vmatprep.mubr.f32.mxu0 0.0
    %627 = vmatmul.mubr.f32.gmra.mxu0 %v284
    %v628 = vpop.f32.mrf.mxu0
    %v629 = vadd.f32 %v374, %v628
    %v630 = vpop.f32.mrf.mxu0
    %v631 = vadd.f32 %v378, %v630
    %632 = vmatprep.mubr.f32.mxu0 0.0
    %633 = vmatmul.mubr.f32.gmra.mxu0 %v285
    %v634 = vpop.f32.mrf.mxu0
    %v635 = vadd.f32 %v374, %v634
    %v636 = vpop.f32.mrf.mxu0
    %v637 = vadd.f32 %v378, %v636
    %638 = vmatprep.mubr.f32.mxu0 0.0
    %639 = vmatmul.mubr.f32.gmra.mxu0 %v286
    %v640 = vpop.f32.mrf.mxu0
    %v641 = vadd.f32 %v374, %v640
    %v642 = vpop.f32.mrf.mxu0
    %v643 = vadd.f32 %v378, %v642
    %644 = vmatprep.mubr.f32.mxu0 0.0
    %645 = vmatmul.mubr.f32.gmra.mxu0 %v287
    %v646 = vpop.f32.mrf.mxu0
    %v647 = vadd.f32 %v374, %v646
    %v648 = vpop.f32.mrf.mxu0
    %v649 = vadd.f32 %v378, %v648
    %650 = vmatprep.mubr.f32.mxu0 0.0
    %651 = vmatmul.mubr.f32.gmra.mxu0 %v288
    %v652 = vpop.f32.mrf.mxu0
    %v653 = vadd.f32 %v374, %v652
    %v654 = vpop.f32.mrf.mxu0
    %v655 = vadd.f32 %v378, %v654
    %656 = vmatprep.mubr.f32.mxu0 0.0
    %657 = vmatmul.mubr.f32.gmra.mxu0 %v289
    %v658 = vpop.f32.mrf.mxu0
    %v659 = vadd.f32 %v374, %v658
    %v660 = vpop.f32.mrf.mxu0
    %v661 = vadd.f32 %v378, %v660
    %662 = vmatprep.mubr.f32.mxu0 0.0
    %663 = vmatmul.mubr.f32.gmra.mxu0 %v290
    %v664 = vpop.f32.mrf.mxu0
    %v665 = vadd.f32 %v374, %v664
    %v666 = vpop.f32.mrf.mxu0
    %v667 = vadd.f32 %v378, %v666
    %668 = vmatprep.mubr.f32.mxu0 0.0
    %669 = vmatmul.mubr.f32.gmra.mxu0 %v291
    %v670 = vpop.f32.mrf.mxu0
    %v671 = vadd.f32 %v374, %v670
    %v672 = vpop.f32.mrf.mxu0
    %v673 = vadd.f32 %v378, %v672
    %674 = vmatprep.mubr.f32.mxu0 0.0
    %675 = vmatmul.mubr.f32.gmra.mxu0 %v292
    %v676 = vpop.f32.mrf.mxu0
    %v677 = vadd.f32 %v374, %v676
    %v678 = vpop.f32.mrf.mxu0
    %v679 = vadd.f32 %v378, %v678
    %680 = vmatprep.mubr.f32.mxu0 0.0
    %681 = vmatmul.mubr.f32.gmra.mxu0 %v293
    %v682 = vpop.f32.mrf.mxu0
    %v683 = vadd.f32 %v374, %v682
    %v684 = vpop.f32.mrf.mxu0
    %v685 = vadd.f32 %v378, %v684
    %686 = vmatprep.mubr.f32.mxu0 0.0
    %687 = vmatmul.mubr.f32.gmra.mxu0 %v294
    %v688 = vpop.f32.mrf.mxu0
    %v689 = vadd.f32 %v374, %v688
    %v690 = vpop.f32.mrf.mxu0
    %v691 = vadd.f32 %v378, %v690
    %692 = vmatprep.mubr.f32.mxu0 0.0
    %693 = vmatmul.mubr.f32.gmra.mxu0 %v295
    %v694 = vpop.f32.mrf.mxu0
    %v695 = vadd.f32 %v374, %v694
    %v696 = vpop.f32.mrf.mxu0
    %v697 = vadd.f32 %v378, %v696
    %698 = vmatprep.mubr.f32.mxu0 0.0
    %699 = vmatmul.mubr.f32.gmra.mxu0 %v296
    %v700 = vpop.f32.mrf.mxu0
    %v701 = vadd.f32 %v374, %v700
    %v702 = vpop.f32.mrf.mxu0
    %v703 = vadd.f32 %v378, %v702
    %704 = vdwg.mxu0
    %v705 = vld [vmem:[#allocation5] sm:$0xff]
    %v706 = vld [vmem:[#allocation5 + $0x8] sm:$0xff]
    %v707 = vld [vmem:[#allocation5 + $0x10] sm:$0xff]
    %v708 = vld [vmem:[#allocation5 + $0x18] sm:$0xff]
    %v709 = vld [vmem:[#allocation5 + $0x20] sm:$0xff]
    %v710 = vld [vmem:[#allocation5 + $0x28] sm:$0xff]
    %v711 = vld [vmem:[#allocation5 + $0x30] sm:$0xff]
    %v712 = vld [vmem:[#allocation5 + $0x38] sm:$0xff]
    %v713 = vld [vmem:[#allocation5 + $0x40] sm:$0xff]
    %v714 = vld [vmem:[#allocation5 + $0x48] sm:$0xff]
    %v715 = vld [vmem:[#allocation5 + $0x50] sm:$0xff]
    %v716 = vld [vmem:[#allocation5 + $0x58] sm:$0xff]
    %v717 = vld [vmem:[#allocation5 + $0x60] sm:$0xff]
    %v718 = vld [vmem:[#allocation5 + $0x68] sm:$0xff]
    %v719 = vld [vmem:[#allocation5 + $0x70] sm:$0xff]
    %v720 = vld [vmem:[#allocation5 + $0x78] sm:$0xff]
    %v721 = vld [vmem:[#allocation5 + $0x80] sm:$0xff]
    %v722 = vld [vmem:[#allocation5 + $0x88] sm:$0xff]
    %v723 = vld [vmem:[#allocation5 + $0x90] sm:$0xff]
    %v724 = vld [vmem:[#allocation5 + $0x98] sm:$0xff]
    %v725 = vld [vmem:[#allocation5 + $0xa0] sm:$0xff]
    %v726 = vld [vmem:[#allocation5 + $0xa8] sm:$0xff]
    %v727 = vld [vmem:[#allocation5 + $0xb0] sm:$0xff]
    %v728 = vld [vmem:[#allocation5 + $0xb8] sm:$0xff]
    %v729 = vld [vmem:[#allocation5 + $0xc0] sm:$0xff]
    %v730 = vld [vmem:[#allocation5 + $0xc8] sm:$0xff]
    %v731 = vld [vmem:[#allocation5 + $0xd0] sm:$0xff]
    %v732 = vld [vmem:[#allocation5 + $0xd8] sm:$0xff]
    %v733 = vld [vmem:[#allocation5 + $0xe0] sm:$0xff]
    %v734 = vld [vmem:[#allocation5 + $0xe8] sm:$0xff]
    %v735 = vld [vmem:[#allocation5 + $0xf0] sm:$0xff]
    %v736 = vld [vmem:[#allocation5 + $0xf8] sm:$0xff]
    %v737 = vld [vmem:[#allocation5 + $0x100] sm:$0xff]
    %v738 = vld [vmem:[#allocation5 + $0x108] sm:$0xff]
    %v739 = vld [vmem:[#allocation5 + $0x110] sm:$0xff]
    %v740 = vld [vmem:[#allocation5 + $0x118] sm:$0xff]
    %v741 = vld [vmem:[#allocation5 + $0x120] sm:$0xff]
    %v742 = vld [vmem:[#allocation5 + $0x128] sm:$0xff]
    %v743 = vld [vmem:[#allocation5 + $0x130] sm:$0xff]
    %v744 = vld [vmem:[#allocation5 + $0x138] sm:$0xff]
    %v745 = vld [vmem:[#allocation5 + $0x140] sm:$0xff]
    %v746 = vld [vmem:[#allocation5 + $0x148] sm:$0xff]
    %v747 = vld [vmem:[#allocation5 + $0x150] sm:$0xff]
    %v748 = vld [vmem:[#allocation5 + $0x158] sm:$0xff]
    %v749 = vld [vmem:[#allocation5 + $0x160] sm:$0xff]
    %v750 = vld [vmem:[#allocation5 + $0x168] sm:$0xff]
    %v751 = vld [vmem:[#allocation5 + $0x170] sm:$0xff]
    %v752 = vld [vmem:[#allocation5 + $0x178] sm:$0xff]
    %v753 = vld [vmem:[#allocation5 + $0x180] sm:$0xff]
    %v754 = vld [vmem:[#allocation5 + $0x188] sm:$0xff]
    %v755 = vld [vmem:[#allocation5 + $0x190] sm:$0xff]
    %v756 = vld [vmem:[#allocation5 + $0x198] sm:$0xff]
    %v757 = vld [vmem:[#allocation5 + $0x1a0] sm:$0xff]
    %v758 = vld [vmem:[#allocation5 + $0x1a8] sm:$0xff]
    %v759 = vld [vmem:[#allocation5 + $0x1b0] sm:$0xff]
    %v760 = vld [vmem:[#allocation5 + $0x1b8] sm:$0xff]
    %v761 = vld [vmem:[#allocation5 + $0x1c0] sm:$0xff]
    %v762 = vld [vmem:[#allocation5 + $0x1c8] sm:$0xff]
    %v763 = vld [vmem:[#allocation5 + $0x1d0] sm:$0xff]
    %v764 = vld [vmem:[#allocation5 + $0x1d8] sm:$0xff]
    %v765 = vld [vmem:[#allocation5 + $0x1e0] sm:$0xff]
    %v766 = vld [vmem:[#allocation5 + $0x1e8] sm:$0xff]
    %v767 = vld [vmem:[#allocation5 + $0x1f0] sm:$0xff]
    %v768 = vld [vmem:[#allocation5 + $0x1f8] sm:$0xff]
    %769 = vmatprep.subr.mxu0 %v766
    %770 = vmatpush1.msra.mxu0 %v765
    %771 = vmatprep.subr.mxu0 %v762
    %772 = vmatpush1.msra.mxu0 %v761
    %773 = vmatprep.subr.mxu0 %v758
    %774 = vmatpush1.msra.mxu0 %v757
    %775 = vmatprep.subr.mxu0 %v754
    %776 = vmatpush1.msra.mxu0 %v753
    %777 = vmatprep.subr.mxu0 %v750
    %778 = vmatpush1.msra.mxu0 %v749
    %779 = vmatprep.subr.mxu0 %v746
    %780 = vmatpush1.msra.mxu0 %v745
    %781 = vmatprep.subr.mxu0 %v742
    %782 = vmatpush1.msra.mxu0 %v741
    %783 = vmatprep.subr.mxu0 %v738
    %784 = vmatpush1.msra.mxu0 %v737
    %785 = vmatprep.subr.mxu0 %v734
    %786 = vmatpush1.msra.mxu0 %v733
    %787 = vmatprep.subr.mxu0 %v730
    %788 = vmatpush1.msra.mxu0 %v729
    %789 = vmatprep.subr.mxu0 %v726
    %790 = vmatpush1.msra.mxu0 %v725
    %791 = vmatprep.subr.mxu0 %v722
    %792 = vmatpush1.msra.mxu0 %v721
    %793 = vmatprep.subr.mxu0 %v718
    %794 = vmatpush1.msra.mxu0 %v717
    %795 = vmatprep.subr.mxu0 %v714
    %796 = vmatpush1.msra.mxu0 %v713
    %797 = vmatprep.subr.mxu0 %v710
    %798 = vmatpush1.msra.mxu0 %v709
    %799 = vmatprep.subr.mxu0 %v706
    %800 = vmatpush1.msra.mxu0 %v705
    %801 = vmatprep.subr.mxu0 0.0
    %802 = vmatpush2.msra.mxu0 0.0
    %803 = vmatprep.subr.mxu0 0.0
    %804 = vmatpush2.msra.mxu0 0.0
    %805 = vmatprep.subr.mxu0 0.0
    %806 = vmatpush2.msra.mxu0 0.0
    %807 = vmatprep.subr.mxu0 0.0
    %808 = vmatpush2.msra.mxu0 0.0
    %809 = vmatprep.subr.mxu0 0.0
    %810 = vmatpush2.msra.mxu0 0.0
    %811 = vmatprep.subr.mxu0 0.0
    %812 = vmatpush2.msra.mxu0 0.0
    %813 = vmatprep.subr.mxu0 0.0
    %814 = vmatpush2.msra.mxu0 0.0
    %815 = vmatprep.subr.mxu0 0.0
    %816 = vmatpush2.msra.mxu0 0.0
    %817 = vmatprep.subr.mxu0 0.0
    %818 = vmatpush2.msra.mxu0 0.0
    %819 = vmatprep.subr.mxu0 0.0
    %820 = vmatpush2.msra.mxu0 0.0
    %821 = vmatprep.subr.mxu0 0.0
    %822 = vmatpush2.msra.mxu0 0.0
    %823 = vmatprep.subr.mxu0 0.0
    %824 = vmatpush2.msra.mxu0 0.0
    %825 = vmatprep.subr.mxu0 0.0
    %826 = vmatpush2.msra.mxu0 0.0
    %827 = vmatprep.subr.mxu0 0.0
    %828 = vmatpush2.msra.mxu0 0.0
    %829 = vmatprep.subr.mxu0 0.0
    %830 = vmatpush2.msra.mxu0 0.0
    %831 = vmatprep.subr.mxu0 0.0
    %832 = vmatpush2.msra.mxu0 0.0
    %833 = vmatprep.mubr.f32.mxu0 0.0
    %834 = vmatmul.mubr.f32.gmra.mxu0 0.0
    %v835 = vpop.f32.mrf.mxu0
    %v836 = vadd.f32 0.0, %v835
    %v837 = vpop.f32.mrf.mxu0
    %v838 = vadd.f32 0.0, %v837
    %839 = vmatprep.mubr.f32.mxu0 0.0
    %840 = vmatmul.mubr.f32.gmra.mxu0 0.0
    %v841 = vpop.f32.mrf.mxu0
    %v842 = vadd.f32 0.0, %v841
    %v843 = vpop.f32.mrf.mxu0
    %v844 = vadd.f32 0.0, %v843
    %845 = vdwg.mxu0
    %846 = vmatprep.subr.mxu0 %v768
    %847 = vmatpush1.msra.mxu0 %v767
    %848 = vmatprep.subr.mxu0 %v764
    %849 = vmatpush1.msra.mxu0 %v763
    %850 = vmatprep.subr.mxu0 %v760
    %851 = vmatpush1.msra.mxu0 %v759
    %852 = vmatprep.subr.mxu0 %v756
    %853 = vmatpush1.msra.mxu0 %v755
    %854 = vmatprep.subr.mxu0 %v752
    %855 = vmatpush1.msra.mxu0 %v751
    %856 = vmatprep.subr.mxu0 %v748
    %857 = vmatpush1.msra.mxu0 %v747
    %858 = vmatprep.subr.mxu0 %v744
    %859 = vmatpush1.msra.mxu0 %v743
    %860 = vmatprep.subr.mxu0 %v740
    %861 = vmatpush1.msra.mxu0 %v739
    %862 = vmatprep.subr.mxu0 %v736
    %863 = vmatpush1.msra.mxu0 %v735
    %864 = vmatprep.subr.mxu0 %v732
    %865 = vmatpush1.msra.mxu0 %v731
    %866 = vmatprep.subr.mxu0 %v728
    %867 = vmatpush1.msra.mxu0 %v727
    %868 = vmatprep.subr.mxu0 %v724
    %869 = vmatpush1.msra.mxu0 %v723
    %870 = vmatprep.subr.mxu0 %v720
    %871 = vmatpush1.msra.mxu0 %v719
    %872 = vmatprep.subr.mxu0 %v716
    %873 = vmatpush1.msra.mxu0 %v715
    %874 = vmatprep.subr.mxu0 %v712
    %875 = vmatpush1.msra.mxu0 %v711
    %876 = vmatprep.subr.mxu0 %v708
    %877 = vmatpush1.msra.mxu0 %v707
    %878 = vmatprep.subr.mxu0 0.0
    %879 = vmatpush2.msra.mxu0 0.0
    %880 = vmatprep.subr.mxu0 0.0
    %881 = vmatpush2.msra.mxu0 0.0
    %882 = vmatprep.subr.mxu0 0.0
    %883 = vmatpush2.msra.mxu0 0.0
    %884 = vmatprep.subr.mxu0 0.0
    %885 = vmatpush2.msra.mxu0 0.0
    %886 = vmatprep.subr.mxu0 0.0
    %887 = vmatpush2.msra.mxu0 0.0
    %888 = vmatprep.subr.mxu0 0.0
    %889 = vmatpush2.msra.mxu0 0.0
    %890 = vmatprep.subr.mxu0 0.0
    %891 = vmatpush2.msra.mxu0 0.0
    %892 = vmatprep.subr.mxu0 0.0
    %893 = vmatpush2.msra.mxu0 0.0
    %894 = vmatprep.subr.mxu0 0.0
    %895 = vmatpush2.msra.mxu0 0.0
    %896 = vmatprep.subr.mxu0 0.0
    %897 = vmatpush2.msra.mxu0 0.0
    %898 = vmatprep.subr.mxu0 0.0
    %899 = vmatpush2.msra.mxu0 0.0
    %900 = vmatprep.subr.mxu0 0.0
    %901 = vmatpush2.msra.mxu0 0.0
    %902 = vmatprep.subr.mxu0 0.0
    %903 = vmatpush2.msra.mxu0 0.0
    %904 = vmatprep.subr.mxu0 0.0
    %905 = vmatpush2.msra.mxu0 0.0
    %906 = vmatprep.subr.mxu0 0.0
    %907 = vmatpush2.msra.mxu0 0.0
    %908 = vmatprep.subr.mxu0 0.0
    %909 = vmatpush2.msra.mxu0 0.0
    %910 = vmatprep.mubr.f32.mxu0 0.0
    %911 = vmatmul.mubr.f32.gmra.mxu0 0.0
    %v912 = vpop.f32.mrf.mxu0
    %v913 = vadd.f32 0.0, %v912
    %v914 = vpop.f32.mrf.mxu0
    %v915 = vadd.f32 0.0, %v914
    %916 = vmatprep.mubr.f32.mxu0 0.0
    %917 = vmatmul.mubr.f32.gmra.mxu0 0.0
    %v918 = vpop.f32.mrf.mxu0
    %v919 = vadd.f32 0.0, %v918
    %v920 = vpop.f32.mrf.mxu0
    %v921 = vadd.f32 0.0, %v920
    %922 = vdwg.mxu0
    %v923 = vadd.f32 %v450, %v836
    %v924 = vadd.f32 %v452, %v838
    %v925 = vadd.f32 %v611, %v913
    %v926 = vadd.f32 %v613, %v915
    %v927 = vadd.f32 %v456, %v842
    %v928 = vadd.f32 %v458, %v844
    %v929 = vadd.f32 %v617, %v919
    %v930 = vadd.f32 %v619, %v921
    %v931 = vxor.u32 %v923, 2147483648
    %v932 = vxor.u32 %v927, 2147483648
    %v933 = vmul.f32 %v931, 1.442695
    %v934 = vpow.pop %v933
    %v935 = vmul.f32 %v932, 1.442695
    %v936 = vpow.pop %v935
    %v937 = vadd.f32 %v934, 1.0
    %v938 = vadd.f32 %v936, 1.0
    %v939 = vrcp.pop %v937
    %v940 = vmul.f32 1.0, %v939
    %v941 = vrcp.pop %v938
    %v942 = vmul.f32 1.0, %v941
    %v943 = vxor.u32 %v924, 2147483648
    %v944 = vxor.u32 %v928, 2147483648
    %v945 = vmul.f32 %v943, 1.442695
    %v946 = vpow.pop %v945
    %v947 = vmul.f32 %v944, 1.442695
    %v948 = vpow.pop %v947
    %v949 = vadd.f32 %v946, 1.0
    %v950 = vadd.f32 %v948, 1.0
    %v951 = vrcp.pop %v949
    %v952 = vmul.f32 1.0, %v951
    %v953 = vrcp.pop %v950
    %v954 = vmul.f32 1.0, %v953
    %v955 = vtanh.pop %v925
    %v956 = vtanh.pop %v929
    %v957 = vxor.u32 %v926, 2147483648
    %v958 = vxor.u32 %v930, 2147483648
    %v959 = vmul.f32 %v957, 1.442695
    %v960 = vpow.pop %v959
    %v961 = vmul.f32 %v958, 1.442695
    %v962 = vpow.pop %v961
    %v963 = vadd.f32 %v960, 1.0
    %v964 = vadd.f32 %v962, 1.0
    %v965 = vrcp.pop %v963
    %v966 = vmul.f32 1.0, %v965
    %v967 = vrcp.pop %v964
    %v968 = vmul.f32 1.0, %v967
    %v969 = vmul.f32 %v940, 0.0
    %v970 = vmul.f32 %v942, 0.0
    %v971 = vmul.f32 %v952, %v955
    %v972 = vmul.f32 %v954, %v956
    %v973 = vadd.f32 %v969, %v971
    %v974 = vadd.f32 %v970, %v972
    %v975 = vtanh.pop %v973
    %v976 = vtanh.pop %v974
    %v977 = vmul.f32 %v966, %v975
    %v978 = vmul.f32 %v968, %v976
    %979 = vmatprep.subr.mxu0 %v766
    %980 = vmatpush1.msra.mxu0 %v765
    %981 = vmatprep.subr.mxu0 %v762
    %982 = vmatpush1.msra.mxu0 %v761
    %983 = vmatprep.subr.mxu0 %v758
    %984 = vmatpush1.msra.mxu0 %v757
    %985 = vmatprep.subr.mxu0 %v754
    %986 = vmatpush1.msra.mxu0 %v753
    %987 = vmatprep.subr.mxu0 %v750
    %988 = vmatpush1.msra.mxu0 %v749
    %989 = vmatprep.subr.mxu0 %v746
    %990 = vmatpush1.msra.mxu0 %v745
    %991 = vmatprep.subr.mxu0 %v742
    %992 = vmatpush1.msra.mxu0 %v741
    %993 = vmatprep.subr.mxu0 %v738
    %994 = vmatpush1.msra.mxu0 %v737
    %995 = vmatprep.subr.mxu0 %v734
    %996 = vmatpush1.msra.mxu0 %v733
    %997 = vmatprep.subr.mxu0 %v730
    %998 = vmatpush1.msra.mxu0 %v729
    %999 = vmatprep.subr.mxu0 %v726
    %1000 = vmatpush1.msra.mxu0 %v725
    %1001 = vmatprep.subr.mxu0 %v722
    %1002 = vmatpush1.msra.mxu0 %v721
    %1003 = vmatprep.subr.mxu0 %v718
    %1004 = vmatpush1.msra.mxu0 %v717
    %1005 = vmatprep.subr.mxu0 %v714
    %1006 = vmatpush1.msra.mxu0 %v713
    %1007 = vmatprep.subr.mxu0 %v710
    %1008 = vmatpush1.msra.mxu0 %v709
    %1009 = vmatprep.subr.mxu0 %v706
    %1010 = vmatpush1.msra.mxu0 %v705
    %1011 = vmatprep.subr.mxu0 0.0
    %1012 = vmatpush2.msra.mxu0 0.0
    %1013 = vmatprep.subr.mxu0 0.0
    %1014 = vmatpush2.msra.mxu0 0.0
    %1015 = vmatprep.subr.mxu0 0.0
    %1016 = vmatpush2.msra.mxu0 0.0
    %1017 = vmatprep.subr.mxu0 0.0
    %1018 = vmatpush2.msra.mxu0 0.0
    %1019 = vmatprep.subr.mxu0 0.0
    %1020 = vmatpush2.msra.mxu0 0.0
    %1021 = vmatprep.subr.mxu0 0.0
    %1022 = vmatpush2.msra.mxu0 0.0
    %1023 = vmatprep.subr.mxu0 0.0
    %1024 = vmatpush2.msra.mxu0 0.0
    %1025 = vmatprep.subr.mxu0 0.0
    %1026 = vmatpush2.msra.mxu0 0.0
    %1027 = vmatprep.subr.mxu0 0.0
    %1028 = vmatpush2.msra.mxu0 0.0
    %1029 = vmatprep.subr.mxu0 0.0
    %1030 = vmatpush2.msra.mxu0 0.0
    %1031 = vmatprep.subr.mxu0 0.0
    %1032 = vmatpush2.msra.mxu0 0.0
    %1033 = vmatprep.subr.mxu0 0.0
    %1034 = vmatpush2.msra.mxu0 0.0
    %1035 = vmatprep.subr.mxu0 0.0
    %1036 = vmatpush2.msra.mxu0 0.0
    %1037 = vmatprep.subr.mxu0 0.0
    %1038 = vmatpush2.msra.mxu0 0.0
    %1039 = vmatprep.subr.mxu0 0.0
    %1040 = vmatpush2.msra.mxu0 0.0
    %1041 = vmatprep.subr.mxu0 0.0
    %1042 = vmatpush2.msra.mxu0 0.0
    %1043 = vmatprep.mubr.f32.mxu0 0.0
    %1044 = vmatmul.mubr.f32.gmra.mxu0 %v977
    %v1045 = vpop.f32.mrf.mxu0
    %v1046 = vadd.f32 0.0, %v1045
    %v1047 = vpop.f32.mrf.mxu0
    %v1048 = vadd.f32 0.0, %v1047
    %1049 = vmatprep.mubr.f32.mxu0 0.0
    %1050 = vmatmul.mubr.f32.gmra.mxu0 %v978
    %v1051 = vpop.f32.mrf.mxu0
    %v1052 = vadd.f32 0.0, %v1051
    %v1053 = vpop.f32.mrf.mxu0
    %v1054 = vadd.f32 0.0, %v1053
    %1055 = vdwg.mxu0
    %1056 = vmatprep.subr.mxu0 %v768
    %1057 = vmatpush1.msra.mxu0 %v767
    %1058 = vmatprep.subr.mxu0 %v764
    %1059 = vmatpush1.msra.mxu0 %v763
    %1060 = vmatprep.subr.mxu0 %v760
    %1061 = vmatpush1.msra.mxu0 %v759
    %1062 = vmatprep.subr.mxu0 %v756
    %1063 = vmatpush1.msra.mxu0 %v755
    %1064 = vmatprep.subr.mxu0 %v752
    %1065 = vmatpush1.msra.mxu0 %v751
    %1066 = vmatprep.subr.mxu0 %v748
    %1067 = vmatpush1.msra.mxu0 %v747
    %1068 = vmatprep.subr.mxu0 %v744
    %1069 = vmatpush1.msra.mxu0 %v743
    %1070 = vmatprep.subr.mxu0 %v740
    %1071 = vmatpush1.msra.mxu0 %v739
    %1072 = vmatprep.subr.mxu0 %v736
    %1073 = vmatpush1.msra.mxu0 %v735
    %1074 = vmatprep.subr.mxu0 %v732
    %1075 = vmatpush1.msra.mxu0 %v731
    %1076 = vmatprep.subr.mxu0 %v728
    %1077 = vmatpush1.msra.mxu0 %v727
    %1078 = vmatprep.subr.mxu0 %v724
    %1079 = vmatpush1.msra.mxu0 %v723
    %1080 = vmatprep.subr.mxu0 %v720
    %1081 = vmatpush1.msra.mxu0 %v719
    %1082 = vmatprep.subr.mxu0 %v716
    %1083 = vmatpush1.msra.mxu0 %v715
    %1084 = vmatprep.subr.mxu0 %v712
    %1085 = vmatpush1.msra.mxu0 %v711
    %1086 = vmatprep.subr.mxu0 %v708
    %1087 = vmatpush1.msra.mxu0 %v707
    %1088 = vmatprep.subr.mxu0 0.0
    %1089 = vmatpush2.msra.mxu0 0.0
    %1090 = vmatprep.subr.mxu0 0.0
    %1091 = vmatpush2.msra.mxu0 0.0
    %1092 = vmatprep.subr.mxu0 0.0
    %1093 = vmatpush2.msra.mxu0 0.0
    %1094 = vmatprep.subr.mxu0 0.0
    %1095 = vmatpush2.msra.mxu0 0.0
    %1096 = vmatprep.subr.mxu0 0.0
    %1097 = vmatpush2.msra.mxu0 0.0
    %1098 = vmatprep.subr.mxu0 0.0
    %1099 = vmatpush2.msra.mxu0 0.0
    %1100 = vmatprep.subr.mxu0 0.0
    %1101 = vmatpush2.msra.mxu0 0.0
    %1102 = vmatprep.subr.mxu0 0.0
    %1103 = vmatpush2.msra.mxu0 0.0
    %1104 = vmatprep.subr.mxu0 0.0
    %1105 = vmatpush2.msra.mxu0 0.0
    %1106 = vmatprep.subr.mxu0 0.0
    %1107 = vmatpush2.msra.mxu0 0.0
    %1108 = vmatprep.subr.mxu0 0.0
    %1109 = vmatpush2.msra.mxu0 0.0
    %1110 = vmatprep.subr.mxu0 0.0
    %1111 = vmatpush2.msra.mxu0 0.0
    %1112 = vmatprep.subr.mxu0 0.0
    %1113 = vmatpush2.msra.mxu0 0.0
    %1114 = vmatprep.subr.mxu0 0.0
    %1115 = vmatpush2.msra.mxu0 0.0
    %1116 = vmatprep.subr.mxu0 0.0
    %1117 = vmatpush2.msra.mxu0 0.0
    %1118 = vmatprep.subr.mxu0 0.0
    %1119 = vmatpush2.msra.mxu0 0.0
    %1120 = vmatprep.mubr.f32.mxu0 0.0
    %1121 = vmatmul.mubr.f32.gmra.mxu0 %v977
    %v1122 = vpop.f32.mrf.mxu0
    %v1123 = vadd.f32 0.0, %v1122
    %v1124 = vpop.f32.mrf.mxu0
    %v1125 = vadd.f32 0.0, %v1124
    %1126 = vmatprep.mubr.f32.mxu0 0.0
    %1127 = vmatmul.mubr.f32.gmra.mxu0 %v978
    %v1128 = vpop.f32.mrf.mxu0
    %v1129 = vadd.f32 0.0, %v1128
    %v1130 = vpop.f32.mrf.mxu0
    %v1131 = vadd.f32 0.0, %v1130
    %1132 = vdwg.mxu0
    %v1133 = vadd.f32 %v462, %v1046
    %v1134 = vadd.f32 %v464, %v1048
    %v1135 = vadd.f32 %v623, %v1123
    %v1136 = vadd.f32 %v625, %v1125
    %v1137 = vadd.f32 %v468, %v1052
    %v1138 = vadd.f32 %v470, %v1054
    %v1139 = vadd.f32 %v629, %v1129
    %v1140 = vadd.f32 %v631, %v1131
    %v1141 = vxor.u32 %v1133, 2147483648
    %v1142 = vxor.u32 %v1137, 2147483648
    %v1143 = vmul.f32 %v1141, 1.442695
    %v1144 = vpow.pop %v1143
    %v1145 = vmul.f32 %v1142, 1.442695
    %v1146 = vpow.pop %v1145
    %v1147 = vadd.f32 %v1144, 1.0
    %v1148 = vadd.f32 %v1146, 1.0
    %v1149 = vrcp.pop %v1147
    %v1150 = vmul.f32 1.0, %v1149
    %v1151 = vrcp.pop %v1148
    %v1152 = vmul.f32 1.0, %v1151
    %v1153 = vxor.u32 %v1134, 2147483648
    %v1154 = vxor.u32 %v1138, 2147483648
    %v1155 = vmul.f32 %v1153, 1.442695
    %v1156 = vpow.pop %v1155
    %v1157 = vmul.f32 %v1154, 1.442695
    %v1158 = vpow.pop %v1157
    %v1159 = vadd.f32 %v1156, 1.0
    %v1160 = vadd.f32 %v1158, 1.0
    %v1161 = vrcp.pop %v1159
    %v1162 = vmul.f32 1.0, %v1161
    %v1163 = vrcp.pop %v1160
    %v1164 = vmul.f32 1.0, %v1163
    %v1165 = vtanh.pop %v1135
    %v1166 = vtanh.pop %v1139
    %v1167 = vxor.u32 %v1136, 2147483648
    %v1168 = vxor.u32 %v1140, 2147483648
    %v1169 = vmul.f32 %v1167, 1.442695
    %v1170 = vpow.pop %v1169
    %v1171 = vmul.f32 %v1168, 1.442695
    %v1172 = vpow.pop %v1171
    %v1173 = vadd.f32 %v1170, 1.0
    %v1174 = vadd.f32 %v1172, 1.0
    %v1175 = vrcp.pop %v1173
    %v1176 = vmul.f32 1.0, %v1175
    %v1177 = vrcp.pop %v1174
    %v1178 = vmul.f32 1.0, %v1177
    %v1179 = vmul.f32 %v1150, %v973
    %v1180 = vmul.f32 %v1152, %v974
    %v1181 = vmul.f32 %v1162, %v1165
    %v1182 = vmul.f32 %v1164, %v1166
    %v1183 = vadd.f32 %v1179, %v1181
    %v1184 = vadd.f32 %v1180, %v1182
    %v1185 = vtanh.pop %v1183
    %v1186 = vtanh.pop %v1184
    %v1187 = vmul.f32 %v1176, %v1185
    %v1188 = vmul.f32 %v1178, %v1186
    %1189 = vmatprep.subr.mxu0 %v766
    %1190 = vmatpush1.msra.mxu0 %v765
    %1191 = vmatprep.subr.mxu0 %v762
    %1192 = vmatpush1.msra.mxu0 %v761
    %1193 = vmatprep.subr.mxu0 %v758
    %1194 = vmatpush1.msra.mxu0 %v757
    %1195 = vmatprep.subr.mxu0 %v754
    %1196 = vmatpush1.msra.mxu0 %v753
    %1197 = vmatprep.subr.mxu0 %v750
    %1198 = vmatpush1.msra.mxu0 %v749
    %1199 = vmatprep.subr.mxu0 %v746
    %1200 = vmatpush1.msra.mxu0 %v745
    %1201 = vmatprep.subr.mxu0 %v742
    %1202 = vmatpush1.msra.mxu0 %v741
    %1203 = vmatprep.subr.mxu0 %v738
    %1204 = vmatpush1.msra.mxu0 %v737
    %1205 = vmatprep.subr.mxu0 %v734
    %1206 = vmatpush1.msra.mxu0 %v733
    %1207 = vmatprep.subr.mxu0 %v730
    %1208 = vmatpush1.msra.mxu0 %v729
    %1209 = vmatprep.subr.mxu0 %v726
    %1210 = vmatpush1.msra.mxu0 %v725
    %1211 = vmatprep.subr.mxu0 %v722
    %1212 = vmatpush1.msra.mxu0 %v721
    %1213 = vmatprep.subr.mxu0 %v718
    %1214 = vmatpush1.msra.mxu0 %v717
    %1215 = vmatprep.subr.mxu0 %v714
    %1216 = vmatpush1.msra.mxu0 %v713
    %1217 = vmatprep.subr.mxu0 %v710
    %1218 = vmatpush1.msra.mxu0 %v709
    %1219 = vmatprep.subr.mxu0 %v706
    %1220 = vmatpush1.msra.mxu0 %v705
    %1221 = vmatprep.subr.mxu0 0.0
    %1222 = vmatpush2.msra.mxu0 0.0
    %1223 = vmatprep.subr.mxu0 0.0
    %1224 = vmatpush2.msra.mxu0 0.0
    %1225 = vmatprep.subr.mxu0 0.0
    %1226 = vmatpush2.msra.mxu0 0.0
    %1227 = vmatprep.subr.mxu0 0.0
    %1228 = vmatpush2.msra.mxu0 0.0
    %1229 = vmatprep.subr.mxu0 0.0
    %1230 = vmatpush2.msra.mxu0 0.0
    %1231 = vmatprep.subr.mxu0 0.0
    %1232 = vmatpush2.msra.mxu0 0.0
    %1233 = vmatprep.subr.mxu0 0.0
    %1234 = vmatpush2.msra.mxu0 0.0
    %1235 = vmatprep.subr.mxu0 0.0
    %1236 = vmatpush2.msra.mxu0 0.0
    %1237 = vmatprep.subr.mxu0 0.0
    %1238 = vmatpush2.msra.mxu0 0.0
    %1239 = vmatprep.subr.mxu0 0.0
    %1240 = vmatpush2.msra.mxu0 0.0
    %1241 = vmatprep.subr.mxu0 0.0
    %1242 = vmatpush2.msra.mxu0 0.0
    %1243 = vmatprep.subr.mxu0 0.0
    %1244 = vmatpush2.msra.mxu0 0.0
    %1245 = vmatprep.subr.mxu0 0.0
    %1246 = vmatpush2.msra.mxu0 0.0
    %1247 = vmatprep.subr.mxu0 0.0
    %1248 = vmatpush2.msra.mxu0 0.0
    %1249 = vmatprep.subr.mxu0 0.0
    %1250 = vmatpush2.msra.mxu0 0.0
    %1251 = vmatprep.subr.mxu0 0.0
    %1252 = vmatpush2.msra.mxu0 0.0
    %1253 = vmatprep.mubr.f32.mxu0 0.0
    %1254 = vmatmul.mubr.f32.gmra.mxu0 %v1187
    %v1255 = vpop.f32.mrf.mxu0
    %v1256 = vadd.f32 0.0, %v1255
    %v1257 = vpop.f32.mrf.mxu0
    %v1258 = vadd.f32 0.0, %v1257
    %1259 = vmatprep.mubr.f32.mxu0 0.0
    %1260 = vmatmul.mubr.f32.gmra.mxu0 %v1188
    %v1261 = vpop.f32.mrf.mxu0
    %v1262 = vadd.f32 0.0, %v1261
    %v1263 = vpop.f32.mrf.mxu0
    %v1264 = vadd.f32 0.0, %v1263
    %1265 = vdwg.mxu0
    %1266 = vmatprep.subr.mxu0 %v768
    %1267 = vmatpush1.msra.mxu0 %v767
    %1268 = vmatprep.subr.mxu0 %v764
    %1269 = vmatpush1.msra.mxu0 %v763
    %1270 = vmatprep.subr.mxu0 %v760
    %1271 = vmatpush1.msra.mxu0 %v759
    %1272 = vmatprep.subr.mxu0 %v756
    %1273 = vmatpush1.msra.mxu0 %v755
    %1274 = vmatprep.subr.mxu0 %v752
    %1275 = vmatpush1.msra.mxu0 %v751
    %1276 = vmatprep.subr.mxu0 %v748
    %1277 = vmatpush1.msra.mxu0 %v747
    %1278 = vmatprep.subr.mxu0 %v744
    %1279 = vmatpush1.msra.mxu0 %v743
    %1280 = vmatprep.subr.mxu0 %v740
    %1281 = vmatpush1.msra.mxu0 %v739
    %1282 = vmatprep.subr.mxu0 %v736
    %1283 = vmatpush1.msra.mxu0 %v735
    %1284 = vmatprep.subr.mxu0 %v732
    %1285 = vmatpush1.msra.mxu0 %v731
    %1286 = vmatprep.subr.mxu0 %v728
    %1287 = vmatpush1.msra.mxu0 %v727
    %1288 = vmatprep.subr.mxu0 %v724
    %1289 = vmatpush1.msra.mxu0 %v723
    %1290 = vmatprep.subr.mxu0 %v720
    %1291 = vmatpush1.msra.mxu0 %v719
    %1292 = vmatprep.subr.mxu0 %v716
    %1293 = vmatpush1.msra.mxu0 %v715
    %1294 = vmatprep.subr.mxu0 %v712
    %1295 = vmatpush1.msra.mxu0 %v711
    %1296 = vmatprep.subr.mxu0 %v708
    %1297 = vmatpush1.msra.mxu0 %v707
    %1298 = vmatprep.subr.mxu0 0.0
    %1299 = vmatpush2.msra.mxu0 0.0
    %1300 = vmatprep.subr.mxu0 0.0
    %1301 = vmatpush2.msra.mxu0 0.0
    %1302 = vmatprep.subr.mxu0 0.0
    %1303 = vmatpush2.msra.mxu0 0.0
    %1304 = vmatprep.subr.mxu0 0.0
    %1305 = vmatpush2.msra.mxu0 0.0
    %1306 = vmatprep.subr.mxu0 0.0
    %1307 = vmatpush2.msra.mxu0 0.0
    %1308 = vmatprep.subr.mxu0 0.0
    %1309 = vmatpush2.msra.mxu0 0.0
    %1310 = vmatprep.subr.mxu0 0.0
    %1311 = vmatpush2.msra.mxu0 0.0
    %1312 = vmatprep.subr.mxu0 0.0
    %1313 = vmatpush2.msra.mxu0 0.0
    %1314 = vmatprep.subr.mxu0 0.0
    %1315 = vmatpush2.msra.mxu0 0.0
    %1316 = vmatprep.subr.mxu0 0.0
    %1317 = vmatpush2.msra.mxu0 0.0
    %1318 = vmatprep.subr.mxu0 0.0
    %1319 = vmatpush2.msra.mxu0 0.0
    %1320 = vmatprep.subr.mxu0 0.0
    %1321 = vmatpush2.msra.mxu0 0.0
    %1322 = vmatprep.subr.mxu0 0.0
    %1323 = vmatpush2.msra.mxu0 0.0
    %1324 = vmatprep.subr.mxu0 0.0
    %1325 = vmatpush2.msra.mxu0 0.0
    %1326 = vmatprep.subr.mxu0 0.0
    %1327 = vmatpush2.msra.mxu0 0.0
    %1328 = vmatprep.subr.mxu0 0.0
    %1329 = vmatpush2.msra.mxu0 0.0
    %1330 = vmatprep.mubr.f32.mxu0 0.0
    %1331 = vmatmul.mubr.f32.gmra.mxu0 %v1187
    %v1332 = vpop.f32.mrf.mxu0
    %v1333 = vadd.f32 0.0, %v1332
    %v1334 = vpop.f32.mrf.mxu0
    %v1335 = vadd.f32 0.0, %v1334
    %1336 = vmatprep.mubr.f32.mxu0 0.0
    %1337 = vmatmul.mubr.f32.gmra.mxu0 %v1188
    %v1338 = vpop.f32.mrf.mxu0
    %v1339 = vadd.f32 0.0, %v1338
    %v1340 = vpop.f32.mrf.mxu0
    %v1341 = vadd.f32 0.0, %v1340
    %1342 = vdwg.mxu0
    %v1343 = vadd.f32 %v474, %v1256
    %v1344 = vadd.f32 %v476, %v1258
    %v1345 = vadd.f32 %v635, %v1333
    %v1346 = vadd.f32 %v637, %v1335
    %v1347 = vadd.f32 %v480, %v1262
    %v1348 = vadd.f32 %v482, %v1264
    %v1349 = vadd.f32 %v641, %v1339
    %v1350 = vadd.f32 %v643, %v1341
    %v1351 = vxor.u32 %v1343, 2147483648
    %v1352 = vxor.u32 %v1347, 2147483648
    %v1353 = vmul.f32 %v1351, 1.442695
    %v1354 = vpow.pop %v1353
    %v1355 = vmul.f32 %v1352, 1.442695
    %v1356 = vpow.pop %v1355
    %v1357 = vadd.f32 %v1354, 1.0
    %v1358 = vadd.f32 %v1356, 1.0
    %v1359 = vrcp.pop %v1357
    %v1360 = vmul.f32 1.0, %v1359
    %v1361 = vrcp.pop %v1358
    %v1362 = vmul.f32 1.0, %v1361
    %v1363 = vxor.u32 %v1344, 2147483648
    %v1364 = vxor.u32 %v1348, 2147483648
    %v1365 = vmul.f32 %v1363, 1.442695
    %v1366 = vpow.pop %v1365
    %v1367 = vmul.f32 %v1364, 1.442695
    %v1368 = vpow.pop %v1367
    %v1369 = vadd.f32 %v1366, 1.0
    %v1370 = vadd.f32 %v1368, 1.0
    %v1371 = vrcp.pop %v1369
    %v1372 = vmul.f32 1.0, %v1371
    %v1373 = vrcp.pop %v1370
    %v1374 = vmul.f32 1.0, %v1373
    %v1375 = vtanh.pop %v1345
    %v1376 = vtanh.pop %v1349
    %v1377 = vxor.u32 %v1346, 2147483648
    %v1378 = vxor.u32 %v1350, 2147483648
    %v1379 = vmul.f32 %v1377, 1.442695
    %v1380 = vpow.pop %v1379
    %v1381 = vmul.f32 %v1378, 1.442695
    %v1382 = vpow.pop %v1381
    %v1383 = vadd.f32 %v1380, 1.0
    %v1384 = vadd.f32 %v1382, 1.0
    %v1385 = vrcp.pop %v1383
    %v1386 = vmul.f32 1.0, %v1385
    %v1387 = vrcp.pop %v1384
    %v1388 = vmul.f32 1.0, %v1387
    %v1389 = vmul.f32 %v1360, %v1183
    %v1390 = vmul.f32 %v1362, %v1184
    %v1391 = vmul.f32 %v1372, %v1375
    %v1392 = vmul.f32 %v1374, %v1376
    %v1393 = vadd.f32 %v1389, %v1391
    %v1394 = vadd.f32 %v1390, %v1392
    %v1395 = vtanh.pop %v1393
    %v1396 = vtanh.pop %v1394
    %v1397 = vmul.f32 %v1386, %v1395
    %v1398 = vmul.f32 %v1388, %v1396
    %1399 = vmatprep.subr.mxu0 %v766
    %1400 = vmatpush1.msra.mxu0 %v765
    %1401 = vmatprep.subr.mxu0 %v762
    %1402 = vmatpush1.msra.mxu0 %v761
    %1403 = vmatprep.subr.mxu0 %v758
    %1404 = vmatpush1.msra.mxu0 %v757
    %1405 = vmatprep.subr.mxu0 %v754
    %1406 = vmatpush1.msra.mxu0 %v753
    %1407 = vmatprep.subr.mxu0 %v750
    %1408 = vmatpush1.msra.mxu0 %v749
    %1409 = vmatprep.subr.mxu0 %v746
    %1410 = vmatpush1.msra.mxu0 %v745
    %1411 = vmatprep.subr.mxu0 %v742
    %1412 = vmatpush1.msra.mxu0 %v741
    %1413 = vmatprep.subr.mxu0 %v738
    %1414 = vmatpush1.msra.mxu0 %v737
    %1415 = vmatprep.subr.mxu0 %v734
    %1416 = vmatpush1.msra.mxu0 %v733
    %1417 = vmatprep.subr.mxu0 %v730
    %1418 = vmatpush1.msra.mxu0 %v729
    %1419 = vmatprep.subr.mxu0 %v726
    %1420 = vmatpush1.msra.mxu0 %v725
    %1421 = vmatprep.subr.mxu0 %v722
    %1422 = vmatpush1.msra.mxu0 %v721
    %1423 = vmatprep.subr.mxu0 %v718
    %1424 = vmatpush1.msra.mxu0 %v717
    %1425 = vmatprep.subr.mxu0 %v714
    %1426 = vmatpush1.msra.mxu0 %v713
    %1427 = vmatprep.subr.mxu0 %v710
    %1428 = vmatpush1.msra.mxu0 %v709
    %1429 = vmatprep.subr.mxu0 %v706
    %1430 = vmatpush1.msra.mxu0 %v705
    %1431 = vmatprep.subr.mxu0 0.0
    %1432 = vmatpush2.msra.mxu0 0.0
    %1433 = vmatprep.subr.mxu0 0.0
    %1434 = vmatpush2.msra.mxu0 0.0
    %1435 = vmatprep.subr.mxu0 0.0
    %1436 = vmatpush2.msra.mxu0 0.0
    %1437 = vmatprep.subr.mxu0 0.0
    %1438 = vmatpush2.msra.mxu0 0.0
    %1439 = vmatprep.subr.mxu0 0.0
    %1440 = vmatpush2.msra.mxu0 0.0
    %1441 = vmatprep.subr.mxu0 0.0
    %1442 = vmatpush2.msra.mxu0 0.0
    %1443 = vmatprep.subr.mxu0 0.0
    %1444 = vmatpush2.msra.mxu0 0.0
    %1445 = vmatprep.subr.mxu0 0.0
    %1446 = vmatpush2.msra.mxu0 0.0
    %1447 = vmatprep.subr.mxu0 0.0
    %1448 = vmatpush2.msra.mxu0 0.0
    %1449 = vmatprep.subr.mxu0 0.0
    %1450 = vmatpush2.msra.mxu0 0.0
    %1451 = vmatprep.subr.mxu0 0.0
    %1452 = vmatpush2.msra.mxu0 0.0
    %1453 = vmatprep.subr.mxu0 0.0
    %1454 = vmatpush2.msra.mxu0 0.0
    %1455 = vmatprep.subr.mxu0 0.0
    %1456 = vmatpush2.msra.mxu0 0.0
    %1457 = vmatprep.subr.mxu0 0.0
    %1458 = vmatpush2.msra.mxu0 0.0
    %1459 = vmatprep.subr.mxu0 0.0
    %1460 = vmatpush2.msra.mxu0 0.0
    %1461 = vmatprep.subr.mxu0 0.0
    %1462 = vmatpush2.msra.mxu0 0.0
    %1463 = vmatprep.mubr.f32.mxu0 0.0
    %1464 = vmatmul.mubr.f32.gmra.mxu0 %v1397
    %v1465 = vpop.f32.mrf.mxu0
    %v1466 = vadd.f32 0.0, %v1465
    %v1467 = vpop.f32.mrf.mxu0
    %v1468 = vadd.f32 0.0, %v1467
    %1469 = vmatprep.mubr.f32.mxu0 0.0
    %1470 = vmatmul.mubr.f32.gmra.mxu0 %v1398
    %v1471 = vpop.f32.mrf.mxu0
    %v1472 = vadd.f32 0.0, %v1471
    %v1473 = vpop.f32.mrf.mxu0
    %v1474 = vadd.f32 0.0, %v1473
    %1475 = vdwg.mxu0
    %1476 = vmatprep.subr.mxu0 %v768
    %1477 = vmatpush1.msra.mxu0 %v767
    %1478 = vmatprep.subr.mxu0 %v764
    %1479 = vmatpush1.msra.mxu0 %v763
    %1480 = vmatprep.subr.mxu0 %v760
    %1481 = vmatpush1.msra.mxu0 %v759
    %1482 = vmatprep.subr.mxu0 %v756
    %1483 = vmatpush1.msra.mxu0 %v755
    %1484 = vmatprep.subr.mxu0 %v752
    %1485 = vmatpush1.msra.mxu0 %v751
    %1486 = vmatprep.subr.mxu0 %v748
    %1487 = vmatpush1.msra.mxu0 %v747
    %1488 = vmatprep.subr.mxu0 %v744
    %1489 = vmatpush1.msra.mxu0 %v743
    %1490 = vmatprep.subr.mxu0 %v740
    %1491 = vmatpush1.msra.mxu0 %v739
    %1492 = vmatprep.subr.mxu0 %v736
    %1493 = vmatpush1.msra.mxu0 %v735
    %1494 = vmatprep.subr.mxu0 %v732
    %1495 = vmatpush1.msra.mxu0 %v731
    %1496 = vmatprep.subr.mxu0 %v728
    %1497 = vmatpush1.msra.mxu0 %v727
    %1498 = vmatprep.subr.mxu0 %v724
    %1499 = vmatpush1.msra.mxu0 %v723
    %1500 = vmatprep.subr.mxu0 %v720
    %1501 = vmatpush1.msra.mxu0 %v719
    %1502 = vmatprep.subr.mxu0 %v716
    %1503 = vmatpush1.msra.mxu0 %v715
    %1504 = vmatprep.subr.mxu0 %v712
    %1505 = vmatpush1.msra.mxu0 %v711
    %1506 = vmatprep.subr.mxu0 %v708
    %1507 = vmatpush1.msra.mxu0 %v707
    %1508 = vmatprep.subr.mxu0 0.0
    %1509 = vmatpush2.msra.mxu0 0.0
    %1510 = vmatprep.subr.mxu0 0.0
    %1511 = vmatpush2.msra.mxu0 0.0
    %1512 = vmatprep.subr.mxu0 0.0
    %1513 = vmatpush2.msra.mxu0 0.0
    %1514 = vmatprep.subr.mxu0 0.0
    %1515 = vmatpush2.msra.mxu0 0.0
    %1516 = vmatprep.subr.mxu0 0.0
    %1517 = vmatpush2.msra.mxu0 0.0
    %1518 = vmatprep.subr.mxu0 0.0
    %1519 = vmatpush2.msra.mxu0 0.0
    %1520 = vmatprep.subr.mxu0 0.0
    %1521 = vmatpush2.msra.mxu0 0.0
    %1522 = vmatprep.subr.mxu0 0.0
    %1523 = vmatpush2.msra.mxu0 0.0
    %1524 = vmatprep.subr.mxu0 0.0
    %1525 = vmatpush2.msra.mxu0 0.0
    %1526 = vmatprep.subr.mxu0 0.0
    %1527 = vmatpush2.msra.mxu0 0.0
    %1528 = vmatprep.subr.mxu0 0.0
    %1529 = vmatpush2.msra.mxu0 0.0
    %1530 = vmatprep.subr.mxu0 0.0
    %1531 = vmatpush2.msra.mxu0 0.0
    %1532 = vmatprep.subr.mxu0 0.0
    %1533 = vmatpush2.msra.mxu0 0.0
    %1534 = vmatprep.subr.mxu0 0.0
    %1535 = vmatpush2.msra.mxu0 0.0
    %1536 = vmatprep.subr.mxu0 0.0
    %1537 = vmatpush2.msra.mxu0 0.0
    %1538 = vmatprep.subr.mxu0 0.0
    %1539 = vmatpush2.msra.mxu0 0.0
    %1540 = vmatprep.mubr.f32.mxu0 0.0
    %1541 = vmatmul.mubr.f32.gmra.mxu0 %v1397
    %v1542 = vpop.f32.mrf.mxu0
    %v1543 = vadd.f32 0.0, %v1542
    %v1544 = vpop.f32.mrf.mxu0
    %v1545 = vadd.f32 0.0, %v1544
    %1546 = vmatprep.mubr.f32.mxu0 0.0
    %1547 = vmatmul.mubr.f32.gmra.mxu0 %v1398
    %v1548 = vpop.f32.mrf.mxu0
    %v1549 = vadd.f32 0.0, %v1548
    %v1550 = vpop.f32.mrf.mxu0
    %v1551 = vadd.f32 0.0, %v1550
    %1552 = vdwg.mxu0
    %v1553 = vadd.f32 %v486, %v1466
    %v1554 = vadd.f32 %v488, %v1468
    %v1555 = vadd.f32 %v647, %v1543
    %v1556 = vadd.f32 %v649, %v1545
    %v1557 = vadd.f32 %v492, %v1472
    %v1558 = vadd.f32 %v494, %v1474
    %v1559 = vadd.f32 %v653, %v1549
    %v1560 = vadd.f32 %v655, %v1551
    %v1561 = vxor.u32 %v1553, 2147483648
    %v1562 = vxor.u32 %v1557, 2147483648
    %v1563 = vmul.f32 %v1561, 1.442695
    %v1564 = vpow.pop %v1563
    %v1565 = vmul.f32 %v1562, 1.442695
    %v1566 = vpow.pop %v1565
    %v1567 = vadd.f32 %v1564, 1.0
    %v1568 = vadd.f32 %v1566, 1.0
    %v1569 = vrcp.pop %v1567
    %v1570 = vmul.f32 1.0, %v1569
    %v1571 = vrcp.pop %v1568
    %v1572 = vmul.f32 1.0, %v1571
    %v1573 = vxor.u32 %v1554, 2147483648
    %v1574 = vxor.u32 %v1558, 2147483648
    %v1575 = vmul.f32 %v1573, 1.442695
    %v1576 = vpow.pop %v1575
    %v1577 = vmul.f32 %v1574, 1.442695
    %v1578 = vpow.pop %v1577
    %v1579 = vadd.f32 %v1576, 1.0
    %v1580 = vadd.f32 %v1578, 1.0
    %v1581 = vrcp.pop %v1579
    %v1582 = vmul.f32 1.0, %v1581
    %v1583 = vrcp.pop %v1580
    %v1584 = vmul.f32 1.0, %v1583
    %v1585 = vtanh.pop %v1555
    %v1586 = vtanh.pop %v1559
    %v1587 = vxor.u32 %v1556, 2147483648
    %v1588 = vxor.u32 %v1560, 2147483648
    %v1589 = vmul.f32 %v1587, 1.442695
    %v1590 = vpow.pop %v1589
    %v1591 = vmul.f32 %v1588, 1.442695
    %v1592 = vpow.pop %v1591
    %v1593 = vadd.f32 %v1590, 1.0
    %v1594 = vadd.f32 %v1592, 1.0
    %v1595 = vrcp.pop %v1593
    %v1596 = vmul.f32 1.0, %v1595
    %v1597 = vrcp.pop %v1594
    %v1598 = vmul.f32 1.0, %v1597
    %v1599 = vmul.f32 %v1570, %v1393
    %v1600 = vmul.f32 %v1572, %v1394
    %v1601 = vmul.f32 %v1582, %v1585
    %v1602 = vmul.f32 %v1584, %v1586
    %v1603 = vadd.f32 %v1599, %v1601
    %v1604 = vadd.f32 %v1600, %v1602
    %v1605 = vtanh.pop %v1603
    %v1606 = vtanh.pop %v1604
    %v1607 = vmul.f32 %v1596, %v1605
    %v1608 = vmul.f32 %v1598, %v1606
    %1609 = vmatprep.subr.mxu0 %v766
    %1610 = vmatpush1.msra.mxu0 %v765
    %1611 = vmatprep.subr.mxu0 %v762
    %1612 = vmatpush1.msra.mxu0 %v761
    %1613 = vmatprep.subr.mxu0 %v758
    %1614 = vmatpush1.msra.mxu0 %v757
    %1615 = vmatprep.subr.mxu0 %v754
    %1616 = vmatpush1.msra.mxu0 %v753
    %1617 = vmatprep.subr.mxu0 %v750
    %1618 = vmatpush1.msra.mxu0 %v749
    %1619 = vmatprep.subr.mxu0 %v746
    %1620 = vmatpush1.msra.mxu0 %v745
    %1621 = vmatprep.subr.mxu0 %v742
    %1622 = vmatpush1.msra.mxu0 %v741
    %1623 = vmatprep.subr.mxu0 %v738
    %1624 = vmatpush1.msra.mxu0 %v737
    %1625 = vmatprep.subr.mxu0 %v734
    %1626 = vmatpush1.msra.mxu0 %v733
    %1627 = vmatprep.subr.mxu0 %v730
    %1628 = vmatpush1.msra.mxu0 %v729
    %1629 = vmatprep.subr.mxu0 %v726
    %1630 = vmatpush1.msra.mxu0 %v725
    %1631 = vmatprep.subr.mxu0 %v722
    %1632 = vmatpush1.msra.mxu0 %v721
    %1633 = vmatprep.subr.mxu0 %v718
    %1634 = vmatpush1.msra.mxu0 %v717
    %1635 = vmatprep.subr.mxu0 %v714
    %1636 = vmatpush1.msra.mxu0 %v713
    %1637 = vmatprep.subr.mxu0 %v710
    %1638 = vmatpush1.msra.mxu0 %v709
    %1639 = vmatprep.subr.mxu0 %v706
    %1640 = vmatpush1.msra.mxu0 %v705
    %1641 = vmatprep.subr.mxu0 0.0
    %1642 = vmatpush2.msra.mxu0 0.0
    %1643 = vmatprep.subr.mxu0 0.0
    %1644 = vmatpush2.msra.mxu0 0.0
    %1645 = vmatprep.subr.mxu0 0.0
    %1646 = vmatpush2.msra.mxu0 0.0
    %1647 = vmatprep.subr.mxu0 0.0
    %1648 = vmatpush2.msra.mxu0 0.0
    %1649 = vmatprep.subr.mxu0 0.0
    %1650 = vmatpush2.msra.mxu0 0.0
    %1651 = vmatprep.subr.mxu0 0.0
    %1652 = vmatpush2.msra.mxu0 0.0
    %1653 = vmatprep.subr.mxu0 0.0
    %1654 = vmatpush2.msra.mxu0 0.0
    %1655 = vmatprep.subr.mxu0 0.0
    %1656 = vmatpush2.msra.mxu0 0.0
    %1657 = vmatprep.subr.mxu0 0.0
    %1658 = vmatpush2.msra.mxu0 0.0
    %1659 = vmatprep.subr.mxu0 0.0
    %1660 = vmatpush2.msra.mxu0 0.0
    %1661 = vmatprep.subr.mxu0 0.0
    %1662 = vmatpush2.msra.mxu0 0.0
    %1663 = vmatprep.subr.mxu0 0.0
    %1664 = vmatpush2.msra.mxu0 0.0
    %1665 = vmatprep.subr.mxu0 0.0
    %1666 = vmatpush2.msra.mxu0 0.0
    %1667 = vmatprep.subr.mxu0 0.0
    %1668 = vmatpush2.msra.mxu0 0.0
    %1669 = vmatprep.subr.mxu0 0.0
    %1670 = vmatpush2.msra.mxu0 0.0
    %1671 = vmatprep.subr.mxu0 0.0
    %1672 = vmatpush2.msra.mxu0 0.0
    %1673 = vmatprep.mubr.f32.mxu0 0.0
    %1674 = vmatmul.mubr.f32.gmra.mxu0 %v1607
    %v1675 = vpop.f32.mrf.mxu0
    %v1676 = vadd.f32 0.0, %v1675
    %v1677 = vpop.f32.mrf.mxu0
    %v1678 = vadd.f32 0.0, %v1677
    %1679 = vmatprep.mubr.f32.mxu0 0.0
    %1680 = vmatmul.mubr.f32.gmra.mxu0 %v1608
    %v1681 = vpop.f32.mrf.mxu0
    %v1682 = vadd.f32 0.0, %v1681
    %v1683 = vpop.f32.mrf.mxu0
    %v1684 = vadd.f32 0.0, %v1683
    %1685 = vdwg.mxu0
    %1686 = vmatprep.subr.mxu0 %v768
    %1687 = vmatpush1.msra.mxu0 %v767
    %1688 = vmatprep.subr.mxu0 %v764
    %1689 = vmatpush1.msra.mxu0 %v763
    %1690 = vmatprep.subr.mxu0 %v760
    %1691 = vmatpush1.msra.mxu0 %v759
    %1692 = vmatprep.subr.mxu0 %v756
    %1693 = vmatpush1.msra.mxu0 %v755
    %1694 = vmatprep.subr.mxu0 %v752
    %1695 = vmatpush1.msra.mxu0 %v751
    %1696 = vmatprep.subr.mxu0 %v748
    %1697 = vmatpush1.msra.mxu0 %v747
    %1698 = vmatprep.subr.mxu0 %v744
    %1699 = vmatpush1.msra.mxu0 %v743
    %1700 = vmatprep.subr.mxu0 %v740
    %1701 = vmatpush1.msra.mxu0 %v739
    %1702 = vmatprep.subr.mxu0 %v736
    %1703 = vmatpush1.msra.mxu0 %v735
    %1704 = vmatprep.subr.mxu0 %v732
    %1705 = vmatpush1.msra.mxu0 %v731
    %1706 = vmatprep.subr.mxu0 %v728
    %1707 = vmatpush1.msra.mxu0 %v727
    %1708 = vmatprep.subr.mxu0 %v724
    %1709 = vmatpush1.msra.mxu0 %v723
    %1710 = vmatprep.subr.mxu0 %v720
    %1711 = vmatpush1.msra.mxu0 %v719
    %1712 = vmatprep.subr.mxu0 %v716
    %1713 = vmatpush1.msra.mxu0 %v715
    %1714 = vmatprep.subr.mxu0 %v712
    %1715 = vmatpush1.msra.mxu0 %v711
    %1716 = vmatprep.subr.mxu0 %v708
    %1717 = vmatpush1.msra.mxu0 %v707
    %1718 = vmatprep.subr.mxu0 0.0
    %1719 = vmatpush2.msra.mxu0 0.0
    %1720 = vmatprep.subr.mxu0 0.0
    %1721 = vmatpush2.msra.mxu0 0.0
    %1722 = vmatprep.subr.mxu0 0.0
    %1723 = vmatpush2.msra.mxu0 0.0
    %1724 = vmatprep.subr.mxu0 0.0
    %1725 = vmatpush2.msra.mxu0 0.0
    %1726 = vmatprep.subr.mxu0 0.0
    %1727 = vmatpush2.msra.mxu0 0.0
    %1728 = vmatprep.subr.mxu0 0.0
    %1729 = vmatpush2.msra.mxu0 0.0
    %1730 = vmatprep.subr.mxu0 0.0
    %1731 = vmatpush2.msra.mxu0 0.0
    %1732 = vmatprep.subr.mxu0 0.0
    %1733 = vmatpush2.msra.mxu0 0.0
    %1734 = vmatprep.subr.mxu0 0.0
    %1735 = vmatpush2.msra.mxu0 0.0
    %1736 = vmatprep.subr.mxu0 0.0
    %1737 = vmatpush2.msra.mxu0 0.0
    %1738 = vmatprep.subr.mxu0 0.0
    %1739 = vmatpush2.msra.mxu0 0.0
    %1740 = vmatprep.subr.mxu0 0.0
    %1741 = vmatpush2.msra.mxu0 0.0
    %1742 = vmatprep.subr.mxu0 0.0
    %1743 = vmatpush2.msra.mxu0 0.0
    %1744 = vmatprep.subr.mxu0 0.0
    %1745 = vmatpush2.msra.mxu0 0.0
    %1746 = vmatprep.subr.mxu0 0.0
    %1747 = vmatpush2.msra.mxu0 0.0
    %1748 = vmatprep.subr.mxu0 0.0
    %1749 = vmatpush2.msra.mxu0 0.0
    %1750 = vmatprep.mubr.f32.mxu0 0.0
    %1751 = vmatmul.mubr.f32.gmra.mxu0 %v1607
    %v1752 = vpop.f32.mrf.mxu0
    %v1753 = vadd.f32 0.0, %v1752
    %v1754 = vpop.f32.mrf.mxu0
    %v1755 = vadd.f32 0.0, %v1754
    %1756 = vmatprep.mubr.f32.mxu0 0.0
    %1757 = vmatmul.mubr.f32.gmra.mxu0 %v1608
    %v1758 = vpop.f32.mrf.mxu0
    %v1759 = vadd.f32 0.0, %v1758
    %v1760 = vpop.f32.mrf.mxu0
    %v1761 = vadd.f32 0.0, %v1760
    %1762 = vdwg.mxu0
    %v1763 = vadd.f32 %v498, %v1676
    %v1764 = vadd.f32 %v500, %v1678
    %v1765 = vadd.f32 %v659, %v1753
    %v1766 = vadd.f32 %v661, %v1755
    %v1767 = vadd.f32 %v504, %v1682
    %v1768 = vadd.f32 %v506, %v1684
    %v1769 = vadd.f32 %v665, %v1759
    %v1770 = vadd.f32 %v667, %v1761
    %v1771 = vxor.u32 %v1763, 2147483648
    %v1772 = vxor.u32 %v1767, 2147483648
    %v1773 = vmul.f32 %v1771, 1.442695
    %v1774 = vpow.pop %v1773
    %v1775 = vmul.f32 %v1772, 1.442695
    %v1776 = vpow.pop %v1775
    %v1777 = vadd.f32 %v1774, 1.0
    %v1778 = vadd.f32 %v1776, 1.0
    %v1779 = vrcp.pop %v1777
    %v1780 = vmul.f32 1.0, %v1779
    %v1781 = vrcp.pop %v1778
    %v1782 = vmul.f32 1.0, %v1781
    %v1783 = vxor.u32 %v1764, 2147483648
    %v1784 = vxor.u32 %v1768, 2147483648
    %v1785 = vmul.f32 %v1783, 1.442695
    %v1786 = vpow.pop %v1785
    %v1787 = vmul.f32 %v1784, 1.442695
    %v1788 = vpow.pop %v1787
    %v1789 = vadd.f32 %v1786, 1.0
    %v1790 = vadd.f32 %v1788, 1.0
    %v1791 = vrcp.pop %v1789
    %v1792 = vmul.f32 1.0, %v1791
    %v1793 = vrcp.pop %v1790
    %v1794 = vmul.f32 1.0, %v1793
    %v1795 = vtanh.pop %v1765
    %v1796 = vtanh.pop %v1769
    %v1797 = vxor.u32 %v1766, 2147483648
    %v1798 = vxor.u32 %v1770, 2147483648
    %v1799 = vmul.f32 %v1797, 1.442695
    %v1800 = vpow.pop %v1799
    %v1801 = vmul.f32 %v1798, 1.442695
    %v1802 = vpow.pop %v1801
    %v1803 = vadd.f32 %v1800, 1.0
    %v1804 = vadd.f32 %v1802, 1.0
    %v1805 = vrcp.pop %v1803
    %v1806 = vmul.f32 1.0, %v1805
    %v1807 = vrcp.pop %v1804
    %v1808 = vmul.f32 1.0, %v1807
    %v1809 = vmul.f32 %v1780, %v1603
    %v1810 = vmul.f32 %v1782, %v1604
    %v1811 = vmul.f32 %v1792, %v1795
    %v1812 = vmul.f32 %v1794, %v1796
    %v1813 = vadd.f32 %v1809, %v1811
    %v1814 = vadd.f32 %v1810, %v1812
    %v1815 = vtanh.pop %v1813
    %v1816 = vtanh.pop %v1814
    %v1817 = vmul.f32 %v1806, %v1815
    %v1818 = vmul.f32 %v1808, %v1816
    %1819 = vmatprep.subr.mxu0 %v766
    %1820 = vmatpush1.msra.mxu0 %v765
    %1821 = vmatprep.subr.mxu0 %v762
    %1822 = vmatpush1.msra.mxu0 %v761
    %1823 = vmatprep.subr.mxu0 %v758
    %1824 = vmatpush1.msra.mxu0 %v757
    %1825 = vmatprep.subr.mxu0 %v754
    %1826 = vmatpush1.msra.mxu0 %v753
    %1827 = vmatprep.subr.mxu0 %v750
    %1828 = vmatpush1.msra.mxu0 %v749
    %1829 = vmatprep.subr.mxu0 %v746
    %1830 = vmatpush1.msra.mxu0 %v745
    %1831 = vmatprep.subr.mxu0 %v742
    %1832 = vmatpush1.msra.mxu0 %v741
    %1833 = vmatprep.subr.mxu0 %v738
    %1834 = vmatpush1.msra.mxu0 %v737
    %1835 = vmatprep.subr.mxu0 %v734
    %1836 = vmatpush1.msra.mxu0 %v733
    %1837 = vmatprep.subr.mxu0 %v730
    %1838 = vmatpush1.msra.mxu0 %v729
    %1839 = vmatprep.subr.mxu0 %v726
    %1840 = vmatpush1.msra.mxu0 %v725
    %1841 = vmatprep.subr.mxu0 %v722
    %1842 = vmatpush1.msra.mxu0 %v721
    %1843 = vmatprep.subr.mxu0 %v718
    %1844 = vmatpush1.msra.mxu0 %v717
    %1845 = vmatprep.subr.mxu0 %v714
    %1846 = vmatpush1.msra.mxu0 %v713
    %1847 = vmatprep.subr.mxu0 %v710
    %1848 = vmatpush1.msra.mxu0 %v709
    %1849 = vmatprep.subr.mxu0 %v706
    %1850 = vmatpush1.msra.mxu0 %v705
    %1851 = vmatprep.subr.mxu0 0.0
    %1852 = vmatpush2.msra.mxu0 0.0
    %1853 = vmatprep.subr.mxu0 0.0
    %1854 = vmatpush2.msra.mxu0 0.0
    %1855 = vmatprep.subr.mxu0 0.0
    %1856 = vmatpush2.msra.mxu0 0.0
    %1857 = vmatprep.subr.mxu0 0.0
    %1858 = vmatpush2.msra.mxu0 0.0
    %1859 = vmatprep.subr.mxu0 0.0
    %1860 = vmatpush2.msra.mxu0 0.0
    %1861 = vmatprep.subr.mxu0 0.0
    %1862 = vmatpush2.msra.mxu0 0.0
    %1863 = vmatprep.subr.mxu0 0.0
    %1864 = vmatpush2.msra.mxu0 0.0
    %1865 = vmatprep.subr.mxu0 0.0
    %1866 = vmatpush2.msra.mxu0 0.0
    %1867 = vmatprep.subr.mxu0 0.0
    %1868 = vmatpush2.msra.mxu0 0.0
    %1869 = vmatprep.subr.mxu0 0.0
    %1870 = vmatpush2.msra.mxu0 0.0
    %1871 = vmatprep.subr.mxu0 0.0
    %1872 = vmatpush2.msra.mxu0 0.0
    %1873 = vmatprep.subr.mxu0 0.0
    %1874 = vmatpush2.msra.mxu0 0.0
    %1875 = vmatprep.subr.mxu0 0.0
    %1876 = vmatpush2.msra.mxu0 0.0
    %1877 = vmatprep.subr.mxu0 0.0
    %1878 = vmatpush2.msra.mxu0 0.0
    %1879 = vmatprep.subr.mxu0 0.0
    %1880 = vmatpush2.msra.mxu0 0.0
    %1881 = vmatprep.subr.mxu0 0.0
    %1882 = vmatpush2.msra.mxu0 0.0
    %1883 = vmatprep.mubr.f32.mxu0 0.0
    %1884 = vmatmul.mubr.f32.gmra.mxu0 %v1817
    %v1885 = vpop.f32.mrf.mxu0
    %v1886 = vadd.f32 0.0, %v1885
    %v1887 = vpop.f32.mrf.mxu0
    %v1888 = vadd.f32 0.0, %v1887
    %1889 = vmatprep.mubr.f32.mxu0 0.0
    %1890 = vmatmul.mubr.f32.gmra.mxu0 %v1818
    %v1891 = vpop.f32.mrf.mxu0
    %v1892 = vadd.f32 0.0, %v1891
    %v1893 = vpop.f32.mrf.mxu0
    %v1894 = vadd.f32 0.0, %v1893
    %1895 = vdwg.mxu0
    %1896 = vmatprep.subr.mxu0 %v768
    %1897 = vmatpush1.msra.mxu0 %v767
    %1898 = vmatprep.subr.mxu0 %v764
    %1899 = vmatpush1.msra.mxu0 %v763
    %1900 = vmatprep.subr.mxu0 %v760
    %1901 = vmatpush1.msra.mxu0 %v759
    %1902 = vmatprep.subr.mxu0 %v756
    %1903 = vmatpush1.msra.mxu0 %v755
    %1904 = vmatprep.subr.mxu0 %v752
    %1905 = vmatpush1.msra.mxu0 %v751
    %1906 = vmatprep.subr.mxu0 %v748
    %1907 = vmatpush1.msra.mxu0 %v747
    %1908 = vmatprep.subr.mxu0 %v744
    %1909 = vmatpush1.msra.mxu0 %v743
    %1910 = vmatprep.subr.mxu0 %v740
    %1911 = vmatpush1.msra.mxu0 %v739
    %1912 = vmatprep.subr.mxu0 %v736
    %1913 = vmatpush1.msra.mxu0 %v735
    %1914 = vmatprep.subr.mxu0 %v732
    %1915 = vmatpush1.msra.mxu0 %v731
    %1916 = vmatprep.subr.mxu0 %v728
    %1917 = vmatpush1.msra.mxu0 %v727
    %1918 = vmatprep.subr.mxu0 %v724
    %1919 = vmatpush1.msra.mxu0 %v723
    %1920 = vmatprep.subr.mxu0 %v720
    %1921 = vmatpush1.msra.mxu0 %v719
    %1922 = vmatprep.subr.mxu0 %v716
    %1923 = vmatpush1.msra.mxu0 %v715
    %1924 = vmatprep.subr.mxu0 %v712
    %1925 = vmatpush1.msra.mxu0 %v711
    %1926 = vmatprep.subr.mxu0 %v708
    %1927 = vmatpush1.msra.mxu0 %v707
    %1928 = vmatprep.subr.mxu0 0.0
    %1929 = vmatpush2.msra.mxu0 0.0
    %1930 = vmatprep.subr.mxu0 0.0
    %1931 = vmatpush2.msra.mxu0 0.0
    %1932 = vmatprep.subr.mxu0 0.0
    %1933 = vmatpush2.msra.mxu0 0.0
    %1934 = vmatprep.subr.mxu0 0.0
    %1935 = vmatpush2.msra.mxu0 0.0
    %1936 = vmatprep.subr.mxu0 0.0
    %1937 = vmatpush2.msra.mxu0 0.0
    %1938 = vmatprep.subr.mxu0 0.0
    %1939 = vmatpush2.msra.mxu0 0.0
    %1940 = vmatprep.subr.mxu0 0.0
    %1941 = vmatpush2.msra.mxu0 0.0
    %1942 = vmatprep.subr.mxu0 0.0
    %1943 = vmatpush2.msra.mxu0 0.0
    %1944 = vmatprep.subr.mxu0 0.0
    %1945 = vmatpush2.msra.mxu0 0.0
    %1946 = vmatprep.subr.mxu0 0.0
    %1947 = vmatpush2.msra.mxu0 0.0
    %1948 = vmatprep.subr.mxu0 0.0
    %1949 = vmatpush2.msra.mxu0 0.0
    %1950 = vmatprep.subr.mxu0 0.0
    %1951 = vmatpush2.msra.mxu0 0.0
    %1952 = vmatprep.subr.mxu0 0.0
    %1953 = vmatpush2.msra.mxu0 0.0
    %1954 = vmatprep.subr.mxu0 0.0
    %1955 = vmatpush2.msra.mxu0 0.0
    %1956 = vmatprep.subr.mxu0 0.0
    %1957 = vmatpush2.msra.mxu0 0.0
    %1958 = vmatprep.subr.mxu0 0.0
    %1959 = vmatpush2.msra.mxu0 0.0
    %1960 = vmatprep.mubr.f32.mxu0 0.0
    %1961 = vmatmul.mubr.f32.gmra.mxu0 %v1817
    %v1962 = vpop.f32.mrf.mxu0
    %v1963 = vadd.f32 0.0, %v1962
    %v1964 = vpop.f32.mrf.mxu0
    %v1965 = vadd.f32 0.0, %v1964
    %1966 = vmatprep.mubr.f32.mxu0 0.0
    %1967 = vmatmul.mubr.f32.gmra.mxu0 %v1818
    %v1968 = vpop.f32.mrf.mxu0
    %v1969 = vadd.f32 0.0, %v1968
    %v1970 = vpop.f32.mrf.mxu0
    %v1971 = vadd.f32 0.0, %v1970
    %1972 = vdwg.mxu0
    %v1973 = vadd.f32 %v510, %v1886
    %v1974 = vadd.f32 %v512, %v1888
    %v1975 = vadd.f32 %v671, %v1963
    %v1976 = vadd.f32 %v673, %v1965
    %v1977 = vadd.f32 %v516, %v1892
    %v1978 = vadd.f32 %v518, %v1894
    %v1979 = vadd.f32 %v677, %v1969
    %v1980 = vadd.f32 %v679, %v1971
    %v1981 = vxor.u32 %v1973, 2147483648
    %v1982 = vxor.u32 %v1977, 2147483648
    %v1983 = vmul.f32 %v1981, 1.442695
    %v1984 = vpow.pop %v1983
    %v1985 = vmul.f32 %v1982, 1.442695
    %v1986 = vpow.pop %v1985
    %v1987 = vadd.f32 %v1984, 1.0
    %v1988 = vadd.f32 %v1986, 1.0
    %v1989 = vrcp.pop %v1987
    %v1990 = vmul.f32 1.0, %v1989
    %v1991 = vrcp.pop %v1988
    %v1992 = vmul.f32 1.0, %v1991
    %v1993 = vxor.u32 %v1974, 2147483648
    %v1994 = vxor.u32 %v1978, 2147483648
    %v1995 = vmul.f32 %v1993, 1.442695
    %v1996 = vpow.pop %v1995
    %v1997 = vmul.f32 %v1994, 1.442695
    %v1998 = vpow.pop %v1997
    %v1999 = vadd.f32 %v1996, 1.0
    %v2000 = vadd.f32 %v1998, 1.0
    %v2001 = vrcp.pop %v1999
    %v2002 = vmul.f32 1.0, %v2001
    %v2003 = vrcp.pop %v2000
    %v2004 = vmul.f32 1.0, %v2003
    %v2005 = vtanh.pop %v1975
    %v2006 = vtanh.pop %v1979
    %v2007 = vxor.u32 %v1976, 2147483648
    %v2008 = vxor.u32 %v1980, 2147483648
    %v2009 = vmul.f32 %v2007, 1.442695
    %v2010 = vpow.pop %v2009
    %v2011 = vmul.f32 %v2008, 1.442695
    %v2012 = vpow.pop %v2011
    %v2013 = vadd.f32 %v2010, 1.0
    %v2014 = vadd.f32 %v2012, 1.0
    %v2015 = vrcp.pop %v2013
    %v2016 = vmul.f32 1.0, %v2015
    %v2017 = vrcp.pop %v2014
    %v2018 = vmul.f32 1.0, %v2017
    %v2019 = vmul.f32 %v1990, %v1813
    %v2020 = vmul.f32 %v1992, %v1814
    %v2021 = vmul.f32 %v2002, %v2005
    %v2022 = vmul.f32 %v2004, %v2006
    %v2023 = vadd.f32 %v2019, %v2021
    %v2024 = vadd.f32 %v2020, %v2022
    %v2025 = vtanh.pop %v2023
    %v2026 = vtanh.pop %v2024
    %v2027 = vmul.f32 %v2016, %v2025
    %v2028 = vmul.f32 %v2018, %v2026
    %2029 = vmatprep.subr.mxu0 %v766
    %2030 = vmatpush1.msra.mxu0 %v765
    %2031 = vmatprep.subr.mxu0 %v762
    %2032 = vmatpush1.msra.mxu0 %v761
    %2033 = vmatprep.subr.mxu0 %v758
    %2034 = vmatpush1.msra.mxu0 %v757
    %2035 = vmatprep.subr.mxu0 %v754
    %2036 = vmatpush1.msra.mxu0 %v753
    %2037 = vmatprep.subr.mxu0 %v750
    %2038 = vmatpush1.msra.mxu0 %v749
    %2039 = vmatprep.subr.mxu0 %v746
    %2040 = vmatpush1.msra.mxu0 %v745
    %2041 = vmatprep.subr.mxu0 %v742
    %2042 = vmatpush1.msra.mxu0 %v741
    %2043 = vmatprep.subr.mxu0 %v738
    %2044 = vmatpush1.msra.mxu0 %v737
    %2045 = vmatprep.subr.mxu0 %v734
    %2046 = vmatpush1.msra.mxu0 %v733
    %2047 = vmatprep.subr.mxu0 %v730
    %2048 = vmatpush1.msra.mxu0 %v729
    %2049 = vmatprep.subr.mxu0 %v726
    %2050 = vmatpush1.msra.mxu0 %v725
    %2051 = vmatprep.subr.mxu0 %v722
    %2052 = vmatpush1.msra.mxu0 %v721
    %2053 = vmatprep.subr.mxu0 %v718
    %2054 = vmatpush1.msra.mxu0 %v717
    %2055 = vmatprep.subr.mxu0 %v714
    %2056 = vmatpush1.msra.mxu0 %v713
    %2057 = vmatprep.subr.mxu0 %v710
    %2058 = vmatpush1.msra.mxu0 %v709
    %2059 = vmatprep.subr.mxu0 %v706
    %2060 = vmatpush1.msra.mxu0 %v705
    %2061 = vmatprep.subr.mxu0 0.0
    %2062 = vmatpush2.msra.mxu0 0.0
    %2063 = vmatprep.subr.mxu0 0.0
    %2064 = vmatpush2.msra.mxu0 0.0
    %2065 = vmatprep.subr.mxu0 0.0
    %2066 = vmatpush2.msra.mxu0 0.0
    %2067 = vmatprep.subr.mxu0 0.0
    %2068 = vmatpush2.msra.mxu0 0.0
    %2069 = vmatprep.subr.mxu0 0.0
    %2070 = vmatpush2.msra.mxu0 0.0
    %2071 = vmatprep.subr.mxu0 0.0
    %2072 = vmatpush2.msra.mxu0 0.0
    %2073 = vmatprep.subr.mxu0 0.0
    %2074 = vmatpush2.msra.mxu0 0.0
    %2075 = vmatprep.subr.mxu0 0.0
    %2076 = vmatpush2.msra.mxu0 0.0
    %2077 = vmatprep.subr.mxu0 0.0
    %2078 = vmatpush2.msra.mxu0 0.0
    %2079 = vmatprep.subr.mxu0 0.0
    %2080 = vmatpush2.msra.mxu0 0.0
    %2081 = vmatprep.subr.mxu0 0.0
    %2082 = vmatpush2.msra.mxu0 0.0
    %2083 = vmatprep.subr.mxu0 0.0
    %2084 = vmatpush2.msra.mxu0 0.0
    %2085 = vmatprep.subr.mxu0 0.0
    %2086 = vmatpush2.msra.mxu0 0.0
    %2087 = vmatprep.subr.mxu0 0.0
    %2088 = vmatpush2.msra.mxu0 0.0
    %2089 = vmatprep.subr.mxu0 0.0
    %2090 = vmatpush2.msra.mxu0 0.0
    %2091 = vmatprep.subr.mxu0 0.0
    %2092 = vmatpush2.msra.mxu0 0.0
    %2093 = vmatprep.mubr.f32.mxu0 0.0
    %2094 = vmatmul.mubr.f32.gmra.mxu0 %v2027
    %v2095 = vpop.f32.mrf.mxu0
    %v2096 = vadd.f32 0.0, %v2095
    %v2097 = vpop.f32.mrf.mxu0
    %v2098 = vadd.f32 0.0, %v2097
    %2099 = vmatprep.mubr.f32.mxu0 0.0
    %2100 = vmatmul.mubr.f32.gmra.mxu0 %v2028
    %v2101 = vpop.f32.mrf.mxu0
    %v2102 = vadd.f32 0.0, %v2101
    %v2103 = vpop.f32.mrf.mxu0
    %v2104 = vadd.f32 0.0, %v2103
    %2105 = vdwg.mxu0
    %2106 = vmatprep.subr.mxu0 %v768
    %2107 = vmatpush1.msra.mxu0 %v767
    %2108 = vmatprep.subr.mxu0 %v764
    %2109 = vmatpush1.msra.mxu0 %v763
    %2110 = vmatprep.subr.mxu0 %v760
    %2111 = vmatpush1.msra.mxu0 %v759
    %2112 = vmatprep.subr.mxu0 %v756
    %2113 = vmatpush1.msra.mxu0 %v755
    %2114 = vmatprep.subr.mxu0 %v752
    %2115 = vmatpush1.msra.mxu0 %v751
    %2116 = vmatprep.subr.mxu0 %v748
    %2117 = vmatpush1.msra.mxu0 %v747
    %2118 = vmatprep.subr.mxu0 %v744
    %2119 = vmatpush1.msra.mxu0 %v743
    %2120 = vmatprep.subr.mxu0 %v740
    %2121 = vmatpush1.msra.mxu0 %v739
    %2122 = vmatprep.subr.mxu0 %v736
    %2123 = vmatpush1.msra.mxu0 %v735
    %2124 = vmatprep.subr.mxu0 %v732
    %2125 = vmatpush1.msra.mxu0 %v731
    %2126 = vmatprep.subr.mxu0 %v728
    %2127 = vmatpush1.msra.mxu0 %v727
    %2128 = vmatprep.subr.mxu0 %v724
    %2129 = vmatpush1.msra.mxu0 %v723
    %2130 = vmatprep.subr.mxu0 %v720
    %2131 = vmatpush1.msra.mxu0 %v719
    %2132 = vmatprep.subr.mxu0 %v716
    %2133 = vmatpush1.msra.mxu0 %v715
    %2134 = vmatprep.subr.mxu0 %v712
    %2135 = vmatpush1.msra.mxu0 %v711
    %2136 = vmatprep.subr.mxu0 %v708
    %2137 = vmatpush1.msra.mxu0 %v707
    %2138 = vmatprep.subr.mxu0 0.0
    %2139 = vmatpush2.msra.mxu0 0.0
    %2140 = vmatprep.subr.mxu0 0.0
    %2141 = vmatpush2.msra.mxu0 0.0
    %2142 = vmatprep.subr.mxu0 0.0
    %2143 = vmatpush2.msra.mxu0 0.0
    %2144 = vmatprep.subr.mxu0 0.0
    %2145 = vmatpush2.msra.mxu0 0.0
    %2146 = vmatprep.subr.mxu0 0.0
    %2147 = vmatpush2.msra.mxu0 0.0
    %2148 = vmatprep.subr.mxu0 0.0
    %2149 = vmatpush2.msra.mxu0 0.0
    %2150 = vmatprep.subr.mxu0 0.0
    %2151 = vmatpush2.msra.mxu0 0.0
    %2152 = vmatprep.subr.mxu0 0.0
    %2153 = vmatpush2.msra.mxu0 0.0
    %2154 = vmatprep.subr.mxu0 0.0
    %2155 = vmatpush2.msra.mxu0 0.0
    %2156 = vmatprep.subr.mxu0 0.0
    %2157 = vmatpush2.msra.mxu0 0.0
    %2158 = vmatprep.subr.mxu0 0.0
    %2159 = vmatpush2.msra.mxu0 0.0
    %2160 = vmatprep.subr.mxu0 0.0
    %2161 = vmatpush2.msra.mxu0 0.0
    %2162 = vmatprep.subr.mxu0 0.0
    %2163 = vmatpush2.msra.mxu0 0.0
    %2164 = vmatprep.subr.mxu0 0.0
    %2165 = vmatpush2.msra.mxu0 0.0
    %2166 = vmatprep.subr.mxu0 0.0
    %2167 = vmatpush2.msra.mxu0 0.0
    %2168 = vmatprep.subr.mxu0 0.0
    %2169 = vmatpush2.msra.mxu0 0.0
    %2170 = vmatprep.mubr.f32.mxu0 0.0
    %2171 = vmatmul.mubr.f32.gmra.mxu0 %v2027
    %v2172 = vpop.f32.mrf.mxu0
    %v2173 = vadd.f32 0.0, %v2172
    %v2174 = vpop.f32.mrf.mxu0
    %v2175 = vadd.f32 0.0, %v2174
    %2176 = vmatprep.mubr.f32.mxu0 0.0
    %2177 = vmatmul.mubr.f32.gmra.mxu0 %v2028
    %v2178 = vpop.f32.mrf.mxu0
    %v2179 = vadd.f32 0.0, %v2178
    %v2180 = vpop.f32.mrf.mxu0
    %v2181 = vadd.f32 0.0, %v2180
    %2182 = vdwg.mxu0
    %v2183 = vadd.f32 %v522, %v2096
    %v2184 = vadd.f32 %v524, %v2098
    %v2185 = vadd.f32 %v683, %v2173
    %v2186 = vadd.f32 %v685, %v2175
    %v2187 = vadd.f32 %v528, %v2102
    %v2188 = vadd.f32 %v530, %v2104
    %v2189 = vadd.f32 %v689, %v2179
    %v2190 = vadd.f32 %v691, %v2181
    %v2191 = vxor.u32 %v2183, 2147483648
    %v2192 = vxor.u32 %v2187, 2147483648
    %v2193 = vmul.f32 %v2191, 1.442695
    %v2194 = vpow.pop %v2193
    %v2195 = vmul.f32 %v2192, 1.442695
    %v2196 = vpow.pop %v2195
    %v2197 = vadd.f32 %v2194, 1.0
    %v2198 = vadd.f32 %v2196, 1.0
    %v2199 = vrcp.pop %v2197
    %v2200 = vmul.f32 1.0, %v2199
    %v2201 = vrcp.pop %v2198
    %v2202 = vmul.f32 1.0, %v2201
    %v2203 = vxor.u32 %v2184, 2147483648
    %v2204 = vxor.u32 %v2188, 2147483648
    %v2205 = vmul.f32 %v2203, 1.442695
    %v2206 = vpow.pop %v2205
    %v2207 = vmul.f32 %v2204, 1.442695
    %v2208 = vpow.pop %v2207
    %v2209 = vadd.f32 %v2206, 1.0
    %v2210 = vadd.f32 %v2208, 1.0
    %v2211 = vrcp.pop %v2209
    %v2212 = vmul.f32 1.0, %v2211
    %v2213 = vrcp.pop %v2210
    %v2214 = vmul.f32 1.0, %v2213
    %v2215 = vtanh.pop %v2185
    %v2216 = vtanh.pop %v2189
    %v2217 = vxor.u32 %v2186, 2147483648
    %v2218 = vxor.u32 %v2190, 2147483648
    %v2219 = vmul.f32 %v2217, 1.442695
    %v2220 = vpow.pop %v2219
    %v2221 = vmul.f32 %v2218, 1.442695
    %v2222 = vpow.pop %v2221
    %v2223 = vadd.f32 %v2220, 1.0
    %v2224 = vadd.f32 %v2222, 1.0
    %v2225 = vrcp.pop %v2223
    %v2226 = vmul.f32 1.0, %v2225
    %v2227 = vrcp.pop %v2224
    %v2228 = vmul.f32 1.0, %v2227
    %v2229 = vmul.f32 %v2200, %v2023
    %v2230 = vmul.f32 %v2202, %v2024
    %v2231 = vmul.f32 %v2212, %v2215
    %v2232 = vmul.f32 %v2214, %v2216
    %v2233 = vadd.f32 %v2229, %v2231
    %v2234 = vadd.f32 %v2230, %v2232
    %v2235 = vtanh.pop %v2233
    %v2236 = vtanh.pop %v2234
    %v2237 = vmul.f32 %v2226, %v2235
    %v2238 = vmul.f32 %v2228, %v2236
    %2239 = vmatprep.subr.mxu0 %v766
    %2240 = vmatpush1.msra.mxu0 %v765
    %2241 = vmatprep.subr.mxu0 %v762
    %2242 = vmatpush1.msra.mxu0 %v761
    %2243 = vmatprep.subr.mxu0 %v758
    %2244 = vmatpush1.msra.mxu0 %v757
    %2245 = vmatprep.subr.mxu0 %v754
    %2246 = vmatpush1.msra.mxu0 %v753
    %2247 = vmatprep.subr.mxu0 %v750
    %2248 = vmatpush1.msra.mxu0 %v749
    %2249 = vmatprep.subr.mxu0 %v746
    %2250 = vmatpush1.msra.mxu0 %v745
    %2251 = vmatprep.subr.mxu0 %v742
    %2252 = vmatpush1.msra.mxu0 %v741
    %2253 = vmatprep.subr.mxu0 %v738
    %2254 = vmatpush1.msra.mxu0 %v737
    %2255 = vmatprep.subr.mxu0 %v734
    %2256 = vmatpush1.msra.mxu0 %v733
    %2257 = vmatprep.subr.mxu0 %v730
    %2258 = vmatpush1.msra.mxu0 %v729
    %2259 = vmatprep.subr.mxu0 %v726
    %2260 = vmatpush1.msra.mxu0 %v725
    %2261 = vmatprep.subr.mxu0 %v722
    %2262 = vmatpush1.msra.mxu0 %v721
    %2263 = vmatprep.subr.mxu0 %v718
    %2264 = vmatpush1.msra.mxu0 %v717
    %2265 = vmatprep.subr.mxu0 %v714
    %2266 = vmatpush1.msra.mxu0 %v713
    %2267 = vmatprep.subr.mxu0 %v710
    %2268 = vmatpush1.msra.mxu0 %v709
    %2269 = vmatprep.subr.mxu0 %v706
    %2270 = vmatpush1.msra.mxu0 %v705
    %2271 = vmatprep.subr.mxu0 0.0
    %2272 = vmatpush2.msra.mxu0 0.0
    %2273 = vmatprep.subr.mxu0 0.0
    %2274 = vmatpush2.msra.mxu0 0.0
    %2275 = vmatprep.subr.mxu0 0.0
    %2276 = vmatpush2.msra.mxu0 0.0
    %2277 = vmatprep.subr.mxu0 0.0
    %2278 = vmatpush2.msra.mxu0 0.0
    %2279 = vmatprep.subr.mxu0 0.0
    %2280 = vmatpush2.msra.mxu0 0.0
    %2281 = vmatprep.subr.mxu0 0.0
    %2282 = vmatpush2.msra.mxu0 0.0
    %2283 = vmatprep.subr.mxu0 0.0
    %2284 = vmatpush2.msra.mxu0 0.0
    %2285 = vmatprep.subr.mxu0 0.0
    %2286 = vmatpush2.msra.mxu0 0.0
    %2287 = vmatprep.subr.mxu0 0.0
    %2288 = vmatpush2.msra.mxu0 0.0
    %2289 = vmatprep.subr.mxu0 0.0
    %2290 = vmatpush2.msra.mxu0 0.0
    %2291 = vmatprep.subr.mxu0 0.0
    %2292 = vmatpush2.msra.mxu0 0.0
    %2293 = vmatprep.subr.mxu0 0.0
    %2294 = vmatpush2.msra.mxu0 0.0
    %2295 = vmatprep.subr.mxu0 0.0
    %2296 = vmatpush2.msra.mxu0 0.0
    %2297 = vmatprep.subr.mxu0 0.0
    %2298 = vmatpush2.msra.mxu0 0.0
    %2299 = vmatprep.subr.mxu0 0.0
    %2300 = vmatpush2.msra.mxu0 0.0
    %2301 = vmatprep.subr.mxu0 0.0
    %2302 = vmatpush2.msra.mxu0 0.0
    %2303 = vmatprep.mubr.f32.mxu0 0.0
    %2304 = vmatmul.mubr.f32.gmra.mxu0 %v2237
    %v2305 = vpop.f32.mrf.mxu0
    %v2306 = vadd.f32 0.0, %v2305
    %v2307 = vpop.f32.mrf.mxu0
    %v2308 = vadd.f32 0.0, %v2307
    %2309 = vmatprep.mubr.f32.mxu0 0.0
    %2310 = vmatmul.mubr.f32.gmra.mxu0 %v2238
    %v2311 = vpop.f32.mrf.mxu0
    %v2312 = vadd.f32 0.0, %v2311
    %v2313 = vpop.f32.mrf.mxu0
    %v2314 = vadd.f32 0.0, %v2313
    %2315 = vdwg.mxu0
    %2316 = vmatprep.subr.mxu0 %v768
    %2317 = vmatpush1.msra.mxu0 %v767
    %2318 = vmatprep.subr.mxu0 %v764
    %2319 = vmatpush1.msra.mxu0 %v763
    %2320 = vmatprep.subr.mxu0 %v760
    %2321 = vmatpush1.msra.mxu0 %v759
    %2322 = vmatprep.subr.mxu0 %v756
    %2323 = vmatpush1.msra.mxu0 %v755
    %2324 = vmatprep.subr.mxu0 %v752
    %2325 = vmatpush1.msra.mxu0 %v751
    %2326 = vmatprep.subr.mxu0 %v748
    %2327 = vmatpush1.msra.mxu0 %v747
    %2328 = vmatprep.subr.mxu0 %v744
    %2329 = vmatpush1.msra.mxu0 %v743
    %2330 = vmatprep.subr.mxu0 %v740
    %2331 = vmatpush1.msra.mxu0 %v739
    %2332 = vmatprep.subr.mxu0 %v736
    %2333 = vmatpush1.msra.mxu0 %v735
    %2334 = vmatprep.subr.mxu0 %v732
    %2335 = vmatpush1.msra.mxu0 %v731
    %2336 = vmatprep.subr.mxu0 %v728
    %2337 = vmatpush1.msra.mxu0 %v727
    %2338 = vmatprep.subr.mxu0 %v724
    %2339 = vmatpush1.msra.mxu0 %v723
    %2340 = vmatprep.subr.mxu0 %v720
    %2341 = vmatpush1.msra.mxu0 %v719
    %2342 = vmatprep.subr.mxu0 %v716
    %2343 = vmatpush1.msra.mxu0 %v715
    %2344 = vmatprep.subr.mxu0 %v712
    %2345 = vmatpush1.msra.mxu0 %v711
    %2346 = vmatprep.subr.mxu0 %v708
    %2347 = vmatpush1.msra.mxu0 %v707
    %2348 = vmatprep.subr.mxu0 0.0
    %2349 = vmatpush2.msra.mxu0 0.0
    %2350 = vmatprep.subr.mxu0 0.0
    %2351 = vmatpush2.msra.mxu0 0.0
    %2352 = vmatprep.subr.mxu0 0.0
    %2353 = vmatpush2.msra.mxu0 0.0
    %2354 = vmatprep.subr.mxu0 0.0
    %2355 = vmatpush2.msra.mxu0 0.0
    %2356 = vmatprep.subr.mxu0 0.0
    %2357 = vmatpush2.msra.mxu0 0.0
    %2358 = vmatprep.subr.mxu0 0.0
    %2359 = vmatpush2.msra.mxu0 0.0
    %2360 = vmatprep.subr.mxu0 0.0
    %2361 = vmatpush2.msra.mxu0 0.0
    %2362 = vmatprep.subr.mxu0 0.0
    %2363 = vmatpush2.msra.mxu0 0.0
    %2364 = vmatprep.subr.mxu0 0.0
    %2365 = vmatpush2.msra.mxu0 0.0
    %2366 = vmatprep.subr.mxu0 0.0
    %2367 = vmatpush2.msra.mxu0 0.0
    %2368 = vmatprep.subr.mxu0 0.0
    %2369 = vmatpush2.msra.mxu0 0.0
    %2370 = vmatprep.subr.mxu0 0.0
    %2371 = vmatpush2.msra.mxu0 0.0
    %2372 = vmatprep.subr.mxu0 0.0
    %2373 = vmatpush2.msra.mxu0 0.0
    %2374 = vmatprep.subr.mxu0 0.0
    %2375 = vmatpush2.msra.mxu0 0.0
    %2376 = vmatprep.subr.mxu0 0.0
    %2377 = vmatpush2.msra.mxu0 0.0
    %2378 = vmatprep.subr.mxu0 0.0
    %2379 = vmatpush2.msra.mxu0 0.0
    %2380 = vmatprep.mubr.f32.mxu0 0.0
    %2381 = vmatmul.mubr.f32.gmra.mxu0 %v2237
    %v2382 = vpop.f32.mrf.mxu0
    %v2383 = vadd.f32 0.0, %v2382
    %v2384 = vpop.f32.mrf.mxu0
    %v2385 = vadd.f32 0.0, %v2384
    %2386 = vmatprep.mubr.f32.mxu0 0.0
    %2387 = vmatmul.mubr.f32.gmra.mxu0 %v2238
    %v2388 = vpop.f32.mrf.mxu0
    %v2389 = vadd.f32 0.0, %v2388
    %v2390 = vpop.f32.mrf.mxu0
    %v2391 = vadd.f32 0.0, %v2390
    %2392 = vdwg.mxu0
    %v2393 = vadd.f32 %v534, %v2306
    %v2394 = vadd.f32 %v536, %v2308
    %v2395 = vadd.f32 %v695, %v2383
    %v2396 = vadd.f32 %v697, %v2385
    %v2397 = vadd.f32 %v540, %v2312
    %v2398 = vadd.f32 %v542, %v2314
    %v2399 = vadd.f32 %v701, %v2389
    %v2400 = vadd.f32 %v703, %v2391
    %v2401 = vxor.u32 %v2393, 2147483648
    %v2402 = vxor.u32 %v2397, 2147483648
    %v2403 = vmul.f32 %v2401, 1.442695
    %v2404 = vpow.pop %v2403
    %v2405 = vmul.f32 %v2402, 1.442695
    %v2406 = vpow.pop %v2405
    %v2407 = vadd.f32 %v2404, 1.0
    %v2408 = vadd.f32 %v2406, 1.0
    %v2409 = vrcp.pop %v2407
    %v2410 = vmul.f32 1.0, %v2409
    %v2411 = vrcp.pop %v2408
    %v2412 = vmul.f32 1.0, %v2411
    %v2413 = vxor.u32 %v2394, 2147483648
    %v2414 = vxor.u32 %v2398, 2147483648
    %v2415 = vmul.f32 %v2413, 1.442695
    %v2416 = vpow.pop %v2415
    %v2417 = vmul.f32 %v2414, 1.442695
    %v2418 = vpow.pop %v2417
    %v2419 = vadd.f32 %v2416, 1.0
    %v2420 = vadd.f32 %v2418, 1.0
    %v2421 = vrcp.pop %v2419
    %v2422 = vmul.f32 1.0, %v2421
    %v2423 = vrcp.pop %v2420
    %v2424 = vmul.f32 1.0, %v2423
    %v2425 = vtanh.pop %v2395
    %v2426 = vtanh.pop %v2399
    %v2427 = vxor.u32 %v2396, 2147483648
    %v2428 = vxor.u32 %v2400, 2147483648
    %v2429 = vmul.f32 %v2427, 1.442695
    %v2430 = vpow.pop %v2429
    %v2431 = vmul.f32 %v2428, 1.442695
    %v2432 = vpow.pop %v2431
    %v2433 = vadd.f32 %v2430, 1.0
    %v2434 = vadd.f32 %v2432, 1.0
    %v2435 = vrcp.pop %v2433
    %v2436 = vmul.f32 1.0, %v2435
    %v2437 = vrcp.pop %v2434
    %v2438 = vmul.f32 1.0, %v2437
    %v2439 = vmul.f32 %v2410, %v2233
    %v2440 = vmul.f32 %v2412, %v2234
    %v2441 = vmul.f32 %v2422, %v2425
    %v2442 = vmul.f32 %v2424, %v2426
    %v2443 = vadd.f32 %v2439, %v2441
    %v2444 = vadd.f32 %v2440, %v2442
    %v2445 = vtanh.pop %v2443
    %v2446 = vtanh.pop %v2444
    %v2447 = vmul.f32 %v2436, %v2445
    %v2448 = vmul.f32 %v2438, %v2446
    %v2449 = vmul.f32 %v977, %v2447
    %v2450 = vmul.f32 %v978, %v2448
    %2451 = vadd.xlane.f32.xlu0 %v2449
    %v2452 = vpop.xlane.xlu0 %2451
    %2453 = vadd.xlane.f32.xlu0 %v2450
    %v2454 = vpop.xlane.xlu0 %2453
    %v2455 = vmul.f32 %v1187, %v2447
    %v2456 = vmul.f32 %v1188, %v2448
    %2457 = vadd.xlane.f32.xlu0 %v2455
    %v2458 = vpop.xlane.xlu0 %2457
    %2459 = vadd.xlane.f32.xlu0 %v2456
    %v2460 = vpop.xlane.xlu0 %2459
    %v2461 = vmul.f32 %v1397, %v2447
    %v2462 = vmul.f32 %v1398, %v2448
    %2463 = vadd.xlane.f32.xlu0 %v2461
    %v2464 = vpop.xlane.xlu0 %2463
    %2465 = vadd.xlane.f32.xlu0 %v2462
    %v2466 = vpop.xlane.xlu0 %2465
    %v2467 = vmul.f32 %v1607, %v2447
    %v2468 = vmul.f32 %v1608, %v2448
    %2469 = vadd.xlane.f32.xlu0 %v2467
    %v2470 = vpop.xlane.xlu0 %2469
    %2471 = vadd.xlane.f32.xlu0 %v2468
    %v2472 = vpop.xlane.xlu0 %2471
    %v2473 = vmul.f32 %v1817, %v2447
    %v2474 = vmul.f32 %v1818, %v2448
    %2475 = vadd.xlane.f32.xlu0 %v2473
    %v2476 = vpop.xlane.xlu0 %2475
    %2477 = vadd.xlane.f32.xlu0 %v2474
    %v2478 = vpop.xlane.xlu0 %2477
    %v2479 = vmul.f32 %v2027, %v2447
    %v2480 = vmul.f32 %v2028, %v2448
    %2481 = vadd.xlane.f32.xlu0 %v2479
    %v2482 = vpop.xlane.xlu0 %2481
    %2483 = vadd.xlane.f32.xlu0 %v2480
    %v2484 = vpop.xlane.xlu0 %2483
    %v2485 = vmul.f32 %v2237, %v2447
    %v2486 = vmul.f32 %v2238, %v2448
    %2487 = vadd.xlane.f32.xlu0 %v2485
    %v2488 = vpop.xlane.xlu0 %2487
    %2489 = vadd.xlane.f32.xlu0 %v2486
    %v2490 = vpop.xlane.xlu0 %2489
    %v2491 = vmul.f32 %v2447, %v2447
    %v2492 = vmul.f32 %v2448, %v2448
    %2493 = vadd.xlane.f32.xlu0 %v2491
    %v2494 = vpop.xlane.xlu0 %2493
    %2495 = vadd.xlane.f32.xlu0 %v2492
    %v2496 = vpop.xlane.xlu0 %2495
    %v2497 = vmax.f32 %v2452, %v2458
    %v2498 = vmax.f32 %v2454, %v2460
    %v2499 = vmax.f32 %v2497, %v2464
    %v2500 = vmax.f32 %v2498, %v2466
    %v2501 = vmax.f32 %v2499, %v2470
    %v2502 = vmax.f32 %v2500, %v2472
    %v2503 = vmax.f32 %v2501, %v2476
    %v2504 = vmax.f32 %v2502, %v2478
    %v2505 = vmax.f32 %v2503, %v2482
    %v2506 = vmax.f32 %v2504, %v2484
    %v2507 = vmax.f32 %v2505, %v2488
    %v2508 = vmax.f32 %v2506, %v2490
    %v2509 = vmax.f32 %v2507, %v2494
    %v2510 = vmax.f32 %v2508, %v2496
    %v2511 = vsub.f32 %v2452, %v2509
    %v2512 = vsub.f32 %v2454, %v2510
    %v2513 = vmul.f32 %v2511, 1.442695
    %v2514 = vpow.pop %v2513
    %v2515 = vmul.f32 %v2512, 1.442695
    %v2516 = vpow.pop %v2515
    %v2517 = vsub.f32 %v2458, %v2509
    %v2518 = vsub.f32 %v2460, %v2510
    %v2519 = vmul.f32 %v2517, 1.442695
    %v2520 = vpow.pop %v2519
    %v2521 = vmul.f32 %v2518, 1.442695
    %v2522 = vpow.pop %v2521
    %v2523 = vsub.f32 %v2464, %v2509
    %v2524 = vsub.f32 %v2466, %v2510
    %v2525 = vmul.f32 %v2523, 1.442695
    %v2526 = vpow.pop %v2525
    %v2527 = vmul.f32 %v2524, 1.442695
    %v2528 = vpow.pop %v2527
    %v2529 = vsub.f32 %v2470, %v2509
    %v2530 = vsub.f32 %v2472, %v2510
    %v2531 = vmul.f32 %v2529, 1.442695
    %v2532 = vpow.pop %v2531
    %v2533 = vmul.f32 %v2530, 1.442695
    %v2534 = vpow.pop %v2533
    %v2535 = vsub.f32 %v2476, %v2509
    %v2536 = vsub.f32 %v2478, %v2510
    %v2537 = vmul.f32 %v2535, 1.442695
    %v2538 = vpow.pop %v2537
    %v2539 = vmul.f32 %v2536, 1.442695
    %v2540 = vpow.pop %v2539
    %v2541 = vsub.f32 %v2482, %v2509
    %v2542 = vsub.f32 %v2484, %v2510
    %v2543 = vmul.f32 %v2541, 1.442695
    %v2544 = vpow.pop %v2543
    %v2545 = vmul.f32 %v2542, 1.442695
    %v2546 = vpow.pop %v2545
    %v2547 = vsub.f32 %v2488, %v2509
    %v2548 = vsub.f32 %v2490, %v2510
    %v2549 = vmul.f32 %v2547, 1.442695
    %v2550 = vpow.pop %v2549
    %v2551 = vmul.f32 %v2548, 1.442695
    %v2552 = vpow.pop %v2551
    %v2553 = vsub.f32 %v2494, %v2509
    %v2554 = vsub.f32 %v2496, %v2510
    %v2555 = vmul.f32 %v2553, 1.442695
    %v2556 = vpow.pop %v2555
    %v2557 = vmul.f32 %v2554, 1.442695
    %v2558 = vpow.pop %v2557
    %v2559 = vadd.f32 %v2514, %v2520
    %v2560 = vadd.f32 %v2516, %v2522
    %v2561 = vadd.f32 %v2559, %v2526
    %v2562 = vadd.f32 %v2560, %v2528
    %v2563 = vadd.f32 %v2561, %v2532
    %v2564 = vadd.f32 %v2562, %v2534
    %v2565 = vadd.f32 %v2563, %v2538
    %v2566 = vadd.f32 %v2564, %v2540
    %v2567 = vadd.f32 %v2565, %v2544
    %v2568 = vadd.f32 %v2566, %v2546
    %v2569 = vadd.f32 %v2567, %v2550
    %v2570 = vadd.f32 %v2568, %v2552
    %v2571 = vadd.f32 %v2569, %v2556
    %v2572 = vadd.f32 %v2570, %v2558
    %v2573 = vrcp.pop %v2571
    %v2574 = vrcp.pop %v2572
    %v2575 = vmul.f32 %v2514, %v2573
    %v2576 = vmul.f32 %v2516, %v2574
    %v2577 = vmul.f32 %v977, %v2575
    %v2578 = vmul.f32 %v978, %v2576
    %v2579 = vmul.f32 %v2520, %v2573
    %v2580 = vmul.f32 %v2522, %v2574
    %v2581 = vmul.f32 %v1187, %v2579
    %v2582 = vmul.f32 %v1188, %v2580
    %v2583 = vadd.f32 %v2577, %v2581
    %v2584 = vadd.f32 %v2578, %v2582
    %v2585 = vmul.f32 %v2526, %v2573
    %v2586 = vmul.f32 %v2528, %v2574
    %v2587 = vmul.f32 %v1397, %v2585
    %v2588 = vmul.f32 %v1398, %v2586
    %v2589 = vadd.f32 %v2583, %v2587
    %v2590 = vadd.f32 %v2584, %v2588
    %v2591 = vmul.f32 %v2532, %v2573
    %v2592 = vmul.f32 %v2534, %v2574
    %v2593 = vmul.f32 %v1607, %v2591
    %v2594 = vmul.f32 %v1608, %v2592
    %v2595 = vadd.f32 %v2589, %v2593
    %v2596 = vadd.f32 %v2590, %v2594
    %v2597 = vmul.f32 %v2538, %v2573
    %v2598 = vmul.f32 %v2540, %v2574
    %v2599 = vmul.f32 %v1817, %v2597
    %v2600 = vmul.f32 %v1818, %v2598
    %v2601 = vadd.f32 %v2595, %v2599
    %v2602 = vadd.f32 %v2596, %v2600
    %v2603 = vmul.f32 %v2544, %v2573
    %v2604 = vmul.f32 %v2546, %v2574
    %v2605 = vmul.f32 %v2027, %v2603
    %v2606 = vmul.f32 %v2028, %v2604
    %v2607 = vadd.f32 %v2601, %v2605
    %v2608 = vadd.f32 %v2602, %v2606
    %v2609 = vmul.f32 %v2550, %v2573
    %v2610 = vmul.f32 %v2552, %v2574
    %v2611 = vmul.f32 %v2237, %v2609
    %v2612 = vmul.f32 %v2238, %v2610
    %v2613 = vadd.f32 %v2607, %v2611
    %v2614 = vadd.f32 %v2608, %v2612
    %v2615 = vmul.f32 %v2556, %v2573
    %v2616 = vmul.f32 %v2558, %v2574
    %v2617 = vmul.f32 %v2447, %v2615
    %v2618 = vmul.f32 %v2448, %v2616
    %v2619 = vadd.f32 %v2613, %v2617
    %v2620 = vadd.f32 %v2614, %v2618
    %v2621 = vld [vmem:[%s6] sm:$0xff]
    %v2622 = vld [vmem:[%s6 + $0x8] sm:$0x3]
    %v2623 = vld [vmem:[%s7] sm:$0xff]
    %v2624 = vld [vmem:[%s7 + $0x8] sm:$0x3]
    %2625 = vadd.xlane.f32.xlu0 %v2619
    %v2626 = vpop.xlane.xlu0 %2625
    %v2627 = vrot.slane %v2626, 4
    %v2628 = vadd.f32 %v2626, %v2627
    %v2629 = vrot.slane %v2628, 2
    %v2630 = vadd.f32 %v2628, %v2629
    %v2631 = vrot.slane %v2630, 1
    %v2632 = vadd.f32 %v2630, %v2631
    %s2633 = vtos %v2632
    %v2634 = vrcp.pop 1024.0
    %s2635 = vtos %v2634
    %s2636 = smul.f32 %s2633, %s2635
    %v2637 = vstv %s2636
    %v2638 = vsub.f32 %v2619, %v2637
    %v2639 = vmul.f32 %v2638, %v2638
    %2640 = vadd.xlane.f32.xlu0 %v2639
    %v2641 = vpop.xlane.xlu0 %2640
    %v2642 = vrot.slane %v2641, 4
    %v2643 = vadd.f32 %v2641, %v2642
    %v2644 = vrot.slane %v2643, 2
    %v2645 = vadd.f32 %v2643, %v2644
    %v2646 = vrot.slane %v2645, 1
    %v2647 = vadd.f32 %v2645, %v2646
    %s2648 = vtos %v2647
    %s2649 = smul.f32 %s2648, 0.0009775171
    %v2650 = vstv %s2649
    %v2651 = vrsqrt.pop %v2650
    %s2652 = vtos %v2651
    %v2653 = vstv %s2652
    %v2654 = vmul.f32 %v2638, %v2653
    %v2655 = vmul.f32 %v2654, %v2621
    %v2656 = vadd.f32 %v2655, %v2623
    %vm2657 = vcmask 1041408
    %v2658 = vsel %vm2657, %v2620, 0.0
    %2659 = vadd.xlane.f32.xlu0 %v2658
    %v2660 = vpop.xlane.xlu0 %2659
    %v2661 = vrot.slane %v2660, 4
    %v2662 = vadd.f32 %v2660, %v2661
    %v2663 = vrot.slane %v2662, 2
    %v2664 = vadd.f32 %v2662, %v2663
    %v2665 = vrot.slane %v2664, 1
    %v2666 = vadd.f32 %v2664, %v2665
    %s2667 = vtos %v2666
    %v2668 = vrcp.pop 256.0
    %s2669 = vtos %v2668
    %s2670 = smul.f32 %s2667, %s2669
    %v2671 = vstv %s2670
    %v2672 = vsub.f32 %v2620, %v2671
    %v2673 = vmul.f32 %v2672, %v2672
    %v2674 = vsel %vm2657, %v2673, 0.0
    %2675 = vadd.xlane.f32.xlu0 %v2674
    %v2676 = vpop.xlane.xlu0 %2675
    %v2677 = vrot.slane %v2676, 4
    %v2678 = vadd.f32 %v2676, %v2677
    %v2679 = vrot.slane %v2678, 2
    %v2680 = vadd.f32 %v2678, %v2679
    %v2681 = vrot.slane %v2680, 1
    %v2682 = vadd.f32 %v2680, %v2681
    %s2683 = vtos %v2682
    %s2684 = smul.f32 %s2683, 0.003921569
    %v2685 = vstv %s2684
    %v2686 = vrsqrt.pop %v2685
    %s2687 = vtos %v2686
    %v2688 = vstv %s2687
    %v2689 = vmul.f32 %v2672, %v2688
    %v2690 = vmul.f32 %v2689, %v2622
    %v2691 = vadd.f32 %v2690, %v2624
    %v2692 = vmul.f32 %v2691, 0.1
    %v2693 = vlaneseq
    %v2694 = vshrl.u32 %v2693, 7
    %v2695 = vsub.s32 0, %v2694
    %v2696 = vrot.slane %v2692, %v2695
    %v2697 = vadd.f32 %v2656, %v2696
    %v2698 = vlaneseq
    %v2699 = vshrl.u32 %v2698, 7
    %v2700 = vsub.s32 1, %v2699
    %v2701 = vrot.slane %v2692, %v2700
    %v2702 = vadd.f32 %v2656, %v2701
    %vm2703 = vcmask 1043456
    %v2704 = vsel %vm2703, %v2697, %v2702
    %2705 = vst [vmem:[#allocation7] sm:$0xff] %v2704
    // Predicated region
    $region42: #{ml_context_forward.1} parent=1 // pred_check
      _
    $region43: #{ml_context_forward.1} parent=1 // pred_check_branch
      %2707 = sbr.rel (0) target = $region45
    $region44: #{ml_context_forward.1} parent=1 // pred_region
      %s2709 = ssub.s32 128, 128
      %2710 = vsyncadd [#allocation4], %s2709
      %s2712 = sshll.u32 [#allocation7], 4
      %s2713 = int_to_ptr.vmem [resolvable:$true] %s2712
      %2715 = dma.vmem_to_hbm [thread:$0]  %s2713, 128, %s8, [#allocation4]
    $region45: #{ml_context_forward.1} parent=1 // pred_fallthru
      _
    // Predicated region
    $region46: #{ml_context_forward.1} parent=1 // pred_check
      _
    $region47: #{ml_context_forward.1} parent=1 // pred_check_branch
      %2717 = sbr.rel (0) target = $region49
    $region48: #{ml_context_forward.1} parent=1 // pred_region
      %2718 = dma.done [#allocation4], 128
    $region49: #{ml_context_forward.1} parent=1 // pred_fallthru
      _
    %2719 = vsyncpa [#allocation3], 1
    %2720 = vsyncpa [#allocation6], 1
    %2721 = vsyncpa [#allocation4], 1

</llo_original>
